<compile_context>
chip_gen: v6e
topology: v6e:2x2x1
jax: 0.10.0
libtpu: 0.0.40
codegen_flags: <defaults>
</compile_context>

<pallas_src>
import functools

import numpy as np
import jax
import jax.numpy as jnp
from jax import lax
from jax.experimental import pallas as pl
from jax.experimental.pallas import tpu as pltpu  # noqa: F401  (TPU backend)

# ----------------------------- configuration --------------------------------
BATCH = 2
IN_CH = 3
IMG = 16
PATCH = 4
GRID_HW = IMG // PATCH
N_PATCHES = GRID_HW * GRID_HW          # 16
PATCH_DIM = IN_CH * PATCH * PATCH      # 48
EMBED = 32
HEADS = 2
HEAD_DIM = EMBED // HEADS              # 16
MLP_HIDDEN = 4 * EMBED                 # 128
DEPTH = 4
N_LAST_BLOCKS = 2
TOKENS = N_PATCHES + 1                 # 17 (cls + patches)
EPS = 1e-6

# Fused-kernel row layout (batch folded into sublanes, 8-aligned):
#   rows [0, B)                    -> cls token of batch b
#   rows [B, CLS_PAD)              -> zero padding
#   rows [CLS_PAD + b*N_PATCHES,.) -> patch tokens of batch b
CLS_PAD = 8                            # >= BATCH, multiple of 8

# Packed per-block weight slab (DEPTH, EMBED, WBLK) bf16, lane ranges:
#   [0, 96)    fused QKV weight (q columns pre-scaled by 1/sqrt(head_dim))
#   [96, 128)  attention proj weight
#   [128, 256) MLP fc1 weight
WBLK = 3 * EMBED + EMBED + MLP_HIDDEN  # 256

# Packed narrow-vector slab (rows x EMBED) f32, static row indices:
VEC_LN1W = 0 * DEPTH
VEC_LN1B = 1 * DEPTH
VEC_LN2W = 2 * DEPTH
VEC_LN2B = 3 * DEPTH
VEC_PROJB = 4 * DEPTH
VEC_FC2B = 5 * DEPTH
VEC_NORMW = 6 * DEPTH
VEC_NORMB = 6 * DEPTH + 1
VEC_ROWS = 6 * DEPTH + 2               # 26 -> padded to 32 sublanes

# Packed wide-vector slab (2*DEPTH, 128) f32:
#   rows [0, DEPTH)        fc1 bias (128 lanes)
#   rows [DEPTH, 2*DEPTH)  fused QKV bias (96 lanes used, q part pre-scaled)


def _rows(batch):
    return CLS_PAD + batch * N_PATCHES


# ------------------------------ kernel helpers -------------------------------
def _layernorm(v, w, b):
    # f32 elementwise math (v5e has no bf16 VPU/EUP); cast only at dot boundaries.
    mu = jnp.mean(v, axis=-1, keepdims=True)
    var = jnp.mean(jnp.square(v - mu), axis=-1, keepdims=True)
    return (v - mu) * lax.rsqrt(var + EPS) * w + b


def _gelu_tanh(x):
    # nn.GELU(approximate='tanh'); EUP-friendly (tanh) form, kept in f32 (v5e-safe).
    # TODO(synk): PyTorch's default nn.GELU uses the exact erf formulation.
    c = 0.7978845608028654  # sqrt(2/pi)
    return 0.5 * x * (1.0 + jnp.tanh(c * (x + 0.044715 * x * x * x)))


# ------------------------------ fused Pallas kernel ---------------------------
def _make_fused_kernel(n_last_blocks):
    first_out = DEPTH - n_last_blocks
    f32 = jnp.float32
    bf16 = jnp.bfloat16

    def kernel(patches_ref, patch_w_ref, base_ref, mask_ref,
               blk_w_ref, fc2_w_ref, vecs_ref, wvecs_ref, out_ref):
        def vec(i):                                    # (1, EMBED) f32
            return vecs_ref[i:i + 1, :]

        # Patch embedding fused with token assembly: the padding / cls rows of
        # `patches` are zero, so the matmul leaves them 0 and `base` supplies
        # cls + positional embeddings (+ conv bias) in a single add.
        x = jnp.dot(patches_ref[...].astype(bf16), patch_w_ref[...],
                    preferred_element_type=f32) + base_ref[...]       # (ROWS, D) f32

        mask = mask_ref[...]                                          # (ROWS, ROWS) f32
        norm_w = vec(VEC_NORMW)
        norm_b = vec(VEC_NORMB)

        for d in range(DEPTH):                     # static unroll (DEPTH = 4)
            W = blk_w_ref[d]                       # (EMBED, WBLK) bf16, VMEM-resident
            qkv_b = wvecs_ref[DEPTH + d:DEPTH + d + 1, :3 * EMBED]    # (1, 96)
            fc1_b = wvecs_ref[d:d + 1, :MLP_HIDDEN]                   # (1, 128)

            # --- attention branch ---
            h = _layernorm(x, vec(VEC_LN1W + d), vec(VEC_LN1B + d))
            hb = h.astype(bf16)
            # One fused QKV matmul per block (q weight/bias pre-scaled by 1/sqrt(hd)).
            qkv = jnp.dot(hb, W[:, :3 * EMBED],
                          preferred_element_type=f32) + qkv_b         # (ROWS, 96) f32
            heads = []
            for hh in range(HEADS):                # static unroll (HEADS = 2)
                q = qkv[:, hh * HEAD_DIM:(hh + 1) * HEAD_DIM]
                k = qkv[:, EMBED + hh * HEAD_DIM:EMBED + (hh + 1) * HEAD_DIM]
                v = qkv[:, 2 * EMBED + hh * HEAD_DIM:2 * EMBED + (hh + 1) * HEAD_DIM]
                # q @ k^T: contract last dims directly (no explicit transpose).
                s = lax.dot_general(q.astype(bf16), k.astype(bf16),
                                    (((1,), (1,)), ((), ())),
                                    preferred_element_type=f32)
                s = s + mask                       # block-diagonal batch mask
                s = s - jnp.max(s, axis=-1, keepdims=True)
                p = jnp.exp(s)                     # unnormalized probabilities
                l = jnp.sum(p, axis=-1, keepdims=True)
                o = jnp.dot(p.astype(bf16), v.astype(bf16),
                            preferred_element_type=f32)               # (ROWS, hd)
                # Deferred softmax normalization: scale the small (ROWS, hd)
                # head output instead of the (ROWS, ROWS) probability matrix.
                heads.append(o * pl.reciprocal(l, approx=True))
            o_cat = jnp.concatenate(heads, axis=-1)                   # (ROWS, EMBED)
            attn = jnp.dot(o_cat.astype(bf16), W[:, 3 * EMBED:4 * EMBED],
                           preferred_element_type=f32)                # single proj matmul
            x = x + attn + vec(VEC_PROJB + d)

            # --- MLP branch ---
            h2 = _layernorm(x, vec(VEC_LN2W + d), vec(VEC_LN2B + d))
            m = jnp.dot(h2.astype(bf16), W[:, 4 * EMBED:4 * EMBED + MLP_HIDDEN],
                        preferred_element_type=f32) + fc1_b
            m = _gelu_tanh(m)
            m = jnp.dot(m.astype(bf16), fc2_w_ref[d],
                        preferred_element_type=f32) + vec(VEC_FC2B + d)
            x = x + m

            # Emit the final-LayerNorm'ed copy of this intermediate layer.
            if d >= first_out:
                out_ref[d - first_out] = _layernorm(
                    x, norm_w, norm_b).astype(out_ref.dtype)

    return kernel


def _fused_forward(images, fp, n_last_blocks):
    B = images.shape[0]
    rows = _rows(B)
    # patchify NCHW -> (B*N, C*p*p); channel-major per patch matches Conv2d weight flatten
    x = images.reshape(B, IN_CH, GRID_HW, PATCH, GRID_HW, PATCH)
    x = x.transpose(0, 2, 4, 1, 3, 5).reshape(B * N_PATCHES, PATCH_DIM)
    patches = jnp.zeros((rows, PATCH_DIM), jnp.float32).at[CLS_PAD:].set(x)

    # Grid-less, fully VMEM-resident call (footprint << 1 MiB, fine on v7x's
    # 64 MiB VMEM).  NOTE: if BATCH grows to ~8+, add a leading "parallel"
    # batch grid axis so v7x's second TensorCore is used.
    out = pl.pallas_call(
        _make_fused_kernel(n_last_blocks),
        out_shape=jax.ShapeDtypeStruct((n_last_blocks, rows, EMBED), jnp.float32),
    )(patches, fp["patch_w"], fp["base"], fp["mask"],
      fp["blk_w"], fp["fc2_w"], fp["vecs"], fp["wvecs"])

    results = []
    for i in range(n_last_blocks):
        o = out[i]
        cls_tok = o[:B, :]                                              # (B, D)
        patch_tok = o[CLS_PAD:CLS_PAD + B * N_PATCHES, :].reshape(B, N_PATCHES, EMBED)
        results.append((patch_tok, cls_tok))
    return tuple(results)


# --------------------------- synthetic feature model --------------------------
def init_params(seed=42):
    key = jax.random.PRNGKey(seed)

    def nxt():
        nonlocal key
        key, sub = jax.random.split(key)
        return sub

    s = 0.02
    f32 = jnp.float32
    params = {
        # conv patch-embed weight (D, C, p, p) flattened to (C*p*p, D) matmul form
        "patch_w": s * jax.random.normal(nxt(), (PATCH_DIM, EMBED), f32),
        "patch_b": jnp.zeros((1, EMBED), f32),
        "cls": s * jax.random.normal(nxt(), (1, 1, EMBED), f32),
        "pos": s * jax.random.normal(nxt(), (1, TOKENS, EMBED), f32),
        "norm_w": jnp.ones((1, EMBED), f32),
        "norm_b": jnp.zeros((1, EMBED), f32),
    }
    blocks = []
    for _ in range(DEPTH):
        blocks.append(dict(
            ln1_w=jnp.ones((1, EMBED), f32), ln1_b=jnp.zeros((1, EMBED), f32),
            qkv_w=s * jax.random.normal(nxt(), (EMBED, 3 * EMBED), f32),
            qkv_b=jnp.zeros((1, 3 * EMBED), f32),
            proj_w=s * jax.random.normal(nxt(), (EMBED, EMBED), f32),
            proj_b=jnp.zeros((1, EMBED), f32),
            ln2_w=jnp.ones((1, EMBED), f32), ln2_b=jnp.zeros((1, EMBED), f32),
            fc1_w=s * jax.random.normal(nxt(), (EMBED, MLP_HIDDEN), f32),
            fc1_b=jnp.zeros((1, MLP_HIDDEN), f32),
            fc2_w=s * jax.random.normal(nxt(), (MLP_HIDDEN, EMBED), f32),
            fc2_b=jnp.zeros((1, EMBED), f32),
        ))
    params["blocks"] = blocks
    return params


def _build_attn_mask(batch):
    rows = _rows(batch)
    ids = np.full((rows,), -1, np.int64)
    ids[:batch] = np.arange(batch)
    for b in range(batch):
        ids[CLS_PAD + b * N_PATCHES: CLS_PAD + (b + 1) * N_PATCHES] = b
    same = (ids[:, None] == ids[None, :]) & (ids[None, :] >= 0)
    # -1e30 (not -inf) so padded query rows stay NaN-free after max-subtraction.
    return jnp.asarray(np.where(same, 0.0, -1e30), np.float32)


def prepare_fused_params(params, batch):
    """One-time layout plumbing (cached per batch size):
    * fuse QKV / proj / fc1 into one lane-dense (DEPTH, EMBED, 256) bf16 slab,
      with 1/sqrt(head_dim) constant-folded into the q columns / q bias,
    * pack every (1, EMBED) LayerNorm / bias vector into one (32, EMBED) f32
      slab and every 96/128-wide bias into one (8, 128) f32 slab,
    * cast all matmul weights to bf16 (== autocast), keep vectors in f32."""
    assert batch <= CLS_PAD
    f32, bf16 = jnp.float32, jnp.bfloat16
    blocks = params["blocks"]
    scale = float(HEAD_DIM) ** -0.5

    def stack(key):
        return jnp.stack([blk[key] for blk in blocks], axis=0)

    def stack2(key):  # (DEPTH, lanes): drop the middle size-1 axis
        return jnp.concatenate([blk[key] for blk in blocks], axis=0)

    # Fused QKV weight / bias with the attention scale folded into q (f32 math,
    # then a single cast to bf16 so no extra rounding step is introduced).
    qkv_w = stack("qkv_w")                                    # (DEPTH, D, 3D) f32
    qkv_w = qkv_w.at[:, :, :EMBED].multiply(scale)
    qkv_b = stack2("qkv_b")                                   # (DEPTH, 3D) f32
    qkv_b = qkv_b.at[:, :EMBED].multiply(scale)

    proj_w = stack("proj_w")                                  # (DEPTH, D, D)
    fc1_w = stack("fc1_w")                                    # (DEPTH, D, 4D)
    blk_w = jnp.concatenate([qkv_w, proj_w, fc1_w], axis=2).astype(bf16)   # (DEPTH, D, 256)
    fc2_w = stack("fc2_w").astype(bf16)                       # (DEPTH, 4D, D)

    # Narrow-vector slab (static row indices defined at module scope).
    vecs = jnp.concatenate(
        [stack2("ln1_w"), stack2("ln1_b"),
         stack2("ln2_w"), stack2("ln2_b"),
         stack2("proj_b"), stack2("fc2_b"),
         params["norm_w"], params["norm_b"]], axis=0)          # (26, D)
    pad = (-vecs.shape[0]) % 8
    vecs = jnp.pad(vecs, ((0, pad), (0, 0))).astype(f32)       # (32, D)

    # Wide-vector slab: fc1 bias (128 lanes) + fused qkv bias (96 lanes, padded).
    fc1_b = stack2("fc1_b")                                    # (DEPTH, 128)
    qkv_b_pad = jnp.pad(qkv_b, ((0, 0), (0, MLP_HIDDEN - 3 * EMBED)))
    wvecs = jnp.concatenate([fc1_b, qkv_b_pad], axis=0).astype(f32)        # (8, 128)

    rows = _rows(batch)
    cls_pos0 = (params["cls"][0, 0] + params["pos"][0, 0]).astype(f32)     # (D,)
    patch_pos = params["pos"][0, 1:]                                       # (N, D)
    base = jnp.zeros((rows, EMBED), f32)
    base = base.at[:batch].set(jnp.broadcast_to(cls_pos0, (batch, EMBED)))
    base = base.at[CLS_PAD:].set(jnp.tile(patch_pos, (batch, 1)) + params["patch_b"])

    return dict(
        patch_w=params["patch_w"].astype(bf16),
        base=base,
        mask=_build_attn_mask(batch),
        blk_w=blk_w,
        fc2_w=fc2_w,
        vecs=vecs,
        wvecs=wvecs,
    )


class ModelWithIntermediateLayers:
    """JAX/Pallas port of poa.eval.utils.ModelWithIntermediateLayers.

    torch.inference_mode() is implicit (pure functional forward); the autocast
    context is realized by running all matmuls in bf16 with f32 accumulation.
    """

    def __init__(self, feature_model_params, n_last_blocks):
        self.params = feature_model_params
        self.n_last_blocks = n_last_blocks
        self._cache = {}   # batch -> (prepared params, jitted forward)

    def _get_forward(self, batch):
        if batch not in self._cache:
            fp = prepare_fused_params(self.params, batch)
            fwd = jax.jit(functools.partial(_fused_forward,
                                            n_last_blocks=self.n_last_blocks))
            self._cache[batch] = (fp, fwd)
        return self._cache[batch]

    def __call__(self, images):
        # get_intermediate_layers(images, n_last_blocks, return_class_token=True)
        fp, fwd = self._get_forward(images.shape[0])
        return fwd(images, fp)


# ------------------------------------ main ------------------------------------
if __name__ == "__main__":
    key = jax.random.PRNGKey(0)
    images = jax.random.normal(key, (BATCH, IN_CH, IMG, IMG), jnp.float32)

    model = ModelWithIntermediateLayers(init_params(seed=42), N_LAST_BLOCKS)
    features = model(images)
    features = jax.block_until_ready(features)

    assert len(features) == N_LAST_BLOCKS
    for patch_tok, cls_tok in features:
        assert patch_tok.shape == (BATCH, N_PATCHES, EMBED)
        assert cls_tok.shape == (BATCH, EMBED)
        assert bool(jnp.all(jnp.isfinite(patch_tok)))
        assert bool(jnp.all(jnp.isfinite(cls_tok)))

    print("KERNEL_OK")
</pallas_src>

<mosaic_0001>
module attributes {stable_mosaic.version = 11 : i64} {
  func.func @kernel(%arg0: memref<40x48xf32, #tpu.memory_space<vmem>>, %arg1: memref<48x32xbf16, #tpu.memory_space<vmem>>, %arg2: memref<40x32xf32, #tpu.memory_space<vmem>>, %arg3: memref<40x40xf32, #tpu.memory_space<vmem>>, %arg4: memref<4x32x256xbf16, #tpu.memory_space<vmem>>, %arg5: memref<4x128x32xbf16, #tpu.memory_space<vmem>>, %arg6: memref<32x32xf32, #tpu.memory_space<vmem>>, %arg7: memref<8x128xf32, #tpu.memory_space<vmem>>, %arg8: memref<2x40x32xf32, #tpu.memory_space<vmem>>) attributes {dimension_semantics = [], scalar_prefetch = 0 : i64, scratch_operands = 0 : i64, tpu.core_type = #tpu.core_type<tc>} {
    %c0 = arith.constant 0 : index
    %c0_0 = arith.constant 0 : index
    %0 = vector.load %arg0[%c0, %c0_0] : memref<40x48xf32, #tpu.memory_space<vmem>>, vector<40x48xf32>
    %1 = arith.truncf %0 : vector<40x48xf32> to vector<40x48xbf16>
    %c0_1 = arith.constant 0 : index
    %c0_2 = arith.constant 0 : index
    %2 = vector.load %arg1[%c0_1, %c0_2] : memref<48x32xbf16, #tpu.memory_space<vmem>>, vector<48x32xbf16>
    %cst = arith.constant dense<0.000000e+00> : vector<40x32xf32>
    %3 = tpu.matmul %1, %2, %cst {dimension_numbers = #tpu.dot_dimension_numbers<[1], [0], [0], [1], [0, 0, 1, 1], [], []>} : vector<40x48xbf16>, vector<48x32xbf16>, vector<40x32xf32> -> vector<40x32xf32>
    %c0_3 = arith.constant 0 : index
    %c0_4 = arith.constant 0 : index
    %4 = vector.load %arg2[%c0_3, %c0_4] : memref<40x32xf32, #tpu.memory_space<vmem>>, vector<40x32xf32>
    %5 = arith.addf %3, %4 : vector<40x32xf32>
    %c0_5 = arith.constant 0 : index
    %c0_6 = arith.constant 0 : index
    %6 = vector.load %arg3[%c0_5, %c0_6] : memref<40x40xf32, #tpu.memory_space<vmem>>, vector<40x40xf32>
    %c24 = arith.constant 24 : index
    %c0_7 = arith.constant 0 : index
    %7 = vector.load %arg6[%c24, %c0_7] : memref<32x32xf32, #tpu.memory_space<vmem>>, vector<1x32xf32>
    %c25 = arith.constant 25 : index
    %c0_8 = arith.constant 0 : index
    %8 = vector.load %arg6[%c25, %c0_8] : memref<32x32xf32, #tpu.memory_space<vmem>>, vector<1x32xf32>
    %c0_9 = arith.constant 0 : index
    %c0_10 = arith.constant 0 : index
    %c0_11 = arith.constant 0 : index
    %9 = vector.load %arg4[%c0_9, %c0_10, %c0_11] : memref<4x32x256xbf16, #tpu.memory_space<vmem>>, vector<1x32x256xbf16>
    %10 = vector.shape_cast %9 : vector<1x32x256xbf16> to vector<32x256xbf16>
    %c4 = arith.constant 4 : index
    %c0_12 = arith.constant 0 : index
    %11 = vector.load %arg7[%c4, %c0_12] : memref<8x128xf32, #tpu.memory_space<vmem>>, vector<1x96xf32>
    %c0_13 = arith.constant 0 : index
    %c0_14 = arith.constant 0 : index
    %12 = vector.load %arg7[%c0_13, %c0_14] : memref<8x128xf32, #tpu.memory_space<vmem>>, vector<1x128xf32>
    %c0_15 = arith.constant 0 : index
    %c0_16 = arith.constant 0 : index
    %13 = vector.load %arg6[%c0_15, %c0_16] : memref<32x32xf32, #tpu.memory_space<vmem>>, vector<1x32xf32>
    %c4_17 = arith.constant 4 : index
    %c0_18 = arith.constant 0 : index
    %14 = vector.load %arg6[%c4_17, %c0_18] : memref<32x32xf32, #tpu.memory_space<vmem>>, vector<1x32xf32>
    %cst_19 = arith.constant dense<0.000000e+00> : vector<40xf32>
    %15 = vector.multi_reduction <add>, %5, %cst_19 [1] : vector<40x32xf32> to vector<40xf32>
    %16 = vector.shape_cast %15 : vector<40xf32> to vector<40x1xf32>
    %cst_20 = arith.constant 3.200000e+01 : f32
    %17 = vector.broadcast %cst_20 : f32 to vector<40x1xf32>
    %18 = arith.divf %16, %17 : vector<40x1xf32>
    %19 = vector.broadcast %18 : vector<40x1xf32> to vector<40x32xf32>
    %20 = arith.subf %5, %19 : vector<40x32xf32>
    %21 = arith.mulf %20, %20 : vector<40x32xf32>
    %cst_21 = arith.constant dense<0.000000e+00> : vector<40xf32>
    %22 = vector.multi_reduction <add>, %21, %cst_21 [1] : vector<40x32xf32> to vector<40xf32>
    %23 = vector.shape_cast %22 : vector<40xf32> to vector<40x1xf32>
    %cst_22 = arith.constant 3.200000e+01 : f32
    %24 = vector.broadcast %cst_22 : f32 to vector<40x1xf32>
    %25 = arith.divf %23, %24 : vector<40x1xf32>
    %26 = vector.broadcast %18 : vector<40x1xf32> to vector<40x32xf32>
    %27 = arith.subf %5, %26 : vector<40x32xf32>
    %cst_23 = arith.constant 9.99999997E-7 : f32
    %28 = vector.broadcast %cst_23 : f32 to vector<40x1xf32>
    %29 = arith.addf %25, %28 : vector<40x1xf32>
    %30 = math.rsqrt %29 : vector<40x1xf32>
    %31 = vector.broadcast %30 : vector<40x1xf32> to vector<40x32xf32>
    %32 = arith.mulf %27, %31 : vector<40x32xf32>
    %33 = vector.broadcast %13 : vector<1x32xf32> to vector<40x32xf32>
    %34 = arith.mulf %32, %33 : vector<40x32xf32>
    %35 = vector.broadcast %14 : vector<1x32xf32> to vector<40x32xf32>
    %36 = arith.addf %34, %35 : vector<40x32xf32>
    %37 = arith.truncf %36 : vector<40x32xf32> to vector<40x32xbf16>
    %38 = vector.extract_strided_slice %10 {offsets = [0, 0], sizes = [32, 96], strides = [1, 1]} : vector<32x256xbf16> to vector<32x96xbf16>
    %cst_24 = arith.constant dense<0.000000e+00> : vector<40x96xf32>
    %39 = tpu.matmul %37, %38, %cst_24 {dimension_numbers = #tpu.dot_dimension_numbers<[1], [0], [0], [1], [0, 0, 1, 1], [], []>} : vector<40x32xbf16>, vector<32x96xbf16>, vector<40x96xf32> -> vector<40x96xf32>
    %40 = vector.broadcast %11 : vector<1x96xf32> to vector<40x96xf32>
    %41 = arith.addf %39, %40 : vector<40x96xf32>
    %42 = vector.extract_strided_slice %41 {offsets = [0, 0], sizes = [40, 16], strides = [1, 1]} : vector<40x96xf32> to vector<40x16xf32>
    %43 = vector.extract_strided_slice %41 {offsets = [0, 32], sizes = [40, 16], strides = [1, 1]} : vector<40x96xf32> to vector<40x16xf32>
    %44 = vector.extract_strided_slice %41 {offsets = [0, 64], sizes = [40, 16], strides = [1, 1]} : vector<40x96xf32> to vector<40x16xf32>
    %45 = arith.truncf %42 : vector<40x16xf32> to vector<40x16xbf16>
    %46 = arith.truncf %43 : vector<40x16xf32> to vector<40x16xbf16>
    %cst_25 = arith.constant dense<0.000000e+00> : vector<40x40xf32>
    %47 = tpu.matmul %45, %46, %cst_25 {dimension_numbers = #tpu.dot_dimension_numbers<[1], [1], [0], [0], [0, 0, 1, 0], [], []>} : vector<40x16xbf16>, vector<40x16xbf16>, vector<40x40xf32> -> vector<40x40xf32>
    %48 = arith.addf %47, %6 : vector<40x40xf32>
    %cst_26 = arith.constant dense<0xFF800000> : vector<40xf32>
    %49 = vector.multi_reduction <maximumf>, %48, %cst_26 [1] : vector<40x40xf32> to vector<40xf32>
    %50 = vector.shape_cast %49 : vector<40xf32> to vector<40x1xf32>
    %51 = vector.broadcast %50 : vector<40x1xf32> to vector<40x40xf32>
    %52 = arith.subf %48, %51 : vector<40x40xf32>
    %53 = math.exp %52 : vector<40x40xf32>
    %cst_27 = arith.constant dense<0.000000e+00> : vector<40xf32>
    %54 = vector.multi_reduction <add>, %53, %cst_27 [1] : vector<40x40xf32> to vector<40xf32>
    %55 = vector.shape_cast %54 : vector<40xf32> to vector<40x1xf32>
    %56 = arith.truncf %53 : vector<40x40xf32> to vector<40x40xbf16>
    %57 = arith.truncf %44 : vector<40x16xf32> to vector<40x16xbf16>
    %cst_28 = arith.constant dense<0.000000e+00> : vector<40x16xf32>
    %58 = tpu.matmul %56, %57, %cst_28 {dimension_numbers = #tpu.dot_dimension_numbers<[1], [0], [0], [1], [0, 0, 1, 1], [], []>} : vector<40x40xbf16>, vector<40x16xbf16>, vector<40x16xf32> -> vector<40x16xf32>
    %59 = tpu.reciprocal %55 {approx = true} : vector<40x1xf32> -> vector<40x1xf32>
    %60 = vector.broadcast %59 : vector<40x1xf32> to vector<40x16xf32>
    %61 = arith.mulf %58, %60 : vector<40x16xf32>
    %62 = vector.extract_strided_slice %41 {offsets = [0, 16], sizes = [40, 16], strides = [1, 1]} : vector<40x96xf32> to vector<40x16xf32>
    %63 = vector.extract_strided_slice %41 {offsets = [0, 48], sizes = [40, 16], strides = [1, 1]} : vector<40x96xf32> to vector<40x16xf32>
    %64 = vector.extract_strided_slice %41 {offsets = [0, 80], sizes = [40, 16], strides = [1, 1]} : vector<40x96xf32> to vector<40x16xf32>
    %65 = arith.truncf %62 : vector<40x16xf32> to vector<40x16xbf16>
    %66 = arith.truncf %63 : vector<40x16xf32> to vector<40x16xbf16>
    %cst_29 = arith.constant dense<0.000000e+00> : vector<40x40xf32>
    %67 = tpu.matmul %65, %66, %cst_29 {dimension_numbers = #tpu.dot_dimension_numbers<[1], [1], [0], [0], [0, 0, 1, 0], [], []>} : vector<40x16xbf16>, vector<40x16xbf16>, vector<40x40xf32> -> vector<40x40xf32>
    %68 = arith.addf %67, %6 : vector<40x40xf32>
    %cst_30 = arith.constant dense<0xFF800000> : vector<40xf32>
    %69 = vector.multi_reduction <maximumf>, %68, %cst_30 [1] : vector<40x40xf32> to vector<40xf32>
    %70 = vector.shape_cast %69 : vector<40xf32> to vector<40x1xf32>
    %71 = vector.broadcast %70 : vector<40x1xf32> to vector<40x40xf32>
    %72 = arith.subf %68, %71 : vector<40x40xf32>
    %73 = math.exp %72 : vector<40x40xf32>
    %cst_31 = arith.constant dense<0.000000e+00> : vector<40xf32>
    %74 = vector.multi_reduction <add>, %73, %cst_31 [1] : vector<40x40xf32> to vector<40xf32>
    %75 = vector.shape_cast %74 : vector<40xf32> to vector<40x1xf32>
    %76 = arith.truncf %73 : vector<40x40xf32> to vector<40x40xbf16>
    %77 = arith.truncf %64 : vector<40x16xf32> to vector<40x16xbf16>
    %cst_32 = arith.constant dense<0.000000e+00> : vector<40x16xf32>
    %78 = tpu.matmul %76, %77, %cst_32 {dimension_numbers = #tpu.dot_dimension_numbers<[1], [0], [0], [1], [0, 0, 1, 1], [], []>} : vector<40x40xbf16>, vector<40x16xbf16>, vector<40x16xf32> -> vector<40x16xf32>
    %79 = tpu.reciprocal %75 {approx = true} : vector<40x1xf32> -> vector<40x1xf32>
    %80 = vector.broadcast %79 : vector<40x1xf32> to vector<40x16xf32>
    %81 = arith.mulf %78, %80 : vector<40x16xf32>
    %82 = tpu.concatenate %61, %81 in 1 : vector<40x16xf32>, vector<40x16xf32> -> vector<40x32xf32>
    %83 = arith.truncf %82 : vector<40x32xf32> to vector<40x32xbf16>
    %84 = vector.extract_strided_slice %10 {offsets = [0, 96], sizes = [32, 32], strides = [1, 1]} : vector<32x256xbf16> to vector<32x32xbf16>
    %cst_33 = arith.constant dense<0.000000e+00> : vector<40x32xf32>
    %85 = tpu.matmul %83, %84, %cst_33 {dimension_numbers = #tpu.dot_dimension_numbers<[1], [0], [0], [1], [0, 0, 1, 1], [], []>} : vector<40x32xbf16>, vector<32x32xbf16>, vector<40x32xf32> -> vector<40x32xf32>
    %86 = arith.addf %5, %85 : vector<40x32xf32>
    %c16 = arith.constant 16 : index
    %c0_34 = arith.constant 0 : index
    %87 = vector.load %arg6[%c16, %c0_34] : memref<32x32xf32, #tpu.memory_space<vmem>>, vector<1x32xf32>
    %88 = vector.broadcast %87 : vector<1x32xf32> to vector<40x32xf32>
    %89 = arith.addf %86, %88 : vector<40x32xf32>
    %c8 = arith.constant 8 : index
    %c0_35 = arith.constant 0 : index
    %90 = vector.load %arg6[%c8, %c0_35] : memref<32x32xf32, #tpu.memory_space<vmem>>, vector<1x32xf32>
    %c12 = arith.constant 12 : index
    %c0_36 = arith.constant 0 : index
    %91 = vector.load %arg6[%c12, %c0_36] : memref<32x32xf32, #tpu.memory_space<vmem>>, vector<1x32xf32>
    %cst_37 = arith.constant dense<0.000000e+00> : vector<40xf32>
    %92 = vector.multi_reduction <add>, %89, %cst_37 [1] : vector<40x32xf32> to vector<40xf32>
    %93 = vector.shape_cast %92 : vector<40xf32> to vector<40x1xf32>
    %cst_38 = arith.constant 3.200000e+01 : f32
    %94 = vector.broadcast %cst_38 : f32 to vector<40x1xf32>
    %95 = arith.divf %93, %94 : vector<40x1xf32>
    %96 = vector.broadcast %95 : vector<40x1xf32> to vector<40x32xf32>
    %97 = arith.subf %89, %96 : vector<40x32xf32>
    %98 = arith.mulf %97, %97 : vector<40x32xf32>
    %cst_39 = arith.constant dense<0.000000e+00> : vector<40xf32>
    %99 = vector.multi_reduction <add>, %98, %cst_39 [1] : vector<40x32xf32> to vector<40xf32>
    %100 = vector.shape_cast %99 : vector<40xf32> to vector<40x1xf32>
    %cst_40 = arith.constant 3.200000e+01 : f32
    %101 = vector.broadcast %cst_40 : f32 to vector<40x1xf32>
    %102 = arith.divf %100, %101 : vector<40x1xf32>
    %103 = vector.broadcast %95 : vector<40x1xf32> to vector<40x32xf32>
    %104 = arith.subf %89, %103 : vector<40x32xf32>
    %cst_41 = arith.constant 9.99999997E-7 : f32
    %105 = vector.broadcast %cst_41 : f32 to vector<40x1xf32>
    %106 = arith.addf %102, %105 : vector<40x1xf32>
    %107 = math.rsqrt %106 : vector<40x1xf32>
    %108 = vector.broadcast %107 : vector<40x1xf32> to vector<40x32xf32>
    %109 = arith.mulf %104, %108 : vector<40x32xf32>
    %110 = vector.broadcast %90 : vector<1x32xf32> to vector<40x32xf32>
    %111 = arith.mulf %109, %110 : vector<40x32xf32>
    %112 = vector.broadcast %91 : vector<1x32xf32> to vector<40x32xf32>
    %113 = arith.addf %111, %112 : vector<40x32xf32>
    %114 = arith.truncf %113 : vector<40x32xf32> to vector<40x32xbf16>
    %115 = vector.extract_strided_slice %10 {offsets = [0, 128], sizes = [32, 128], strides = [1, 1]} : vector<32x256xbf16> to vector<32x128xbf16>
    %cst_42 = arith.constant dense<0.000000e+00> : vector<40x128xf32>
    %116 = tpu.matmul %114, %115, %cst_42 {dimension_numbers = #tpu.dot_dimension_numbers<[1], [0], [0], [1], [0, 0, 1, 1], [], []>} : vector<40x32xbf16>, vector<32x128xbf16>, vector<40x128xf32> -> vector<40x128xf32>
    %117 = vector.broadcast %12 : vector<1x128xf32> to vector<40x128xf32>
    %118 = arith.addf %116, %117 : vector<40x128xf32>
    %cst_43 = arith.constant 5.000000e-01 : f32
    %119 = vector.broadcast %cst_43 : f32 to vector<40x128xf32>
    %120 = arith.mulf %119, %118 : vector<40x128xf32>
    %cst_44 = arith.constant 4.471500e-02 : f32
    %121 = vector.broadcast %cst_44 : f32 to vector<40x128xf32>
    %122 = arith.mulf %121, %118 : vector<40x128xf32>
    %123 = arith.mulf %122, %118 : vector<40x128xf32>
    %124 = arith.mulf %123, %118 : vector<40x128xf32>
    %125 = arith.addf %118, %124 : vector<40x128xf32>
    %cst_45 = arith.constant 0.797884583 : f32
    %126 = vector.broadcast %cst_45 : f32 to vector<40x128xf32>
    %127 = arith.mulf %126, %125 : vector<40x128xf32>
    %128 = math.tanh %127 : vector<40x128xf32>
    %cst_46 = arith.constant 1.000000e+00 : f32
    %129 = vector.broadcast %cst_46 : f32 to vector<40x128xf32>
    %130 = arith.addf %129, %128 : vector<40x128xf32>
    %131 = arith.mulf %120, %130 : vector<40x128xf32>
    %132 = arith.truncf %131 : vector<40x128xf32> to vector<40x128xbf16>
    %c0_47 = arith.constant 0 : index
    %c0_48 = arith.constant 0 : index
    %c0_49 = arith.constant 0 : index
    %133 = vector.load %arg5[%c0_47, %c0_48, %c0_49] : memref<4x128x32xbf16, #tpu.memory_space<vmem>>, vector<1x128x32xbf16>
    %134 = vector.shape_cast %133 : vector<1x128x32xbf16> to vector<128x32xbf16>
    %cst_50 = arith.constant dense<0.000000e+00> : vector<40x32xf32>
    %135 = tpu.matmul %132, %134, %cst_50 {dimension_numbers = #tpu.dot_dimension_numbers<[1], [0], [0], [1], [0, 0, 1, 1], [], []>} : vector<40x128xbf16>, vector<128x32xbf16>, vector<40x32xf32> -> vector<40x32xf32>
    %c20 = arith.constant 20 : index
    %c0_51 = arith.constant 0 : index
    %136 = vector.load %arg6[%c20, %c0_51] : memref<32x32xf32, #tpu.memory_space<vmem>>, vector<1x32xf32>
    %137 = vector.broadcast %136 : vector<1x32xf32> to vector<40x32xf32>
    %138 = arith.addf %135, %137 : vector<40x32xf32>
    %139 = arith.addf %89, %138 : vector<40x32xf32>
    %c1 = arith.constant 1 : index
    %c0_52 = arith.constant 0 : index
    %c0_53 = arith.constant 0 : index
    %140 = vector.load %arg4[%c1, %c0_52, %c0_53] : memref<4x32x256xbf16, #tpu.memory_space<vmem>>, vector<1x32x256xbf16>
    %141 = vector.shape_cast %140 : vector<1x32x256xbf16> to vector<32x256xbf16>
    %c5 = arith.constant 5 : index
    %c0_54 = arith.constant 0 : index
    %142 = vector.load %arg7[%c5, %c0_54] : memref<8x128xf32, #tpu.memory_space<vmem>>, vector<1x96xf32>
    %c1_55 = arith.constant 1 : index
    %c0_56 = arith.constant 0 : index
    %143 = vector.load %arg7[%c1_55, %c0_56] : memref<8x128xf32, #tpu.memory_space<vmem>>, vector<1x128xf32>
    %c1_57 = arith.constant 1 : index
    %c0_58 = arith.constant 0 : index
    %144 = vector.load %arg6[%c1_57, %c0_58] : memref<32x32xf32, #tpu.memory_space<vmem>>, vector<1x32xf32>
    %c5_59 = arith.constant 5 : index
    %c0_60 = arith.constant 0 : index
    %145 = vector.load %arg6[%c5_59, %c0_60] : memref<32x32xf32, #tpu.memory_space<vmem>>, vector<1x32xf32>
    %cst_61 = arith.constant dense<0.000000e+00> : vector<40xf32>
    %146 = vector.multi_reduction <add>, %139, %cst_61 [1] : vector<40x32xf32> to vector<40xf32>
    %147 = vector.shape_cast %146 : vector<40xf32> to vector<40x1xf32>
    %cst_62 = arith.constant 3.200000e+01 : f32
    %148 = vector.broadcast %cst_62 : f32 to vector<40x1xf32>
    %149 = arith.divf %147, %148 : vector<40x1xf32>
    %150 = vector.broadcast %149 : vector<40x1xf32> to vector<40x32xf32>
    %151 = arith.subf %139, %150 : vector<40x32xf32>
    %152 = arith.mulf %151, %151 : vector<40x32xf32>
    %cst_63 = arith.constant dense<0.000000e+00> : vector<40xf32>
    %153 = vector.multi_reduction <add>, %152, %cst_63 [1] : vector<40x32xf32> to vector<40xf32>
    %154 = vector.shape_cast %153 : vector<40xf32> to vector<40x1xf32>
    %cst_64 = arith.constant 3.200000e+01 : f32
    %155 = vector.broadcast %cst_64 : f32 to vector<40x1xf32>
    %156 = arith.divf %154, %155 : vector<40x1xf32>
    %157 = vector.broadcast %149 : vector<40x1xf32> to vector<40x32xf32>
    %158 = arith.subf %139, %157 : vector<40x32xf32>
    %cst_65 = arith.constant 9.99999997E-7 : f32
    %159 = vector.broadcast %cst_65 : f32 to vector<40x1xf32>
    %160 = arith.addf %156, %159 : vector<40x1xf32>
    %161 = math.rsqrt %160 : vector<40x1xf32>
    %162 = vector.broadcast %161 : vector<40x1xf32> to vector<40x32xf32>
    %163 = arith.mulf %158, %162 : vector<40x32xf32>
    %164 = vector.broadcast %144 : vector<1x32xf32> to vector<40x32xf32>
    %165 = arith.mulf %163, %164 : vector<40x32xf32>
    %166 = vector.broadcast %145 : vector<1x32xf32> to vector<40x32xf32>
    %167 = arith.addf %165, %166 : vector<40x32xf32>
    %168 = arith.truncf %167 : vector<40x32xf32> to vector<40x32xbf16>
    %169 = vector.extract_strided_slice %141 {offsets = [0, 0], sizes = [32, 96], strides = [1, 1]} : vector<32x256xbf16> to vector<32x96xbf16>
    %cst_66 = arith.constant dense<0.000000e+00> : vector<40x96xf32>
    %170 = tpu.matmul %168, %169, %cst_66 {dimension_numbers = #tpu.dot_dimension_numbers<[1], [0], [0], [1], [0, 0, 1, 1], [], []>} : vector<40x32xbf16>, vector<32x96xbf16>, vector<40x96xf32> -> vector<40x96xf32>
    %171 = vector.broadcast %142 : vector<1x96xf32> to vector<40x96xf32>
    %172 = arith.addf %170, %171 : vector<40x96xf32>
    %173 = vector.extract_strided_slice %172 {offsets = [0, 0], sizes = [40, 16], strides = [1, 1]} : vector<40x96xf32> to vector<40x16xf32>
    %174 = vector.extract_strided_slice %172 {offsets = [0, 32], sizes = [40, 16], strides = [1, 1]} : vector<40x96xf32> to vector<40x16xf32>
    %175 = vector.extract_strided_slice %172 {offsets = [0, 64], sizes = [40, 16], strides = [1, 1]} : vector<40x96xf32> to vector<40x16xf32>
    %176 = arith.truncf %173 : vector<40x16xf32> to vector<40x16xbf16>
    %177 = arith.truncf %174 : vector<40x16xf32> to vector<40x16xbf16>
    %cst_67 = arith.constant dense<0.000000e+00> : vector<40x40xf32>
    %178 = tpu.matmul %176, %177, %cst_67 {dimension_numbers = #tpu.dot_dimension_numbers<[1], [1], [0], [0], [0, 0, 1, 0], [], []>} : vector<40x16xbf16>, vector<40x16xbf16>, vector<40x40xf32> -> vector<40x40xf32>
    %179 = arith.addf %178, %6 : vector<40x40xf32>
    %cst_68 = arith.constant dense<0xFF800000> : vector<40xf32>
    %180 = vector.multi_reduction <maximumf>, %179, %cst_68 [1] : vector<40x40xf32> to vector<40xf32>
    %181 = vector.shape_cast %180 : vector<40xf32> to vector<40x1xf32>
    %182 = vector.broadcast %181 : vector<40x1xf32> to vector<40x40xf32>
    %183 = arith.subf %179, %182 : vector<40x40xf32>
    %184 = math.exp %183 : vector<40x40xf32>
    %cst_69 = arith.constant dense<0.000000e+00> : vector<40xf32>
    %185 = vector.multi_reduction <add>, %184, %cst_69 [1] : vector<40x40xf32> to vector<40xf32>
    %186 = vector.shape_cast %185 : vector<40xf32> to vector<40x1xf32>
    %187 = arith.truncf %184 : vector<40x40xf32> to vector<40x40xbf16>
    %188 = arith.truncf %175 : vector<40x16xf32> to vector<40x16xbf16>
    %cst_70 = arith.constant dense<0.000000e+00> : vector<40x16xf32>
    %189 = tpu.matmul %187, %188, %cst_70 {dimension_numbers = #tpu.dot_dimension_numbers<[1], [0], [0], [1], [0, 0, 1, 1], [], []>} : vector<40x40xbf16>, vector<40x16xbf16>, vector<40x16xf32> -> vector<40x16xf32>
    %190 = tpu.reciprocal %186 {approx = true} : vector<40x1xf32> -> vector<40x1xf32>
    %191 = vector.broadcast %190 : vector<40x1xf32> to vector<40x16xf32>
    %192 = arith.mulf %189, %191 : vector<40x16xf32>
    %193 = vector.extract_strided_slice %172 {offsets = [0, 16], sizes = [40, 16], strides = [1, 1]} : vector<40x96xf32> to vector<40x16xf32>
    %194 = vector.extract_strided_slice %172 {offsets = [0, 48], sizes = [40, 16], strides = [1, 1]} : vector<40x96xf32> to vector<40x16xf32>
    %195 = vector.extract_strided_slice %172 {offsets = [0, 80], sizes = [40, 16], strides = [1, 1]} : vector<40x96xf32> to vector<40x16xf32>
    %196 = arith.truncf %193 : vector<40x16xf32> to vector<40x16xbf16>
    %197 = arith.truncf %194 : vector<40x16xf32> to vector<40x16xbf16>
    %cst_71 = arith.constant dense<0.000000e+00> : vector<40x40xf32>
    %198 = tpu.matmul %196, %197, %cst_71 {dimension_numbers = #tpu.dot_dimension_numbers<[1], [1], [0], [0], [0, 0, 1, 0], [], []>} : vector<40x16xbf16>, vector<40x16xbf16>, vector<40x40xf32> -> vector<40x40xf32>
    %199 = arith.addf %198, %6 : vector<40x40xf32>
    %cst_72 = arith.constant dense<0xFF800000> : vector<40xf32>
    %200 = vector.multi_reduction <maximumf>, %199, %cst_72 [1] : vector<40x40xf32> to vector<40xf32>
    %201 = vector.shape_cast %200 : vector<40xf32> to vector<40x1xf32>
    %202 = vector.broadcast %201 : vector<40x1xf32> to vector<40x40xf32>
    %203 = arith.subf %199, %202 : vector<40x40xf32>
    %204 = math.exp %203 : vector<40x40xf32>
    %cst_73 = arith.constant dense<0.000000e+00> : vector<40xf32>
    %205 = vector.multi_reduction <add>, %204, %cst_73 [1] : vector<40x40xf32> to vector<40xf32>
    %206 = vector.shape_cast %205 : vector<40xf32> to vector<40x1xf32>
    %207 = arith.truncf %204 : vector<40x40xf32> to vector<40x40xbf16>
    %208 = arith.truncf %195 : vector<40x16xf32> to vector<40x16xbf16>
    %cst_74 = arith.constant dense<0.000000e+00> : vector<40x16xf32>
    %209 = tpu.matmul %207, %208, %cst_74 {dimension_numbers = #tpu.dot_dimension_numbers<[1], [0], [0], [1], [0, 0, 1, 1], [], []>} : vector<40x40xbf16>, vector<40x16xbf16>, vector<40x16xf32> -> vector<40x16xf32>
    %210 = tpu.reciprocal %206 {approx = true} : vector<40x1xf32> -> vector<40x1xf32>
    %211 = vector.broadcast %210 : vector<40x1xf32> to vector<40x16xf32>
    %212 = arith.mulf %209, %211 : vector<40x16xf32>
    %213 = tpu.concatenate %192, %212 in 1 : vector<40x16xf32>, vector<40x16xf32> -> vector<40x32xf32>
    %214 = arith.truncf %213 : vector<40x32xf32> to vector<40x32xbf16>
    %215 = vector.extract_strided_slice %141 {offsets = [0, 96], sizes = [32, 32], strides = [1, 1]} : vector<32x256xbf16> to vector<32x32xbf16>
    %cst_75 = arith.constant dense<0.000000e+00> : vector<40x32xf32>
    %216 = tpu.matmul %214, %215, %cst_75 {dimension_numbers = #tpu.dot_dimension_numbers<[1], [0], [0], [1], [0, 0, 1, 1], [], []>} : vector<40x32xbf16>, vector<32x32xbf16>, vector<40x32xf32> -> vector<40x32xf32>
    %217 = arith.addf %139, %216 : vector<40x32xf32>
    %c17 = arith.constant 17 : index
    %c0_76 = arith.constant 0 : index
    %218 = vector.load %arg6[%c17, %c0_76] : memref<32x32xf32, #tpu.memory_space<vmem>>, vector<1x32xf32>
    %219 = vector.broadcast %218 : vector<1x32xf32> to vector<40x32xf32>
    %220 = arith.addf %217, %219 : vector<40x32xf32>
    %c9 = arith.constant 9 : index
    %c0_77 = arith.constant 0 : index
    %221 = vector.load %arg6[%c9, %c0_77] : memref<32x32xf32, #tpu.memory_space<vmem>>, vector<1x32xf32>
    %c13 = arith.constant 13 : index
    %c0_78 = arith.constant 0 : index
    %222 = vector.load %arg6[%c13, %c0_78] : memref<32x32xf32, #tpu.memory_space<vmem>>, vector<1x32xf32>
    %cst_79 = arith.constant dense<0.000000e+00> : vector<40xf32>
    %223 = vector.multi_reduction <add>, %220, %cst_79 [1] : vector<40x32xf32> to vector<40xf32>
    %224 = vector.shape_cast %223 : vector<40xf32> to vector<40x1xf32>
    %cst_80 = arith.constant 3.200000e+01 : f32
    %225 = vector.broadcast %cst_80 : f32 to vector<40x1xf32>
    %226 = arith.divf %224, %225 : vector<40x1xf32>
    %227 = vector.broadcast %226 : vector<40x1xf32> to vector<40x32xf32>
    %228 = arith.subf %220, %227 : vector<40x32xf32>
    %229 = arith.mulf %228, %228 : vector<40x32xf32>
    %cst_81 = arith.constant dense<0.000000e+00> : vector<40xf32>
    %230 = vector.multi_reduction <add>, %229, %cst_81 [1] : vector<40x32xf32> to vector<40xf32>
    %231 = vector.shape_cast %230 : vector<40xf32> to vector<40x1xf32>
    %cst_82 = arith.constant 3.200000e+01 : f32
    %232 = vector.broadcast %cst_82 : f32 to vector<40x1xf32>
    %233 = arith.divf %231, %232 : vector<40x1xf32>
    %234 = vector.broadcast %226 : vector<40x1xf32> to vector<40x32xf32>
    %235 = arith.subf %220, %234 : vector<40x32xf32>
    %cst_83 = arith.constant 9.99999997E-7 : f32
    %236 = vector.broadcast %cst_83 : f32 to vector<40x1xf32>
    %237 = arith.addf %233, %236 : vector<40x1xf32>
    %238 = math.rsqrt %237 : vector<40x1xf32>
    %239 = vector.broadcast %238 : vector<40x1xf32> to vector<40x32xf32>
    %240 = arith.mulf %235, %239 : vector<40x32xf32>
    %241 = vector.broadcast %221 : vector<1x32xf32> to vector<40x32xf32>
    %242 = arith.mulf %240, %241 : vector<40x32xf32>
    %243 = vector.broadcast %222 : vector<1x32xf32> to vector<40x32xf32>
    %244 = arith.addf %242, %243 : vector<40x32xf32>
    %245 = arith.truncf %244 : vector<40x32xf32> to vector<40x32xbf16>
    %246 = vector.extract_strided_slice %141 {offsets = [0, 128], sizes = [32, 128], strides = [1, 1]} : vector<32x256xbf16> to vector<32x128xbf16>
    %cst_84 = arith.constant dense<0.000000e+00> : vector<40x128xf32>
    %247 = tpu.matmul %245, %246, %cst_84 {dimension_numbers = #tpu.dot_dimension_numbers<[1], [0], [0], [1], [0, 0, 1, 1], [], []>} : vector<40x32xbf16>, vector<32x128xbf16>, vector<40x128xf32> -> vector<40x128xf32>
    %248 = vector.broadcast %143 : vector<1x128xf32> to vector<40x128xf32>
    %249 = arith.addf %247, %248 : vector<40x128xf32>
    %cst_85 = arith.constant 5.000000e-01 : f32
    %250 = vector.broadcast %cst_85 : f32 to vector<40x128xf32>
    %251 = arith.mulf %250, %249 : vector<40x128xf32>
    %cst_86 = arith.constant 4.471500e-02 : f32
    %252 = vector.broadcast %cst_86 : f32 to vector<40x128xf32>
    %253 = arith.mulf %252, %249 : vector<40x128xf32>
    %254 = arith.mulf %253, %249 : vector<40x128xf32>
    %255 = arith.mulf %254, %249 : vector<40x128xf32>
    %256 = arith.addf %249, %255 : vector<40x128xf32>
    %cst_87 = arith.constant 0.797884583 : f32
    %257 = vector.broadcast %cst_87 : f32 to vector<40x128xf32>
    %258 = arith.mulf %257, %256 : vector<40x128xf32>
    %259 = math.tanh %258 : vector<40x128xf32>
    %cst_88 = arith.constant 1.000000e+00 : f32
    %260 = vector.broadcast %cst_88 : f32 to vector<40x128xf32>
    %261 = arith.addf %260, %259 : vector<40x128xf32>
    %262 = arith.mulf %251, %261 : vector<40x128xf32>
    %263 = arith.truncf %262 : vector<40x128xf32> to vector<40x128xbf16>
    %c1_89 = arith.constant 1 : index
    %c0_90 = arith.constant 0 : index
    %c0_91 = arith.constant 0 : index
    %264 = vector.load %arg5[%c1_89, %c0_90, %c0_91] : memref<4x128x32xbf16, #tpu.memory_space<vmem>>, vector<1x128x32xbf16>
    %265 = vector.shape_cast %264 : vector<1x128x32xbf16> to vector<128x32xbf16>
    %cst_92 = arith.constant dense<0.000000e+00> : vector<40x32xf32>
    %266 = tpu.matmul %263, %265, %cst_92 {dimension_numbers = #tpu.dot_dimension_numbers<[1], [0], [0], [1], [0, 0, 1, 1], [], []>} : vector<40x128xbf16>, vector<128x32xbf16>, vector<40x32xf32> -> vector<40x32xf32>
    %c21 = arith.constant 21 : index
    %c0_93 = arith.constant 0 : index
    %267 = vector.load %arg6[%c21, %c0_93] : memref<32x32xf32, #tpu.memory_space<vmem>>, vector<1x32xf32>
    %268 = vector.broadcast %267 : vector<1x32xf32> to vector<40x32xf32>
    %269 = arith.addf %266, %268 : vector<40x32xf32>
    %270 = arith.addf %220, %269 : vector<40x32xf32>
    %c2 = arith.constant 2 : index
    %c0_94 = arith.constant 0 : index
    %c0_95 = arith.constant 0 : index
    %271 = vector.load %arg4[%c2, %c0_94, %c0_95] : memref<4x32x256xbf16, #tpu.memory_space<vmem>>, vector<1x32x256xbf16>
    %272 = vector.shape_cast %271 : vector<1x32x256xbf16> to vector<32x256xbf16>
    %c6 = arith.constant 6 : index
    %c0_96 = arith.constant 0 : index
    %273 = vector.load %arg7[%c6, %c0_96] : memref<8x128xf32, #tpu.memory_space<vmem>>, vector<1x96xf32>
    %c2_97 = arith.constant 2 : index
    %c0_98 = arith.constant 0 : index
    %274 = vector.load %arg7[%c2_97, %c0_98] : memref<8x128xf32, #tpu.memory_space<vmem>>, vector<1x128xf32>
    %c2_99 = arith.constant 2 : index
    %c0_100 = arith.constant 0 : index
    %275 = vector.load %arg6[%c2_99, %c0_100] : memref<32x32xf32, #tpu.memory_space<vmem>>, vector<1x32xf32>
    %c6_101 = arith.constant 6 : index
    %c0_102 = arith.constant 0 : index
    %276 = vector.load %arg6[%c6_101, %c0_102] : memref<32x32xf32, #tpu.memory_space<vmem>>, vector<1x32xf32>
    %cst_103 = arith.constant dense<0.000000e+00> : vector<40xf32>
    %277 = vector.multi_reduction <add>, %270, %cst_103 [1] : vector<40x32xf32> to vector<40xf32>
    %278 = vector.shape_cast %277 : vector<40xf32> to vector<40x1xf32>
    %cst_104 = arith.constant 3.200000e+01 : f32
    %279 = vector.broadcast %cst_104 : f32 to vector<40x1xf32>
    %280 = arith.divf %278, %279 : vector<40x1xf32>
    %281 = vector.broadcast %280 : vector<40x1xf32> to vector<40x32xf32>
    %282 = arith.subf %270, %281 : vector<40x32xf32>
    %283 = arith.mulf %282, %282 : vector<40x32xf32>
    %cst_105 = arith.constant dense<0.000000e+00> : vector<40xf32>
    %284 = vector.multi_reduction <add>, %283, %cst_105 [1] : vector<40x32xf32> to vector<40xf32>
    %285 = vector.shape_cast %284 : vector<40xf32> to vector<40x1xf32>
    %cst_106 = arith.constant 3.200000e+01 : f32
    %286 = vector.broadcast %cst_106 : f32 to vector<40x1xf32>
    %287 = arith.divf %285, %286 : vector<40x1xf32>
    %288 = vector.broadcast %280 : vector<40x1xf32> to vector<40x32xf32>
    %289 = arith.subf %270, %288 : vector<40x32xf32>
    %cst_107 = arith.constant 9.99999997E-7 : f32
    %290 = vector.broadcast %cst_107 : f32 to vector<40x1xf32>
    %291 = arith.addf %287, %290 : vector<40x1xf32>
    %292 = math.rsqrt %291 : vector<40x1xf32>
    %293 = vector.broadcast %292 : vector<40x1xf32> to vector<40x32xf32>
    %294 = arith.mulf %289, %293 : vector<40x32xf32>
    %295 = vector.broadcast %275 : vector<1x32xf32> to vector<40x32xf32>
    %296 = arith.mulf %294, %295 : vector<40x32xf32>
    %297 = vector.broadcast %276 : vector<1x32xf32> to vector<40x32xf32>
    %298 = arith.addf %296, %297 : vector<40x32xf32>
    %299 = arith.truncf %298 : vector<40x32xf32> to vector<40x32xbf16>
    %300 = vector.extract_strided_slice %272 {offsets = [0, 0], sizes = [32, 96], strides = [1, 1]} : vector<32x256xbf16> to vector<32x96xbf16>
    %cst_108 = arith.constant dense<0.000000e+00> : vector<40x96xf32>
    %301 = tpu.matmul %299, %300, %cst_108 {dimension_numbers = #tpu.dot_dimension_numbers<[1], [0], [0], [1], [0, 0, 1, 1], [], []>} : vector<40x32xbf16>, vector<32x96xbf16>, vector<40x96xf32> -> vector<40x96xf32>
    %302 = vector.broadcast %273 : vector<1x96xf32> to vector<40x96xf32>
    %303 = arith.addf %301, %302 : vector<40x96xf32>
    %304 = vector.extract_strided_slice %303 {offsets = [0, 0], sizes = [40, 16], strides = [1, 1]} : vector<40x96xf32> to vector<40x16xf32>
    %305 = vector.extract_strided_slice %303 {offsets = [0, 32], sizes = [40, 16], strides = [1, 1]} : vector<40x96xf32> to vector<40x16xf32>
    %306 = vector.extract_strided_slice %303 {offsets = [0, 64], sizes = [40, 16], strides = [1, 1]} : vector<40x96xf32> to vector<40x16xf32>
    %307 = arith.truncf %304 : vector<40x16xf32> to vector<40x16xbf16>
    %308 = arith.truncf %305 : vector<40x16xf32> to vector<40x16xbf16>
    %cst_109 = arith.constant dense<0.000000e+00> : vector<40x40xf32>
    %309 = tpu.matmul %307, %308, %cst_109 {dimension_numbers = #tpu.dot_dimension_numbers<[1], [1], [0], [0], [0, 0, 1, 0], [], []>} : vector<40x16xbf16>, vector<40x16xbf16>, vector<40x40xf32> -> vector<40x40xf32>
    %310 = arith.addf %309, %6 : vector<40x40xf32>
    %cst_110 = arith.constant dense<0xFF800000> : vector<40xf32>
    %311 = vector.multi_reduction <maximumf>, %310, %cst_110 [1] : vector<40x40xf32> to vector<40xf32>
    %312 = vector.shape_cast %311 : vector<40xf32> to vector<40x1xf32>
    %313 = vector.broadcast %312 : vector<40x1xf32> to vector<40x40xf32>
    %314 = arith.subf %310, %313 : vector<40x40xf32>
    %315 = math.exp %314 : vector<40x40xf32>
    %cst_111 = arith.constant dense<0.000000e+00> : vector<40xf32>
    %316 = vector.multi_reduction <add>, %315, %cst_111 [1] : vector<40x40xf32> to vector<40xf32>
    %317 = vector.shape_cast %316 : vector<40xf32> to vector<40x1xf32>
    %318 = arith.truncf %315 : vector<40x40xf32> to vector<40x40xbf16>
    %319 = arith.truncf %306 : vector<40x16xf32> to vector<40x16xbf16>
    %cst_112 = arith.constant dense<0.000000e+00> : vector<40x16xf32>
    %320 = tpu.matmul %318, %319, %cst_112 {dimension_numbers = #tpu.dot_dimension_numbers<[1], [0], [0], [1], [0, 0, 1, 1], [], []>} : vector<40x40xbf16>, vector<40x16xbf16>, vector<40x16xf32> -> vector<40x16xf32>
    %321 = tpu.reciprocal %317 {approx = true} : vector<40x1xf32> -> vector<40x1xf32>
    %322 = vector.broadcast %321 : vector<40x1xf32> to vector<40x16xf32>
    %323 = arith.mulf %320, %322 : vector<40x16xf32>
    %324 = vector.extract_strided_slice %303 {offsets = [0, 16], sizes = [40, 16], strides = [1, 1]} : vector<40x96xf32> to vector<40x16xf32>
    %325 = vector.extract_strided_slice %303 {offsets = [0, 48], sizes = [40, 16], strides = [1, 1]} : vector<40x96xf32> to vector<40x16xf32>
    %326 = vector.extract_strided_slice %303 {offsets = [0, 80], sizes = [40, 16], strides = [1, 1]} : vector<40x96xf32> to vector<40x16xf32>
    %327 = arith.truncf %324 : vector<40x16xf32> to vector<40x16xbf16>
    %328 = arith.truncf %325 : vector<40x16xf32> to vector<40x16xbf16>
    %cst_113 = arith.constant dense<0.000000e+00> : vector<40x40xf32>
    %329 = tpu.matmul %327, %328, %cst_113 {dimension_numbers = #tpu.dot_dimension_numbers<[1], [1], [0], [0], [0, 0, 1, 0], [], []>} : vector<40x16xbf16>, vector<40x16xbf16>, vector<40x40xf32> -> vector<40x40xf32>
    %330 = arith.addf %329, %6 : vector<40x40xf32>
    %cst_114 = arith.constant dense<0xFF800000> : vector<40xf32>
    %331 = vector.multi_reduction <maximumf>, %330, %cst_114 [1] : vector<40x40xf32> to vector<40xf32>
    %332 = vector.shape_cast %331 : vector<40xf32> to vector<40x1xf32>
    %333 = vector.broadcast %332 : vector<40x1xf32> to vector<40x40xf32>
    %334 = arith.subf %330, %333 : vector<40x40xf32>
    %335 = math.exp %334 : vector<40x40xf32>
    %cst_115 = arith.constant dense<0.000000e+00> : vector<40xf32>
    %336 = vector.multi_reduction <add>, %335, %cst_115 [1] : vector<40x40xf32> to vector<40xf32>
    %337 = vector.shape_cast %336 : vector<40xf32> to vector<40x1xf32>
    %338 = arith.truncf %335 : vector<40x40xf32> to vector<40x40xbf16>
    %339 = arith.truncf %326 : vector<40x16xf32> to vector<40x16xbf16>
    %cst_116 = arith.constant dense<0.000000e+00> : vector<40x16xf32>
    %340 = tpu.matmul %338, %339, %cst_116 {dimension_numbers = #tpu.dot_dimension_numbers<[1], [0], [0], [1], [0, 0, 1, 1], [], []>} : vector<40x40xbf16>, vector<40x16xbf16>, vector<40x16xf32> -> vector<40x16xf32>
    %341 = tpu.reciprocal %337 {approx = true} : vector<40x1xf32> -> vector<40x1xf32>
    %342 = vector.broadcast %341 : vector<40x1xf32> to vector<40x16xf32>
    %343 = arith.mulf %340, %342 : vector<40x16xf32>
    %344 = tpu.concatenate %323, %343 in 1 : vector<40x16xf32>, vector<40x16xf32> -> vector<40x32xf32>
    %345 = arith.truncf %344 : vector<40x32xf32> to vector<40x32xbf16>
    %346 = vector.extract_strided_slice %272 {offsets = [0, 96], sizes = [32, 32], strides = [1, 1]} : vector<32x256xbf16> to vector<32x32xbf16>
    %cst_117 = arith.constant dense<0.000000e+00> : vector<40x32xf32>
    %347 = tpu.matmul %345, %346, %cst_117 {dimension_numbers = #tpu.dot_dimension_numbers<[1], [0], [0], [1], [0, 0, 1, 1], [], []>} : vector<40x32xbf16>, vector<32x32xbf16>, vector<40x32xf32> -> vector<40x32xf32>
    %348 = arith.addf %270, %347 : vector<40x32xf32>
    %c18 = arith.constant 18 : index
    %c0_118 = arith.constant 0 : index
    %349 = vector.load %arg6[%c18, %c0_118] : memref<32x32xf32, #tpu.memory_space<vmem>>, vector<1x32xf32>
    %350 = vector.broadcast %349 : vector<1x32xf32> to vector<40x32xf32>
    %351 = arith.addf %348, %350 : vector<40x32xf32>
    %c10 = arith.constant 10 : index
    %c0_119 = arith.constant 0 : index
    %352 = vector.load %arg6[%c10, %c0_119] : memref<32x32xf32, #tpu.memory_space<vmem>>, vector<1x32xf32>
    %c14 = arith.constant 14 : index
    %c0_120 = arith.constant 0 : index
    %353 = vector.load %arg6[%c14, %c0_120] : memref<32x32xf32, #tpu.memory_space<vmem>>, vector<1x32xf32>
    %cst_121 = arith.constant dense<0.000000e+00> : vector<40xf32>
    %354 = vector.multi_reduction <add>, %351, %cst_121 [1] : vector<40x32xf32> to vector<40xf32>
    %355 = vector.shape_cast %354 : vector<40xf32> to vector<40x1xf32>
    %cst_122 = arith.constant 3.200000e+01 : f32
    %356 = vector.broadcast %cst_122 : f32 to vector<40x1xf32>
    %357 = arith.divf %355, %356 : vector<40x1xf32>
    %358 = vector.broadcast %357 : vector<40x1xf32> to vector<40x32xf32>
    %359 = arith.subf %351, %358 : vector<40x32xf32>
    %360 = arith.mulf %359, %359 : vector<40x32xf32>
    %cst_123 = arith.constant dense<0.000000e+00> : vector<40xf32>
    %361 = vector.multi_reduction <add>, %360, %cst_123 [1] : vector<40x32xf32> to vector<40xf32>
    %362 = vector.shape_cast %361 : vector<40xf32> to vector<40x1xf32>
    %cst_124 = arith.constant 3.200000e+01 : f32
    %363 = vector.broadcast %cst_124 : f32 to vector<40x1xf32>
    %364 = arith.divf %362, %363 : vector<40x1xf32>
    %365 = vector.broadcast %357 : vector<40x1xf32> to vector<40x32xf32>
    %366 = arith.subf %351, %365 : vector<40x32xf32>
    %cst_125 = arith.constant 9.99999997E-7 : f32
    %367 = vector.broadcast %cst_125 : f32 to vector<40x1xf32>
    %368 = arith.addf %364, %367 : vector<40x1xf32>
    %369 = math.rsqrt %368 : vector<40x1xf32>
    %370 = vector.broadcast %369 : vector<40x1xf32> to vector<40x32xf32>
    %371 = arith.mulf %366, %370 : vector<40x32xf32>
    %372 = vector.broadcast %352 : vector<1x32xf32> to vector<40x32xf32>
    %373 = arith.mulf %371, %372 : vector<40x32xf32>
    %374 = vector.broadcast %353 : vector<1x32xf32> to vector<40x32xf32>
    %375 = arith.addf %373, %374 : vector<40x32xf32>
    %376 = arith.truncf %375 : vector<40x32xf32> to vector<40x32xbf16>
    %377 = vector.extract_strided_slice %272 {offsets = [0, 128], sizes = [32, 128], strides = [1, 1]} : vector<32x256xbf16> to vector<32x128xbf16>
    %cst_126 = arith.constant dense<0.000000e+00> : vector<40x128xf32>
    %378 = tpu.matmul %376, %377, %cst_126 {dimension_numbers = #tpu.dot_dimension_numbers<[1], [0], [0], [1], [0, 0, 1, 1], [], []>} : vector<40x32xbf16>, vector<32x128xbf16>, vector<40x128xf32> -> vector<40x128xf32>
    %379 = vector.broadcast %274 : vector<1x128xf32> to vector<40x128xf32>
    %380 = arith.addf %378, %379 : vector<40x128xf32>
    %cst_127 = arith.constant 5.000000e-01 : f32
    %381 = vector.broadcast %cst_127 : f32 to vector<40x128xf32>
    %382 = arith.mulf %381, %380 : vector<40x128xf32>
    %cst_128 = arith.constant 4.471500e-02 : f32
    %383 = vector.broadcast %cst_128 : f32 to vector<40x128xf32>
    %384 = arith.mulf %383, %380 : vector<40x128xf32>
    %385 = arith.mulf %384, %380 : vector<40x128xf32>
    %386 = arith.mulf %385, %380 : vector<40x128xf32>
    %387 = arith.addf %380, %386 : vector<40x128xf32>
    %cst_129 = arith.constant 0.797884583 : f32
    %388 = vector.broadcast %cst_129 : f32 to vector<40x128xf32>
    %389 = arith.mulf %388, %387 : vector<40x128xf32>
    %390 = math.tanh %389 : vector<40x128xf32>
    %cst_130 = arith.constant 1.000000e+00 : f32
    %391 = vector.broadcast %cst_130 : f32 to vector<40x128xf32>
    %392 = arith.addf %391, %390 : vector<40x128xf32>
    %393 = arith.mulf %382, %392 : vector<40x128xf32>
    %394 = arith.truncf %393 : vector<40x128xf32> to vector<40x128xbf16>
    %c2_131 = arith.constant 2 : index
    %c0_132 = arith.constant 0 : index
    %c0_133 = arith.constant 0 : index
    %395 = vector.load %arg5[%c2_131, %c0_132, %c0_133] : memref<4x128x32xbf16, #tpu.memory_space<vmem>>, vector<1x128x32xbf16>
    %396 = vector.shape_cast %395 : vector<1x128x32xbf16> to vector<128x32xbf16>
    %cst_134 = arith.constant dense<0.000000e+00> : vector<40x32xf32>
    %397 = tpu.matmul %394, %396, %cst_134 {dimension_numbers = #tpu.dot_dimension_numbers<[1], [0], [0], [1], [0, 0, 1, 1], [], []>} : vector<40x128xbf16>, vector<128x32xbf16>, vector<40x32xf32> -> vector<40x32xf32>
    %c22 = arith.constant 22 : index
    %c0_135 = arith.constant 0 : index
    %398 = vector.load %arg6[%c22, %c0_135] : memref<32x32xf32, #tpu.memory_space<vmem>>, vector<1x32xf32>
    %399 = vector.broadcast %398 : vector<1x32xf32> to vector<40x32xf32>
    %400 = arith.addf %397, %399 : vector<40x32xf32>
    %401 = arith.addf %351, %400 : vector<40x32xf32>
    %cst_136 = arith.constant dense<0.000000e+00> : vector<40xf32>
    %402 = vector.multi_reduction <add>, %401, %cst_136 [1] : vector<40x32xf32> to vector<40xf32>
    %403 = vector.shape_cast %402 : vector<40xf32> to vector<40x1xf32>
    %cst_137 = arith.constant 3.200000e+01 : f32
    %404 = vector.broadcast %cst_137 : f32 to vector<40x1xf32>
    %405 = arith.divf %403, %404 : vector<40x1xf32>
    %406 = vector.broadcast %405 : vector<40x1xf32> to vector<40x32xf32>
    %407 = arith.subf %401, %406 : vector<40x32xf32>
    %408 = arith.mulf %407, %407 : vector<40x32xf32>
    %cst_138 = arith.constant dense<0.000000e+00> : vector<40xf32>
    %409 = vector.multi_reduction <add>, %408, %cst_138 [1] : vector<40x32xf32> to vector<40xf32>
    %410 = vector.shape_cast %409 : vector<40xf32> to vector<40x1xf32>
    %cst_139 = arith.constant 3.200000e+01 : f32
    %411 = vector.broadcast %cst_139 : f32 to vector<40x1xf32>
    %412 = arith.divf %410, %411 : vector<40x1xf32>
    %413 = vector.broadcast %405 : vector<40x1xf32> to vector<40x32xf32>
    %414 = arith.subf %401, %413 : vector<40x32xf32>
    %cst_140 = arith.constant 9.99999997E-7 : f32
    %415 = vector.broadcast %cst_140 : f32 to vector<40x1xf32>
    %416 = arith.addf %412, %415 : vector<40x1xf32>
    %417 = math.rsqrt %416 : vector<40x1xf32>
    %418 = vector.broadcast %417 : vector<40x1xf32> to vector<40x32xf32>
    %419 = arith.mulf %414, %418 : vector<40x32xf32>
    %420 = vector.broadcast %7 : vector<1x32xf32> to vector<40x32xf32>
    %421 = arith.mulf %419, %420 : vector<40x32xf32>
    %422 = vector.broadcast %8 : vector<1x32xf32> to vector<40x32xf32>
    %423 = arith.addf %421, %422 : vector<40x32xf32>
    %c0_141 = arith.constant 0 : index
    %c0_142 = arith.constant 0 : index
    %c0_143 = arith.constant 0 : index
    %424 = vector.load %arg8[%c0_141, %c0_142, %c0_143] : memref<2x40x32xf32, #tpu.memory_space<vmem>>, vector<1x40x32xf32>
    %425 = vector.shape_cast %424 : vector<1x40x32xf32> to vector<40x32xf32>
    %426 = vector.shape_cast %423 : vector<40x32xf32> to vector<1x40x32xf32>
    tpu.vector_store %arg8[%c0_141, %c0_142, %c0_143], %426 {strides = array<i32>} : memref<2x40x32xf32, #tpu.memory_space<vmem>>, vector<1x40x32xf32>,
    %c3 = arith.constant 3 : index
    %c0_144 = arith.constant 0 : index
    %c0_145 = arith.constant 0 : index
    %427 = vector.load %arg4[%c3, %c0_144, %c0_145] : memref<4x32x256xbf16, #tpu.memory_space<vmem>>, vector<1x32x256xbf16>
    %428 = vector.shape_cast %427 : vector<1x32x256xbf16> to vector<32x256xbf16>
    %c7 = arith.constant 7 : index
    %c0_146 = arith.constant 0 : index
    %429 = vector.load %arg7[%c7, %c0_146] : memref<8x128xf32, #tpu.memory_space<vmem>>, vector<1x96xf32>
    %c3_147 = arith.constant 3 : index
    %c0_148 = arith.constant 0 : index
    %430 = vector.load %arg7[%c3_147, %c0_148] : memref<8x128xf32, #tpu.memory_space<vmem>>, vector<1x128xf32>
    %c3_149 = arith.constant 3 : index
    %c0_150 = arith.constant 0 : index
    %431 = vector.load %arg6[%c3_149, %c0_150] : memref<32x32xf32, #tpu.memory_space<vmem>>, vector<1x32xf32>
    %c7_151 = arith.constant 7 : index
    %c0_152 = arith.constant 0 : index
    %432 = vector.load %arg6[%c7_151, %c0_152] : memref<32x32xf32, #tpu.memory_space<vmem>>, vector<1x32xf32>
    %cst_153 = arith.constant dense<0.000000e+00> : vector<40xf32>
    %433 = vector.multi_reduction <add>, %401, %cst_153 [1] : vector<40x32xf32> to vector<40xf32>
    %434 = vector.shape_cast %433 : vector<40xf32> to vector<40x1xf32>
    %cst_154 = arith.constant 3.200000e+01 : f32
    %435 = vector.broadcast %cst_154 : f32 to vector<40x1xf32>
    %436 = arith.divf %434, %435 : vector<40x1xf32>
    %437 = vector.broadcast %436 : vector<40x1xf32> to vector<40x32xf32>
    %438 = arith.subf %401, %437 : vector<40x32xf32>
    %439 = arith.mulf %438, %438 : vector<40x32xf32>
    %cst_155 = arith.constant dense<0.000000e+00> : vector<40xf32>
    %440 = vector.multi_reduction <add>, %439, %cst_155 [1] : vector<40x32xf32> to vector<40xf32>
    %441 = vector.shape_cast %440 : vector<40xf32> to vector<40x1xf32>
    %cst_156 = arith.constant 3.200000e+01 : f32
    %442 = vector.broadcast %cst_156 : f32 to vector<40x1xf32>
    %443 = arith.divf %441, %442 : vector<40x1xf32>
    %444 = vector.broadcast %436 : vector<40x1xf32> to vector<40x32xf32>
    %445 = arith.subf %401, %444 : vector<40x32xf32>
    %cst_157 = arith.constant 9.99999997E-7 : f32
    %446 = vector.broadcast %cst_157 : f32 to vector<40x1xf32>
    %447 = arith.addf %443, %446 : vector<40x1xf32>
    %448 = math.rsqrt %447 : vector<40x1xf32>
    %449 = vector.broadcast %448 : vector<40x1xf32> to vector<40x32xf32>
    %450 = arith.mulf %445, %449 : vector<40x32xf32>
    %451 = vector.broadcast %431 : vector<1x32xf32> to vector<40x32xf32>
    %452 = arith.mulf %450, %451 : vector<40x32xf32>
    %453 = vector.broadcast %432 : vector<1x32xf32> to vector<40x32xf32>
    %454 = arith.addf %452, %453 : vector<40x32xf32>
    %455 = arith.truncf %454 : vector<40x32xf32> to vector<40x32xbf16>
    %456 = vector.extract_strided_slice %428 {offsets = [0, 0], sizes = [32, 96], strides = [1, 1]} : vector<32x256xbf16> to vector<32x96xbf16>
    %cst_158 = arith.constant dense<0.000000e+00> : vector<40x96xf32>
    %457 = tpu.matmul %455, %456, %cst_158 {dimension_numbers = #tpu.dot_dimension_numbers<[1], [0], [0], [1], [0, 0, 1, 1], [], []>} : vector<40x32xbf16>, vector<32x96xbf16>, vector<40x96xf32> -> vector<40x96xf32>
    %458 = vector.broadcast %429 : vector<1x96xf32> to vector<40x96xf32>
    %459 = arith.addf %457, %458 : vector<40x96xf32>
    %460 = vector.extract_strided_slice %459 {offsets = [0, 0], sizes = [40, 16], strides = [1, 1]} : vector<40x96xf32> to vector<40x16xf32>
    %461 = vector.extract_strided_slice %459 {offsets = [0, 32], sizes = [40, 16], strides = [1, 1]} : vector<40x96xf32> to vector<40x16xf32>
    %462 = vector.extract_strided_slice %459 {offsets = [0, 64], sizes = [40, 16], strides = [1, 1]} : vector<40x96xf32> to vector<40x16xf32>
    %463 = arith.truncf %460 : vector<40x16xf32> to vector<40x16xbf16>
    %464 = arith.truncf %461 : vector<40x16xf32> to vector<40x16xbf16>
    %cst_159 = arith.constant dense<0.000000e+00> : vector<40x40xf32>
    %465 = tpu.matmul %463, %464, %cst_159 {dimension_numbers = #tpu.dot_dimension_numbers<[1], [1], [0], [0], [0, 0, 1, 0], [], []>} : vector<40x16xbf16>, vector<40x16xbf16>, vector<40x40xf32> -> vector<40x40xf32>
    %466 = arith.addf %465, %6 : vector<40x40xf32>
    %cst_160 = arith.constant dense<0xFF800000> : vector<40xf32>
    %467 = vector.multi_reduction <maximumf>, %466, %cst_160 [1] : vector<40x40xf32> to vector<40xf32>
    %468 = vector.shape_cast %467 : vector<40xf32> to vector<40x1xf32>
    %469 = vector.broadcast %468 : vector<40x1xf32> to vector<40x40xf32>
    %470 = arith.subf %466, %469 : vector<40x40xf32>
    %471 = math.exp %470 : vector<40x40xf32>
    %cst_161 = arith.constant dense<0.000000e+00> : vector<40xf32>
    %472 = vector.multi_reduction <add>, %471, %cst_161 [1] : vector<40x40xf32> to vector<40xf32>
    %473 = vector.shape_cast %472 : vector<40xf32> to vector<40x1xf32>
    %474 = arith.truncf %471 : vector<40x40xf32> to vector<40x40xbf16>
    %475 = arith.truncf %462 : vector<40x16xf32> to vector<40x16xbf16>
    %cst_162 = arith.constant dense<0.000000e+00> : vector<40x16xf32>
    %476 = tpu.matmul %474, %475, %cst_162 {dimension_numbers = #tpu.dot_dimension_numbers<[1], [0], [0], [1], [0, 0, 1, 1], [], []>} : vector<40x40xbf16>, vector<40x16xbf16>, vector<40x16xf32> -> vector<40x16xf32>
    %477 = tpu.reciprocal %473 {approx = true} : vector<40x1xf32> -> vector<40x1xf32>
    %478 = vector.broadcast %477 : vector<40x1xf32> to vector<40x16xf32>
    %479 = arith.mulf %476, %478 : vector<40x16xf32>
    %480 = vector.extract_strided_slice %459 {offsets = [0, 16], sizes = [40, 16], strides = [1, 1]} : vector<40x96xf32> to vector<40x16xf32>
    %481 = vector.extract_strided_slice %459 {offsets = [0, 48], sizes = [40, 16], strides = [1, 1]} : vector<40x96xf32> to vector<40x16xf32>
    %482 = vector.extract_strided_slice %459 {offsets = [0, 80], sizes = [40, 16], strides = [1, 1]} : vector<40x96xf32> to vector<40x16xf32>
    %483 = arith.truncf %480 : vector<40x16xf32> to vector<40x16xbf16>
    %484 = arith.truncf %481 : vector<40x16xf32> to vector<40x16xbf16>
    %cst_163 = arith.constant dense<0.000000e+00> : vector<40x40xf32>
    %485 = tpu.matmul %483, %484, %cst_163 {dimension_numbers = #tpu.dot_dimension_numbers<[1], [1], [0], [0], [0, 0, 1, 0], [], []>} : vector<40x16xbf16>, vector<40x16xbf16>, vector<40x40xf32> -> vector<40x40xf32>
    %486 = arith.addf %485, %6 : vector<40x40xf32>
    %cst_164 = arith.constant dense<0xFF800000> : vector<40xf32>
    %487 = vector.multi_reduction <maximumf>, %486, %cst_164 [1] : vector<40x40xf32> to vector<40xf32>
    %488 = vector.shape_cast %487 : vector<40xf32> to vector<40x1xf32>
    %489 = vector.broadcast %488 : vector<40x1xf32> to vector<40x40xf32>
    %490 = arith.subf %486, %489 : vector<40x40xf32>
    %491 = math.exp %490 : vector<40x40xf32>
    %cst_165 = arith.constant dense<0.000000e+00> : vector<40xf32>
    %492 = vector.multi_reduction <add>, %491, %cst_165 [1] : vector<40x40xf32> to vector<40xf32>
    %493 = vector.shape_cast %492 : vector<40xf32> to vector<40x1xf32>
    %494 = arith.truncf %491 : vector<40x40xf32> to vector<40x40xbf16>
    %495 = arith.truncf %482 : vector<40x16xf32> to vector<40x16xbf16>
    %cst_166 = arith.constant dense<0.000000e+00> : vector<40x16xf32>
    %496 = tpu.matmul %494, %495, %cst_166 {dimension_numbers = #tpu.dot_dimension_numbers<[1], [0], [0], [1], [0, 0, 1, 1], [], []>} : vector<40x40xbf16>, vector<40x16xbf16>, vector<40x16xf32> -> vector<40x16xf32>
    %497 = tpu.reciprocal %493 {approx = true} : vector<40x1xf32> -> vector<40x1xf32>
    %498 = vector.broadcast %497 : vector<40x1xf32> to vector<40x16xf32>
    %499 = arith.mulf %496, %498 : vector<40x16xf32>
    %500 = tpu.concatenate %479, %499 in 1 : vector<40x16xf32>, vector<40x16xf32> -> vector<40x32xf32>
    %501 = arith.truncf %500 : vector<40x32xf32> to vector<40x32xbf16>
    %502 = vector.extract_strided_slice %428 {offsets = [0, 96], sizes = [32, 32], strides = [1, 1]} : vector<32x256xbf16> to vector<32x32xbf16>
    %cst_167 = arith.constant dense<0.000000e+00> : vector<40x32xf32>
    %503 = tpu.matmul %501, %502, %cst_167 {dimension_numbers = #tpu.dot_dimension_numbers<[1], [0], [0], [1], [0, 0, 1, 1], [], []>} : vector<40x32xbf16>, vector<32x32xbf16>, vector<40x32xf32> -> vector<40x32xf32>
    %504 = arith.addf %401, %503 : vector<40x32xf32>
    %c19 = arith.constant 19 : index
    %c0_168 = arith.constant 0 : index
    %505 = vector.load %arg6[%c19, %c0_168] : memref<32x32xf32, #tpu.memory_space<vmem>>, vector<1x32xf32>
    %506 = vector.broadcast %505 : vector<1x32xf32> to vector<40x32xf32>
    %507 = arith.addf %504, %506 : vector<40x32xf32>
    %c11 = arith.constant 11 : index
    %c0_169 = arith.constant 0 : index
    %508 = vector.load %arg6[%c11, %c0_169] : memref<32x32xf32, #tpu.memory_space<vmem>>, vector<1x32xf32>
    %c15 = arith.constant 15 : index
    %c0_170 = arith.constant 0 : index
    %509 = vector.load %arg6[%c15, %c0_170] : memref<32x32xf32, #tpu.memory_space<vmem>>, vector<1x32xf32>
    %cst_171 = arith.constant dense<0.000000e+00> : vector<40xf32>
    %510 = vector.multi_reduction <add>, %507, %cst_171 [1] : vector<40x32xf32> to vector<40xf32>
    %511 = vector.shape_cast %510 : vector<40xf32> to vector<40x1xf32>
    %cst_172 = arith.constant 3.200000e+01 : f32
    %512 = vector.broadcast %cst_172 : f32 to vector<40x1xf32>
    %513 = arith.divf %511, %512 : vector<40x1xf32>
    %514 = vector.broadcast %513 : vector<40x1xf32> to vector<40x32xf32>
    %515 = arith.subf %507, %514 : vector<40x32xf32>
    %516 = arith.mulf %515, %515 : vector<40x32xf32>
    %cst_173 = arith.constant dense<0.000000e+00> : vector<40xf32>
    %517 = vector.multi_reduction <add>, %516, %cst_173 [1] : vector<40x32xf32> to vector<40xf32>
    %518 = vector.shape_cast %517 : vector<40xf32> to vector<40x1xf32>
    %cst_174 = arith.constant 3.200000e+01 : f32
    %519 = vector.broadcast %cst_174 : f32 to vector<40x1xf32>
    %520 = arith.divf %518, %519 : vector<40x1xf32>
    %521 = vector.broadcast %513 : vector<40x1xf32> to vector<40x32xf32>
    %522 = arith.subf %507, %521 : vector<40x32xf32>
    %cst_175 = arith.constant 9.99999997E-7 : f32
    %523 = vector.broadcast %cst_175 : f32 to vector<40x1xf32>
    %524 = arith.addf %520, %523 : vector<40x1xf32>
    %525 = math.rsqrt %524 : vector<40x1xf32>
    %526 = vector.broadcast %525 : vector<40x1xf32> to vector<40x32xf32>
    %527 = arith.mulf %522, %526 : vector<40x32xf32>
    %528 = vector.broadcast %508 : vector<1x32xf32> to vector<40x32xf32>
    %529 = arith.mulf %527, %528 : vector<40x32xf32>
    %530 = vector.broadcast %509 : vector<1x32xf32> to vector<40x32xf32>
    %531 = arith.addf %529, %530 : vector<40x32xf32>
    %532 = arith.truncf %531 : vector<40x32xf32> to vector<40x32xbf16>
    %533 = vector.extract_strided_slice %428 {offsets = [0, 128], sizes = [32, 128], strides = [1, 1]} : vector<32x256xbf16> to vector<32x128xbf16>
    %cst_176 = arith.constant dense<0.000000e+00> : vector<40x128xf32>
    %534 = tpu.matmul %532, %533, %cst_176 {dimension_numbers = #tpu.dot_dimension_numbers<[1], [0], [0], [1], [0, 0, 1, 1], [], []>} : vector<40x32xbf16>, vector<32x128xbf16>, vector<40x128xf32> -> vector<40x128xf32>
    %535 = vector.broadcast %430 : vector<1x128xf32> to vector<40x128xf32>
    %536 = arith.addf %534, %535 : vector<40x128xf32>
    %cst_177 = arith.constant 5.000000e-01 : f32
    %537 = vector.broadcast %cst_177 : f32 to vector<40x128xf32>
    %538 = arith.mulf %537, %536 : vector<40x128xf32>
    %cst_178 = arith.constant 4.471500e-02 : f32
    %539 = vector.broadcast %cst_178 : f32 to vector<40x128xf32>
    %540 = arith.mulf %539, %536 : vector<40x128xf32>
    %541 = arith.mulf %540, %536 : vector<40x128xf32>
    %542 = arith.mulf %541, %536 : vector<40x128xf32>
    %543 = arith.addf %536, %542 : vector<40x128xf32>
    %cst_179 = arith.constant 0.797884583 : f32
    %544 = vector.broadcast %cst_179 : f32 to vector<40x128xf32>
    %545 = arith.mulf %544, %543 : vector<40x128xf32>
    %546 = math.tanh %545 : vector<40x128xf32>
    %cst_180 = arith.constant 1.000000e+00 : f32
    %547 = vector.broadcast %cst_180 : f32 to vector<40x128xf32>
    %548 = arith.addf %547, %546 : vector<40x128xf32>
    %549 = arith.mulf %538, %548 : vector<40x128xf32>
    %550 = arith.truncf %549 : vector<40x128xf32> to vector<40x128xbf16>
    %c3_181 = arith.constant 3 : index
    %c0_182 = arith.constant 0 : index
    %c0_183 = arith.constant 0 : index
    %551 = vector.load %arg5[%c3_181, %c0_182, %c0_183] : memref<4x128x32xbf16, #tpu.memory_space<vmem>>, vector<1x128x32xbf16>
    %552 = vector.shape_cast %551 : vector<1x128x32xbf16> to vector<128x32xbf16>
    %cst_184 = arith.constant dense<0.000000e+00> : vector<40x32xf32>
    %553 = tpu.matmul %550, %552, %cst_184 {dimension_numbers = #tpu.dot_dimension_numbers<[1], [0], [0], [1], [0, 0, 1, 1], [], []>} : vector<40x128xbf16>, vector<128x32xbf16>, vector<40x32xf32> -> vector<40x32xf32>
    %c23 = arith.constant 23 : index
    %c0_185 = arith.constant 0 : index
    %554 = vector.load %arg6[%c23, %c0_185] : memref<32x32xf32, #tpu.memory_space<vmem>>, vector<1x32xf32>
    %555 = vector.broadcast %554 : vector<1x32xf32> to vector<40x32xf32>
    %556 = arith.addf %553, %555 : vector<40x32xf32>
    %557 = arith.addf %507, %556 : vector<40x32xf32>
    %cst_186 = arith.constant dense<0.000000e+00> : vector<40xf32>
    %558 = vector.multi_reduction <add>, %557, %cst_186 [1] : vector<40x32xf32> to vector<40xf32>
    %559 = vector.shape_cast %558 : vector<40xf32> to vector<40x1xf32>
    %cst_187 = arith.constant 3.200000e+01 : f32
    %560 = vector.broadcast %cst_187 : f32 to vector<40x1xf32>
    %561 = arith.divf %559, %560 : vector<40x1xf32>
    %562 = vector.broadcast %561 : vector<40x1xf32> to vector<40x32xf32>
    %563 = arith.subf %557, %562 : vector<40x32xf32>
    %564 = arith.mulf %563, %563 : vector<40x32xf32>
    %cst_188 = arith.constant dense<0.000000e+00> : vector<40xf32>
    %565 = vector.multi_reduction <add>, %564, %cst_188 [1] : vector<40x32xf32> to vector<40xf32>
    %566 = vector.shape_cast %565 : vector<40xf32> to vector<40x1xf32>
    %cst_189 = arith.constant 3.200000e+01 : f32
    %567 = vector.broadcast %cst_189 : f32 to vector<40x1xf32>
    %568 = arith.divf %566, %567 : vector<40x1xf32>
    %569 = vector.broadcast %561 : vector<40x1xf32> to vector<40x32xf32>
    %570 = arith.subf %557, %569 : vector<40x32xf32>
    %cst_190 = arith.constant 9.99999997E-7 : f32
    %571 = vector.broadcast %cst_190 : f32 to vector<40x1xf32>
    %572 = arith.addf %568, %571 : vector<40x1xf32>
    %573 = math.rsqrt %572 : vector<40x1xf32>
    %574 = vector.broadcast %573 : vector<40x1xf32> to vector<40x32xf32>
    %575 = arith.mulf %570, %574 : vector<40x32xf32>
    %576 = vector.broadcast %7 : vector<1x32xf32> to vector<40x32xf32>
    %577 = arith.mulf %575, %576 : vector<40x32xf32>
    %578 = vector.broadcast %8 : vector<1x32xf32> to vector<40x32xf32>
    %579 = arith.addf %577, %578 : vector<40x32xf32>
    %c1_191 = arith.constant 1 : index
    %c0_192 = arith.constant 0 : index
    %c0_193 = arith.constant 0 : index
    %580 = vector.load %arg8[%c1_191, %c0_192, %c0_193] : memref<2x40x32xf32, #tpu.memory_space<vmem>>, vector<1x40x32xf32>
    %581 = vector.shape_cast %580 : vector<1x40x32xf32> to vector<40x32xf32>
    %582 = vector.shape_cast %579 : vector<40x32xf32> to vector<1x40x32xf32>
    tpu.vector_store %arg8[%c1_191, %c0_192, %c0_193], %582 {strides = array<i32>} : memref<2x40x32xf32, #tpu.memory_space<vmem>>, vector<1x40x32xf32>,
    return
  }
}

</mosaic_0001>

<llo_original>
// kernel: _fused_forward.1
$region0: #{_fused_forward.1}
  #allocation0 [shape = 'u32[]', space=smem, size = 0x4, offset = 0x4, fixed_abs, tag = 'smem constant byte address 0x4 - core index']
  #allocation1 [shape = 'u32[144,128]{1,0:T(1,128)}', space=vmem, size = 0x12000, scoped, tag = 'internal scratch']
  %s0 = inlined_call_operand.vmem [shape: f32[40,48], index: 0, kind: input, shape index: {}]
  %s1 = inlined_call_operand.vmem [shape: bf16[48,32], index: 1, kind: input, shape index: {}]
  %s2 = inlined_call_operand.vmem [shape: f32[40,32], index: 2, kind: input, shape index: {}]
  %s3 = inlined_call_operand.vmem [shape: f32[40,40], index: 3, kind: input, shape index: {}]
  %s4 = inlined_call_operand.vmem [shape: bf16[4,32,256], index: 4, kind: input, shape index: {}]
  %s5 = inlined_call_operand.vmem [shape: bf16[4,128,32], index: 5, kind: input, shape index: {}]
  %s6 = inlined_call_operand.vmem [shape: f32[32,32], index: 6, kind: input, shape index: {}]
  %s7 = inlined_call_operand.vmem [shape: f32[8,128], index: 7, kind: input, shape index: {}]
  %s8 = inlined_call_operand.vmem [shape: f32[2,40,32], index: 8, kind: output, shape index: {}]
  %s9 = sld [smem:[#allocation0]]
  $region42: #{_fused_forward.1} parent=0
    _
  %s11 = ssub.s32 1, %s9
  %s12 = scalar_select 0, %s11, %s9
  // Predicated region
  $region2: #{_fused_forward.1} parent=0 // pred_check
    _
  $region3: #{_fused_forward.1} parent=0 // pred_check_branch
    %14 = sbr.rel (0) target = $region5
  $region4: #{_fused_forward.1} parent=0 // pred_region
    _
  $region5: #{_fused_forward.1} parent=0 // pred_fallthru
    _
  // Predicated region
  $region6: #{_fused_forward.1} parent=0 // pred_check
    _
  $region7: #{_fused_forward.1} parent=0 // pred_check_branch
    %16 = sbr.rel (0) target = $region9
  $region8: #{_fused_forward.1} parent=0 // pred_region
    _
  $region9: #{_fused_forward.1} parent=0 // pred_fallthru
    _
  // Predicated region
  $region10: #{_fused_forward.1} parent=0 // pred_check
    _
  $region11: #{_fused_forward.1} parent=0 // pred_check_branch
    %18 = sbr.rel (0) target = $region13
  $region12: #{_fused_forward.1} parent=0 // pred_region
    _
  $region13: #{_fused_forward.1} parent=0 // pred_fallthru
    _
  // Predicated region
  $region14: #{_fused_forward.1} parent=0 // pred_check
    _
  $region15: #{_fused_forward.1} parent=0 // pred_check_branch
    %20 = sbr.rel (0) target = $region17
  $region16: #{_fused_forward.1} parent=0 // pred_region
    _
  $region17: #{_fused_forward.1} parent=0 // pred_fallthru
    _
  // Predicated region
  $region18: #{_fused_forward.1} parent=0 // pred_check
    _
  $region19: #{_fused_forward.1} parent=0 // pred_check_branch
    %22 = sbr.rel (0) target = $region21
  $region20: #{_fused_forward.1} parent=0 // pred_region
    _
  $region21: #{_fused_forward.1} parent=0 // pred_fallthru
    _
  // Predicated region
  $region22: #{_fused_forward.1} parent=0 // pred_check
    _
  $region23: #{_fused_forward.1} parent=0 // pred_check_branch
    %24 = sbr.rel (0) target = $region25
  $region24: #{_fused_forward.1} parent=0 // pred_region
    _
  $region25: #{_fused_forward.1} parent=0 // pred_fallthru
    _
  // Predicated region
  $region26: #{_fused_forward.1} parent=0 // pred_check
    _
  $region27: #{_fused_forward.1} parent=0 // pred_check_branch
    %26 = sbr.rel (0) target = $region29
  $region28: #{_fused_forward.1} parent=0 // pred_region
    _
  $region29: #{_fused_forward.1} parent=0 // pred_fallthru
    _
  // Predicated region
  $region30: #{_fused_forward.1} parent=0 // pred_check
    _
  $region31: #{_fused_forward.1} parent=0 // pred_check_branch
    %28 = sbr.rel (0) target = $region33
  $region32: #{_fused_forward.1} parent=0 // pred_region
    _
  $region33: #{_fused_forward.1} parent=0 // pred_fallthru
    _
  %v30 = vld [vmem:[%s0] sm:$0xff]
  %v31 = vld [vmem:[%s0 + $0x8] sm:$0xff]
  %v32 = vld [vmem:[%s0 + $0x10] sm:$0xff]
  %v33 = vld [vmem:[%s0 + $0x18] sm:$0xff]
  %v34 = vld [vmem:[%s0 + $0x20] sm:$0xff]
  %v35 = vpack.c.bf16 %v31, %v30
  %v36 = vpack.c.bf16 %v33, %v32
  %v37 = vpack.c.bf16 %v34, %v34
  %v38 = vld [vmem:[%s1] sm:$0xf]
  %v39 = vld [vmem:[%s1 + $0x4] sm:$0xf]
  %v40 = vld [vmem:[%s1 + $0x8] sm:$0xf]
  %v41 = vld [vmem:[%s1 + $0xc] sm:$0xf]
  %v42 = vld [vmem:[%s1 + $0x10] sm:$0xf]
  %v43 = vld [vmem:[%s1 + $0x14] sm:$0xf]
  %v44 = vld [vmem:[%s2] sm:$0xff]
  %v45 = vld [vmem:[%s2 + $0x8] sm:$0xff]
  %v46 = vld [vmem:[%s2 + $0x10] sm:$0xff]
  %v47 = vld [vmem:[%s2 + $0x18] sm:$0xff]
  %v48 = vld [vmem:[%s2 + $0x20] sm:$0xff]
  %v55 = vunpack.c.l.b16 %v38
  %v56 = vunpack.c.l.b16 %v39
  %v57 = vunpack.c.l.b16 %v40
  %v58 = vunpack.c.l.b16 %v41
  %v59 = vunpack.c.l.b16 %v42
  %v60 = vunpack.c.l.b16 %v43
  %v61 = vpack.c.b16 %v56, %v55
  %v62 = vpack.c.b16 %v58, %v57
  %v63 = vpack.c.b16 %v60, %v59
  %vm67 = vcmask 392192
  %v69 = vsel %vm67, %v35, 0
  %v72 = vsel %vm67, %v36, 0
  %v75 = vsel %vm67, %v37, 0
  %77 = vmatprep.subr.bf16.mxu0 0
  %78 = vmatpush1.bf16.msra.mxu0 0
  %79 = vmatprep.subr.bf16.mxu0 0
  %80 = vmatpush1.bf16.msra.mxu0 0
  %81 = vmatprep.subr.bf16.mxu0 0
  %82 = vmatpush1.bf16.msra.mxu0 0
  %83 = vmatprep.subr.bf16.mxu0 0
  %84 = vmatpush1.bf16.msra.mxu0 0
  %85 = vmatprep.subr.bf16.mxu0 0
  %86 = vmatpush1.bf16.msra.mxu0 0
  %87 = vmatprep.subr.bf16.mxu0 0
  %88 = vmatpush1.bf16.msra.mxu0 %v63
  %89 = vmatprep.subr.bf16.mxu0 0
  %90 = vmatpush1.bf16.msra.mxu0 %v62
  %91 = vmatprep.subr.bf16.mxu0 0
  %92 = vmatpush1.bf16.msra.mxu0 %v61
  %93 = vmatprep.subr.bf16.mxu0 0
  %94 = vmatpush2.bf16.msra.mxu0 0
  %95 = vmatprep.subr.bf16.mxu0 0
  %96 = vmatpush2.bf16.msra.mxu0 0
  %97 = vmatprep.subr.bf16.mxu0 0
  %98 = vmatpush2.bf16.msra.mxu0 0
  %99 = vmatprep.subr.bf16.mxu0 0
  %100 = vmatpush2.bf16.msra.mxu0 0
  %101 = vmatprep.subr.bf16.mxu0 0
  %102 = vmatpush2.bf16.msra.mxu0 0
  %103 = vmatprep.subr.bf16.mxu0 0
  %104 = vmatpush2.bf16.msra.mxu0 0
  %105 = vmatprep.subr.bf16.mxu0 0
  %106 = vmatpush2.bf16.msra.mxu0 0
  %107 = vmatprep.subr.bf16.mxu0 0
  %108 = vmatpush2.bf16.msra.mxu0 0
  %109 = vmatprep.mubr.bf16.mxu0 0
  %110 = vmatmul.mubr.bf16.gmra.mxu0 %v69
  %v111 = vpop.f32.mrf.mxu0
  %v112 = vadd.f32 %v44, %v111
  %v113 = vpop.f32.mrf.mxu0
  %v114 = vpop.f32.mrf.mxu0
  %v115 = vadd.f32 %v45, %v114
  %v116 = vpop.f32.mrf.mxu0
  %117 = vmatprep.mubr.bf16.mxu0 0
  %118 = vmatmul.mubr.bf16.gmra.mxu0 %v72
  %v119 = vpop.f32.mrf.mxu0
  %v120 = vadd.f32 %v46, %v119
  %v121 = vpop.f32.mrf.mxu0
  %v122 = vpop.f32.mrf.mxu0
  %v123 = vadd.f32 %v47, %v122
  %v124 = vpop.f32.mrf.mxu0
  %125 = vmatprep.mubr.bf16.mxu0 0
  %126 = vmatmul.mubr.bf16.gmra.mxu0 %v75
  %v127 = vpop.f32.mrf.mxu0
  %v128 = vadd.f32 %v48, %v127
  %v129 = vpop.f32.mrf.mxu0
  %v130 = vpop.f32.mrf.mxu0
  %v131 = vpop.f32.mrf.mxu0
  %132 = vdwg.mxu0
  %v133 = vld [vmem:[%s3] sm:$0xff]
  %v134 = vld [vmem:[%s3 + $0x8] sm:$0xff]
  %v135 = vld [vmem:[%s3 + $0x10] sm:$0xff]
  %v136 = vld [vmem:[%s3 + $0x18] sm:$0xff]
  %v137 = vld [vmem:[%s3 + $0x20] sm:$0xff]
  %v138 = vld [vmem:[%s6 + $0x18] sm:$0x1]
  %v139 = vld [vmem:[%s6 + $0x19] sm:$0x1]
  %v140 = vld [vmem:[%s4] sm:$0xff]
  %v141 = vld [vmem:[%s4 + $0x8] sm:$0xff]
  %v142 = vld [vmem:[%s4 + $0x10] sm:$0xff]
  %v143 = vld [vmem:[%s4 + $0x18] sm:$0xff]
  %v144 = vld [vmem:[%s7 + $0x4] sm:$0x1]
  %v145 = vld [vmem:[%s7] sm:$0x1]
  %v146 = vld [vmem:[%s6] sm:$0x1]
  %v147 = vld [vmem:[%s6 + $0x4] sm:$0x1]
  %vm148 = vcmask 261120
  %v149 = vsel %vm148, %v112, 0.0
  %150 = vadd.xlane.f32.xlu0 %v149
  %v151 = vpop.xlane.xlu0 %150
  %v152 = vsel %vm148, %v115, 0.0
  %153 = vadd.xlane.f32.xlu0 %v152
  %v154 = vpop.xlane.xlu0 %153
  %v155 = vsel %vm148, %v120, 0.0
  %156 = vadd.xlane.f32.xlu0 %v155
  %v157 = vpop.xlane.xlu0 %156
  %v158 = vsel %vm148, %v123, 0.0
  %159 = vadd.xlane.f32.xlu0 %v158
  %v160 = vpop.xlane.xlu0 %159
  %v161 = vsel %vm148, %v128, 0.0
  %162 = vadd.xlane.f32.xlu0 %v161
  %v163 = vpop.xlane.xlu0 %162
  %v164 = vrcp.pop 32.0
  %v165 = vmul.f32 %v151, %v164
  %v166 = vmul.f32 %v154, %v164
  %v167 = vmul.f32 %v157, %v164
  %v168 = vmul.f32 %v160, %v164
  %v169 = vmul.f32 %v163, %v164
  %v170 = vsub.f32 %v112, %v165
  %v171 = vsub.f32 %v115, %v166
  %v172 = vsub.f32 %v120, %v167
  %v173 = vsub.f32 %v123, %v168
  %v174 = vsub.f32 %v128, %v169
  %v175 = vmul.f32 %v170, %v170
  %v176 = vmul.f32 %v171, %v171
  %v177 = vmul.f32 %v172, %v172
  %v178 = vmul.f32 %v173, %v173
  %v179 = vmul.f32 %v174, %v174
  %v180 = vsel %vm148, %v175, 0.0
  %181 = vadd.xlane.f32.xlu0 %v180
  %v182 = vpop.xlane.xlu0 %181
  %v183 = vsel %vm148, %v176, 0.0
  %184 = vadd.xlane.f32.xlu0 %v183
  %v185 = vpop.xlane.xlu0 %184
  %v186 = vsel %vm148, %v177, 0.0
  %187 = vadd.xlane.f32.xlu0 %v186
  %v188 = vpop.xlane.xlu0 %187
  %v189 = vsel %vm148, %v178, 0.0
  %190 = vadd.xlane.f32.xlu0 %v189
  %v191 = vpop.xlane.xlu0 %190
  %v192 = vsel %vm148, %v179, 0.0
  %193 = vadd.xlane.f32.xlu0 %v192
  %v194 = vpop.xlane.xlu0 %193
  %v195 = vmul.f32 %v182, %v164
  %v196 = vmul.f32 %v185, %v164
  %v197 = vmul.f32 %v188, %v164
  %v198 = vmul.f32 %v191, %v164
  %v199 = vmul.f32 %v194, %v164
  %v200 = vadd.f32 %v195, 1e-06
  %v201 = vadd.f32 %v196, 1e-06
  %v202 = vadd.f32 %v197, 1e-06
  %v203 = vadd.f32 %v198, 1e-06
  %v204 = vadd.f32 %v199, 1e-06
  %v205 = vrsqrt.pop %v200
  %v206 = vrsqrt.pop %v201
  %v207 = vrsqrt.pop %v202
  %v208 = vrsqrt.pop %v203
  %v209 = vrsqrt.pop %v204
  %v210 = vmul.f32 %v170, %v205
  %v211 = vmul.f32 %v171, %v206
  %v212 = vmul.f32 %v172, %v207
  %v213 = vmul.f32 %v173, %v208
  %v214 = vmul.f32 %v174, %v209
  %v215 = vlaneseq
  %v216 = vshrl.u32 %v215, 7
  %v217 = vsub.s32 0, %v216
  %v218 = vrot.slane %v146, %v217
  %v219 = vmul.f32 %v210, %v218
  %v220 = vmul.f32 %v211, %v218
  %v221 = vmul.f32 %v212, %v218
  %v222 = vmul.f32 %v213, %v218
  %v223 = vmul.f32 %v214, %v218
  %v224 = vlaneseq
  %v225 = vshrl.u32 %v224, 7
  %v226 = vsub.s32 0, %v225
  %v227 = vrot.slane %v147, %v226
  %v228 = vadd.f32 %v219, %v227
  %v229 = vadd.f32 %v220, %v227
  %v230 = vadd.f32 %v221, %v227
  %v231 = vadd.f32 %v222, %v227
  %v232 = vadd.f32 %v223, %v227
  %v233 = vpack.c.bf16 %v229, %v228
  %v234 = vpack.c.bf16 %v231, %v230
  %v235 = vpack.c.bf16 %v232, %v232
  %v236 = vlaneseq
  %v237 = vshrl.u32 %v236, 7
  %v238 = vsub.s32 0, %v237
  %v239 = vrot.slane %v144, %v238
  %v244 = vunpack.c.l.b16 %v140
  %v245 = vunpack.c.l.b16 %v141
  %v246 = vunpack.c.l.b16 %v142
  %v247 = vunpack.c.l.b16 %v143
  %v248 = vpack.c.b16 %v245, %v244
  %v249 = vpack.c.b16 %v247, %v246
  %v253 = vsel %vm148, %v233, 0
  %v256 = vsel %vm148, %v234, 0
  %v259 = vsel %vm148, %v235, 0
  %261 = vmatprep.subr.bf16.mxu0 0
  %262 = vmatpush1.bf16.msra.mxu0 0
  %263 = vmatprep.subr.bf16.mxu0 0
  %264 = vmatpush1.bf16.msra.mxu0 0
  %265 = vmatprep.subr.bf16.mxu0 0
  %266 = vmatpush1.bf16.msra.mxu0 0
  %267 = vmatprep.subr.bf16.mxu0 0
  %268 = vmatpush1.bf16.msra.mxu0 0
  %269 = vmatprep.subr.bf16.mxu0 0
  %270 = vmatpush1.bf16.msra.mxu0 0
  %271 = vmatprep.subr.bf16.mxu0 0
  %272 = vmatpush1.bf16.msra.mxu0 0
  %273 = vmatprep.subr.bf16.mxu0 0
  %274 = vmatpush1.bf16.msra.mxu0 %v249
  %275 = vmatprep.subr.bf16.mxu0 0
  %276 = vmatpush1.bf16.msra.mxu0 %v248
  %277 = vmatprep.subr.bf16.mxu0 0
  %278 = vmatpush2.bf16.msra.mxu0 0
  %279 = vmatprep.subr.bf16.mxu0 0
  %280 = vmatpush2.bf16.msra.mxu0 0
  %281 = vmatprep.subr.bf16.mxu0 0
  %282 = vmatpush2.bf16.msra.mxu0 0
  %283 = vmatprep.subr.bf16.mxu0 0
  %284 = vmatpush2.bf16.msra.mxu0 0
  %285 = vmatprep.subr.bf16.mxu0 0
  %286 = vmatpush2.bf16.msra.mxu0 0
  %287 = vmatprep.subr.bf16.mxu0 0
  %288 = vmatpush2.bf16.msra.mxu0 0
  %289 = vmatprep.subr.bf16.mxu0 0
  %290 = vmatpush2.bf16.msra.mxu0 0
  %291 = vmatprep.subr.bf16.mxu0 0
  %292 = vmatpush2.bf16.msra.mxu0 0
  %293 = vmatprep.mubr.bf16.mxu0 0
  %294 = vmatmul.mubr.bf16.gmra.mxu0 %v253
  %v295 = vpop.f32.mrf.mxu0
  %v296 = vadd.f32 %v239, %v295
  %v297 = vpop.f32.mrf.mxu0
  %v298 = vpop.f32.mrf.mxu0
  %v299 = vadd.f32 %v239, %v298
  %v300 = vpop.f32.mrf.mxu0
  %301 = vmatprep.mubr.bf16.mxu0 0
  %302 = vmatmul.mubr.bf16.gmra.mxu0 %v256
  %v303 = vpop.f32.mrf.mxu0
  %v304 = vadd.f32 %v239, %v303
  %v305 = vpop.f32.mrf.mxu0
  %v306 = vpop.f32.mrf.mxu0
  %v307 = vadd.f32 %v239, %v306
  %v308 = vpop.f32.mrf.mxu0
  %309 = vmatprep.mubr.bf16.mxu0 0
  %310 = vmatmul.mubr.bf16.gmra.mxu0 %v259
  %v311 = vpop.f32.mrf.mxu0
  %v312 = vadd.f32 %v239, %v311
  %v313 = vpop.f32.mrf.mxu0
  %v314 = vpop.f32.mrf.mxu0
  %v315 = vpop.f32.mrf.mxu0
  %316 = vdwg.mxu0
  %v317 = vpack.c.bf16 %v299, %v296
  %v318 = vpack.c.bf16 %v307, %v304
  %v319 = vpack.c.bf16 %v312, %v312
  %323 = vrot.lane.b32.xlu0 %v317, 96
  %v324 = vpop.permute.xlu0 %323
  %325 = vrot.lane.b32.xlu0 %v318, 96
  %v326 = vpop.permute.xlu0 %325
  %327 = vrot.lane.b32.xlu0 %v319, 96
  %v328 = vpop.permute.xlu0 %327
  %vm329 = vcmask 130048
  %v331 = vsel %vm329, %v317, 0
  %v334 = vsel %vm329, %v318, 0
  %v337 = vsel %vm329, %v319, 0
  %v340 = vsel %vm329, %v324, 0
  %v343 = vsel %vm329, %v326, 0
  %v346 = vsel %vm329, %v328, 0
  %348 = vmatprep.subr.bf16.mxu0 0
  %349 = vmatpush1.bf16.xpose.msra.mxu0 0
  %350 = vmatprep.subr.bf16.mxu0 0
  %351 = vmatpush1.bf16.xpose.msra.mxu0 0
  %352 = vmatprep.subr.bf16.mxu0 0
  %353 = vmatpush1.bf16.xpose.msra.mxu0 0
  %354 = vmatprep.subr.bf16.mxu0 0
  %355 = vmatpush1.bf16.xpose.msra.mxu0 0
  %356 = vmatprep.subr.bf16.mxu0 0
  %357 = vmatpush1.bf16.xpose.msra.mxu0 0
  %358 = vmatprep.subr.bf16.mxu0 0
  %359 = vmatpush1.bf16.xpose.msra.mxu0 %v346
  %360 = vmatprep.subr.bf16.mxu0 0
  %361 = vmatpush1.bf16.xpose.msra.mxu0 %v343
  %362 = vmatprep.subr.bf16.mxu0 0
  %363 = vmatpush1.bf16.xpose.msra.mxu0 %v340
  %364 = vmatprep.subr.bf16.mxu0 0
  %365 = vmatpush2.bf16.xpose.msra.mxu0 0
  %366 = vmatprep.subr.bf16.mxu0 0
  %367 = vmatpush2.bf16.xpose.msra.mxu0 0
  %368 = vmatprep.subr.bf16.mxu0 0
  %369 = vmatpush2.bf16.xpose.msra.mxu0 0
  %370 = vmatprep.subr.bf16.mxu0 0
  %371 = vmatpush2.bf16.xpose.msra.mxu0 0
  %372 = vmatprep.subr.bf16.mxu0 0
  %373 = vmatpush2.bf16.xpose.msra.mxu0 0
  %374 = vmatprep.subr.bf16.mxu0 0
  %375 = vmatpush2.bf16.xpose.msra.mxu0 0
  %376 = vmatprep.subr.bf16.mxu0 0
  %377 = vmatpush2.bf16.xpose.msra.mxu0 0
  %378 = vmatprep.subr.bf16.mxu0 0
  %379 = vmatpush2.bf16.xpose.msra.mxu0 0
  %380 = vmatprep.mubr.bf16.mxu0 0
  %381 = vmatmul.mubr.bf16.gmra.mxu0 %v331
  %v382 = vpop.f32.mrf.mxu0
  %v383 = vadd.f32 %v133, %v382
  %v384 = vpop.f32.mrf.mxu0
  %v385 = vpop.f32.mrf.mxu0
  %v386 = vadd.f32 %v134, %v385
  %v387 = vpop.f32.mrf.mxu0
  %388 = vmatprep.mubr.bf16.mxu0 0
  %389 = vmatmul.mubr.bf16.gmra.mxu0 %v334
  %v390 = vpop.f32.mrf.mxu0
  %v391 = vadd.f32 %v135, %v390
  %v392 = vpop.f32.mrf.mxu0
  %v393 = vpop.f32.mrf.mxu0
  %v394 = vadd.f32 %v136, %v393
  %v395 = vpop.f32.mrf.mxu0
  %396 = vmatprep.mubr.bf16.mxu0 0
  %397 = vmatmul.mubr.bf16.gmra.mxu0 %v337
  %v398 = vpop.f32.mrf.mxu0
  %v399 = vadd.f32 %v137, %v398
  %v400 = vpop.f32.mrf.mxu0
  %v401 = vpop.f32.mrf.mxu0
  %v402 = vpop.f32.mrf.mxu0
  %403 = vdwg.mxu0
  %vm404 = vcmask 326656
  %v405 = vsel %vm404, %v383, -inf
  %406 = vmax.xlane.f32.xlu0 %v405
  %v407 = vpop.xlane.xlu0 %406
  %v408 = vsel %vm404, %v386, -inf
  %409 = vmax.xlane.f32.xlu0 %v408
  %v410 = vpop.xlane.xlu0 %409
  %v411 = vsel %vm404, %v391, -inf
  %412 = vmax.xlane.f32.xlu0 %v411
  %v413 = vpop.xlane.xlu0 %412
  %v414 = vsel %vm404, %v394, -inf
  %415 = vmax.xlane.f32.xlu0 %v414
  %v416 = vpop.xlane.xlu0 %415
  %v417 = vsel %vm404, %v399, -inf
  %418 = vmax.xlane.f32.xlu0 %v417
  %v419 = vpop.xlane.xlu0 %418
  %v420 = vsub.f32 %v383, %v407
  %v421 = vsub.f32 %v386, %v410
  %v422 = vsub.f32 %v391, %v413
  %v423 = vsub.f32 %v394, %v416
  %v424 = vsub.f32 %v399, %v419
  %v425 = vmul.f32 %v420, 1.442695
  %v426 = vpow.pop %v425
  %v427 = vmul.f32 %v421, 1.442695
  %v428 = vpow.pop %v427
  %v429 = vmul.f32 %v422, 1.442695
  %v430 = vpow.pop %v429
  %v431 = vmul.f32 %v423, 1.442695
  %v432 = vpow.pop %v431
  %v433 = vmul.f32 %v424, 1.442695
  %v434 = vpow.pop %v433
  %v435 = vsel %vm404, %v426, 0.0
  %436 = vadd.xlane.f32.xlu0 %v435
  %v437 = vpop.xlane.xlu0 %436
  %v438 = vsel %vm404, %v428, 0.0
  %439 = vadd.xlane.f32.xlu0 %v438
  %v440 = vpop.xlane.xlu0 %439
  %v441 = vsel %vm404, %v430, 0.0
  %442 = vadd.xlane.f32.xlu0 %v441
  %v443 = vpop.xlane.xlu0 %442
  %v444 = vsel %vm404, %v432, 0.0
  %445 = vadd.xlane.f32.xlu0 %v444
  %v446 = vpop.xlane.xlu0 %445
  %v447 = vsel %vm404, %v434, 0.0
  %448 = vadd.xlane.f32.xlu0 %v447
  %v449 = vpop.xlane.xlu0 %448
  %v450 = vpack.c.bf16 %v428, %v426
  %v451 = vpack.c.bf16 %v432, %v430
  %v452 = vpack.c.bf16 %v434, %v434
  %453 = vrot.lane.b32.xlu0 %v317, 64
  %v454 = vpop.permute.xlu0 %453
  %455 = vrot.lane.b32.xlu0 %v318, 64
  %v456 = vpop.permute.xlu0 %455
  %457 = vrot.lane.b32.xlu0 %v319, 64
  %v458 = vpop.permute.xlu0 %457
  %v462 = vsel %vm404, %v450, 0
  %v465 = vsel %vm404, %v451, 0
  %v468 = vsel %vm404, %v452, 0
  %vm470 = vcmask 1043456
  %v472 = vsel %vm470, %v458, 0
  %474 = vmatprep.subr.bf16.mxu0 0
  %475 = vmatpush1.bf16.msra.mxu0 0
  %476 = vmatprep.subr.bf16.mxu0 0
  %477 = vmatpush1.bf16.msra.mxu0 0
  %478 = vmatprep.subr.bf16.mxu0 0
  %479 = vmatpush1.bf16.msra.mxu0 0
  %480 = vmatprep.subr.bf16.mxu0 0
  %481 = vmatpush1.bf16.msra.mxu0 0
  %482 = vmatprep.subr.bf16.mxu0 0
  %483 = vmatpush1.bf16.msra.mxu0 0
  %484 = vmatprep.subr.bf16.mxu0 0
  %485 = vmatpush1.bf16.msra.mxu0 %v472
  %486 = vmatprep.subr.bf16.mxu0 0
  %487 = vmatpush1.bf16.msra.mxu0 %v456
  %488 = vmatprep.subr.bf16.mxu0 0
  %489 = vmatpush1.bf16.msra.mxu0 %v454
  %490 = vmatprep.subr.bf16.mxu0 0
  %491 = vmatpush2.bf16.msra.mxu0 0
  %492 = vmatprep.subr.bf16.mxu0 0
  %493 = vmatpush2.bf16.msra.mxu0 0
  %494 = vmatprep.subr.bf16.mxu0 0
  %495 = vmatpush2.bf16.msra.mxu0 0
  %496 = vmatprep.subr.bf16.mxu0 0
  %497 = vmatpush2.bf16.msra.mxu0 0
  %498 = vmatprep.subr.bf16.mxu0 0
  %499 = vmatpush2.bf16.msra.mxu0 0
  %500 = vmatprep.subr.bf16.mxu0 0
  %501 = vmatpush2.bf16.msra.mxu0 0
  %502 = vmatprep.subr.bf16.mxu0 0
  %503 = vmatpush2.bf16.msra.mxu0 0
  %504 = vmatprep.subr.bf16.mxu0 0
  %505 = vmatpush2.bf16.msra.mxu0 0
  %506 = vmatprep.mubr.bf16.mxu0 0
  %507 = vmatmul.mubr.bf16.gmra.mxu0 %v462
  %v508 = vpop.f32.mrf.mxu0
  %v509 = vadd.f32 0.0, %v508
  %v510 = vpop.f32.mrf.mxu0
  %v511 = vpop.f32.mrf.mxu0
  %v512 = vadd.f32 0.0, %v511
  %v513 = vpop.f32.mrf.mxu0
  %514 = vmatprep.mubr.bf16.mxu0 0
  %515 = vmatmul.mubr.bf16.gmra.mxu0 %v465
  %v516 = vpop.f32.mrf.mxu0
  %v517 = vadd.f32 0.0, %v516
  %v518 = vpop.f32.mrf.mxu0
  %v519 = vpop.f32.mrf.mxu0
  %v520 = vadd.f32 0.0, %v519
  %v521 = vpop.f32.mrf.mxu0
  %522 = vmatprep.mubr.bf16.mxu0 0
  %523 = vmatmul.mubr.bf16.gmra.mxu0 %v468
  %v524 = vpop.f32.mrf.mxu0
  %v525 = vadd.f32 0.0, %v524
  %v526 = vpop.f32.mrf.mxu0
  %v527 = vpop.f32.mrf.mxu0
  %v528 = vpop.f32.mrf.mxu0
  %529 = vdwg.mxu0
  %v530 = vrcp.pop %v437
  %v531 = vrcp.pop %v440
  %v532 = vrcp.pop %v443
  %v533 = vrcp.pop %v446
  %v534 = vrcp.pop %v449
  %v535 = vmul.f32 %v509, %v530
  %v536 = vmul.f32 %v512, %v531
  %v537 = vmul.f32 %v517, %v532
  %v538 = vmul.f32 %v520, %v533
  %v539 = vmul.f32 %v525, %v534
  %540 = vrot.lane.b32.xlu0 %v317, 112
  %v541 = vpop.permute.xlu0 %540
  %542 = vrot.lane.b32.xlu0 %v318, 112
  %v543 = vpop.permute.xlu0 %542
  %544 = vrot.lane.b32.xlu0 %v319, 112
  %v545 = vpop.permute.xlu0 %544
  %546 = vrot.lane.b32.xlu0 %v317, 80
  %v547 = vpop.permute.xlu0 %546
  %548 = vrot.lane.b32.xlu0 %v318, 80
  %v549 = vpop.permute.xlu0 %548
  %550 = vrot.lane.b32.xlu0 %v319, 80
  %v551 = vpop.permute.xlu0 %550
  %v553 = vsel %vm329, %v541, 0
  %v556 = vsel %vm329, %v543, 0
  %v559 = vsel %vm329, %v545, 0
  %v562 = vsel %vm329, %v547, 0
  %v565 = vsel %vm329, %v549, 0
  %v568 = vsel %vm329, %v551, 0
  %570 = vmatprep.subr.bf16.mxu0 0
  %571 = vmatpush1.bf16.xpose.msra.mxu0 0
  %572 = vmatprep.subr.bf16.mxu0 0
  %573 = vmatpush1.bf16.xpose.msra.mxu0 0
  %574 = vmatprep.subr.bf16.mxu0 0
  %575 = vmatpush1.bf16.xpose.msra.mxu0 0
  %576 = vmatprep.subr.bf16.mxu0 0
  %577 = vmatpush1.bf16.xpose.msra.mxu0 0
  %578 = vmatprep.subr.bf16.mxu0 0
  %579 = vmatpush1.bf16.xpose.msra.mxu0 0
  %580 = vmatprep.subr.bf16.mxu0 0
  %581 = vmatpush1.bf16.xpose.msra.mxu0 %v568
  %582 = vmatprep.subr.bf16.mxu0 0
  %583 = vmatpush1.bf16.xpose.msra.mxu0 %v565
  %584 = vmatprep.subr.bf16.mxu0 0
  %585 = vmatpush1.bf16.xpose.msra.mxu0 %v562
  %586 = vmatprep.subr.bf16.mxu0 0
  %587 = vmatpush2.bf16.xpose.msra.mxu0 0
  %588 = vmatprep.subr.bf16.mxu0 0
  %589 = vmatpush2.bf16.xpose.msra.mxu0 0
  %590 = vmatprep.subr.bf16.mxu0 0
  %591 = vmatpush2.bf16.xpose.msra.mxu0 0
  %592 = vmatprep.subr.bf16.mxu0 0
  %593 = vmatpush2.bf16.xpose.msra.mxu0 0
  %594 = vmatprep.subr.bf16.mxu0 0
  %595 = vmatpush2.bf16.xpose.msra.mxu0 0
  %596 = vmatprep.subr.bf16.mxu0 0
  %597 = vmatpush2.bf16.xpose.msra.mxu0 0
  %598 = vmatprep.subr.bf16.mxu0 0
  %599 = vmatpush2.bf16.xpose.msra.mxu0 0
  %600 = vmatprep.subr.bf16.mxu0 0
  %601 = vmatpush2.bf16.xpose.msra.mxu0 0
  %602 = vmatprep.mubr.bf16.mxu0 0
  %603 = vmatmul.mubr.bf16.gmra.mxu0 %v553
  %v604 = vpop.f32.mrf.mxu0
  %v605 = vadd.f32 %v133, %v604
  %v606 = vpop.f32.mrf.mxu0
  %v607 = vpop.f32.mrf.mxu0
  %v608 = vadd.f32 %v134, %v607
  %v609 = vpop.f32.mrf.mxu0
  %610 = vmatprep.mubr.bf16.mxu0 0
  %611 = vmatmul.mubr.bf16.gmra.mxu0 %v556
  %v612 = vpop.f32.mrf.mxu0
  %v613 = vadd.f32 %v135, %v612
  %v614 = vpop.f32.mrf.mxu0
  %v615 = vpop.f32.mrf.mxu0
  %v616 = vadd.f32 %v136, %v615
  %v617 = vpop.f32.mrf.mxu0
  %618 = vmatprep.mubr.bf16.mxu0 0
  %619 = vmatmul.mubr.bf16.gmra.mxu0 %v559
  %v620 = vpop.f32.mrf.mxu0
  %v621 = vadd.f32 %v137, %v620
  %v622 = vpop.f32.mrf.mxu0
  %v623 = vpop.f32.mrf.mxu0
  %v624 = vpop.f32.mrf.mxu0
  %625 = vdwg.mxu0
  %v626 = vsel %vm404, %v605, -inf
  %627 = vmax.xlane.f32.xlu0 %v626
  %v628 = vpop.xlane.xlu0 %627
  %v629 = vsel %vm404, %v608, -inf
  %630 = vmax.xlane.f32.xlu0 %v629
  %v631 = vpop.xlane.xlu0 %630
  %v632 = vsel %vm404, %v613, -inf
  %633 = vmax.xlane.f32.xlu0 %v632
  %v634 = vpop.xlane.xlu0 %633
  %v635 = vsel %vm404, %v616, -inf
  %636 = vmax.xlane.f32.xlu0 %v635
  %v637 = vpop.xlane.xlu0 %636
  %v638 = vsel %vm404, %v621, -inf
  %639 = vmax.xlane.f32.xlu0 %v638
  %v640 = vpop.xlane.xlu0 %639
  %v641 = vsub.f32 %v605, %v628
  %v642 = vsub.f32 %v608, %v631
  %v643 = vsub.f32 %v613, %v634
  %v644 = vsub.f32 %v616, %v637
  %v645 = vsub.f32 %v621, %v640
  %v646 = vmul.f32 %v641, 1.442695
  %v647 = vpow.pop %v646
  %v648 = vmul.f32 %v642, 1.442695
  %v649 = vpow.pop %v648
  %v650 = vmul.f32 %v643, 1.442695
  %v651 = vpow.pop %v650
  %v652 = vmul.f32 %v644, 1.442695
  %v653 = vpow.pop %v652
  %v654 = vmul.f32 %v645, 1.442695
  %v655 = vpow.pop %v654
  %v656 = vsel %vm404, %v647, 0.0
  %657 = vadd.xlane.f32.xlu0 %v656
  %v658 = vpop.xlane.xlu0 %657
  %v659 = vsel %vm404, %v649, 0.0
  %660 = vadd.xlane.f32.xlu0 %v659
  %v661 = vpop.xlane.xlu0 %660
  %v662 = vsel %vm404, %v651, 0.0
  %663 = vadd.xlane.f32.xlu0 %v662
  %v664 = vpop.xlane.xlu0 %663
  %v665 = vsel %vm404, %v653, 0.0
  %666 = vadd.xlane.f32.xlu0 %v665
  %v667 = vpop.xlane.xlu0 %666
  %v668 = vsel %vm404, %v655, 0.0
  %669 = vadd.xlane.f32.xlu0 %v668
  %v670 = vpop.xlane.xlu0 %669
  %v671 = vpack.c.bf16 %v649, %v647
  %v672 = vpack.c.bf16 %v653, %v651
  %v673 = vpack.c.bf16 %v655, %v655
  %674 = vrot.lane.b32.xlu0 %v317, 48
  %v675 = vpop.permute.xlu0 %674
  %676 = vrot.lane.b32.xlu0 %v318, 48
  %v677 = vpop.permute.xlu0 %676
  %678 = vrot.lane.b32.xlu0 %v319, 48
  %v679 = vpop.permute.xlu0 %678
  %v683 = vsel %vm404, %v671, 0
  %v686 = vsel %vm404, %v672, 0
  %v689 = vsel %vm404, %v673, 0
  %v692 = vsel %vm470, %v679, 0
  %694 = vmatprep.subr.bf16.mxu0 0
  %695 = vmatpush1.bf16.msra.mxu0 0
  %696 = vmatprep.subr.bf16.mxu0 0
  %697 = vmatpush1.bf16.msra.mxu0 0
  %698 = vmatprep.subr.bf16.mxu0 0
  %699 = vmatpush1.bf16.msra.mxu0 0
  %700 = vmatprep.subr.bf16.mxu0 0
  %701 = vmatpush1.bf16.msra.mxu0 0
  %702 = vmatprep.subr.bf16.mxu0 0
  %703 = vmatpush1.bf16.msra.mxu0 0
  %704 = vmatprep.subr.bf16.mxu0 0
  %705 = vmatpush1.bf16.msra.mxu0 %v692
  %706 = vmatprep.subr.bf16.mxu0 0
  %707 = vmatpush1.bf16.msra.mxu0 %v677
  %708 = vmatprep.subr.bf16.mxu0 0
  %709 = vmatpush1.bf16.msra.mxu0 %v675
  %710 = vmatprep.subr.bf16.mxu0 0
  %711 = vmatpush2.bf16.msra.mxu0 0
  %712 = vmatprep.subr.bf16.mxu0 0
  %713 = vmatpush2.bf16.msra.mxu0 0
  %714 = vmatprep.subr.bf16.mxu0 0
  %715 = vmatpush2.bf16.msra.mxu0 0
  %716 = vmatprep.subr.bf16.mxu0 0
  %717 = vmatpush2.bf16.msra.mxu0 0
  %718 = vmatprep.subr.bf16.mxu0 0
  %719 = vmatpush2.bf16.msra.mxu0 0
  %720 = vmatprep.subr.bf16.mxu0 0
  %721 = vmatpush2.bf16.msra.mxu0 0
  %722 = vmatprep.subr.bf16.mxu0 0
  %723 = vmatpush2.bf16.msra.mxu0 0
  %724 = vmatprep.subr.bf16.mxu0 0
  %725 = vmatpush2.bf16.msra.mxu0 0
  %726 = vmatprep.mubr.bf16.mxu0 0
  %727 = vmatmul.mubr.bf16.gmra.mxu0 %v683
  %v728 = vpop.f32.mrf.mxu0
  %v729 = vadd.f32 0.0, %v728
  %v730 = vpop.f32.mrf.mxu0
  %v731 = vpop.f32.mrf.mxu0
  %v732 = vadd.f32 0.0, %v731
  %v733 = vpop.f32.mrf.mxu0
  %734 = vmatprep.mubr.bf16.mxu0 0
  %735 = vmatmul.mubr.bf16.gmra.mxu0 %v686
  %v736 = vpop.f32.mrf.mxu0
  %v737 = vadd.f32 0.0, %v736
  %v738 = vpop.f32.mrf.mxu0
  %v739 = vpop.f32.mrf.mxu0
  %v740 = vadd.f32 0.0, %v739
  %v741 = vpop.f32.mrf.mxu0
  %742 = vmatprep.mubr.bf16.mxu0 0
  %743 = vmatmul.mubr.bf16.gmra.mxu0 %v689
  %v744 = vpop.f32.mrf.mxu0
  %v745 = vadd.f32 0.0, %v744
  %v746 = vpop.f32.mrf.mxu0
  %v747 = vpop.f32.mrf.mxu0
  %v748 = vpop.f32.mrf.mxu0
  %749 = vdwg.mxu0
  %v750 = vrcp.pop %v658
  %v751 = vrcp.pop %v661
  %v752 = vrcp.pop %v664
  %v753 = vrcp.pop %v667
  %v754 = vrcp.pop %v670
  %v755 = vmul.f32 %v729, %v750
  %v756 = vmul.f32 %v732, %v751
  %v757 = vmul.f32 %v737, %v752
  %v758 = vmul.f32 %v740, %v753
  %v759 = vmul.f32 %v745, %v754
  %765 = vrot.lane.b32.xlu0 %v755, 16
  %v766 = vpop.permute.xlu0 %765
  %767 = vrot.lane.b32.xlu0 %v756, 16
  %v768 = vpop.permute.xlu0 %767
  %769 = vrot.lane.b32.xlu0 %v757, 16
  %v770 = vpop.permute.xlu0 %769
  %771 = vrot.lane.b32.xlu0 %v758, 16
  %v772 = vpop.permute.xlu0 %771
  %773 = vrot.lane.b32.xlu0 %v759, 16
  %v774 = vpop.permute.xlu0 %773
  %v780 = vsel %vm329, %v535, %v766
  %v781 = vsel %vm329, %v536, %v768
  %v782 = vsel %vm329, %v537, %v770
  %v783 = vsel %vm329, %v538, %v772
  %v784 = vsel %vm329, %v539, %v774
  %v785 = vpack.c.bf16 %v781, %v780
  %v786 = vpack.c.bf16 %v783, %v782
  %v787 = vpack.c.bf16 %v784, %v784
  %788 = vrot.lane.b32.xlu0 %v248, 32
  %v789 = vpop.permute.xlu0 %788
  %790 = vrot.lane.b32.xlu0 %v249, 32
  %v791 = vpop.permute.xlu0 %790
  %v795 = vsel %vm148, %v785, 0
  %v798 = vsel %vm148, %v786, 0
  %v801 = vsel %vm148, %v787, 0
  %803 = vmatprep.subr.bf16.mxu0 0
  %804 = vmatpush1.bf16.msra.mxu0 0
  %805 = vmatprep.subr.bf16.mxu0 0
  %806 = vmatpush1.bf16.msra.mxu0 0
  %807 = vmatprep.subr.bf16.mxu0 0
  %808 = vmatpush1.bf16.msra.mxu0 0
  %809 = vmatprep.subr.bf16.mxu0 0
  %810 = vmatpush1.bf16.msra.mxu0 0
  %811 = vmatprep.subr.bf16.mxu0 0
  %812 = vmatpush1.bf16.msra.mxu0 0
  %813 = vmatprep.subr.bf16.mxu0 0
  %814 = vmatpush1.bf16.msra.mxu0 0
  %815 = vmatprep.subr.bf16.mxu0 0
  %816 = vmatpush1.bf16.msra.mxu0 %v791
  %817 = vmatprep.subr.bf16.mxu0 0
  %818 = vmatpush1.bf16.msra.mxu0 %v789
  %819 = vmatprep.subr.bf16.mxu0 0
  %820 = vmatpush2.bf16.msra.mxu0 0
  %821 = vmatprep.subr.bf16.mxu0 0
  %822 = vmatpush2.bf16.msra.mxu0 0
  %823 = vmatprep.subr.bf16.mxu0 0
  %824 = vmatpush2.bf16.msra.mxu0 0
  %825 = vmatprep.subr.bf16.mxu0 0
  %826 = vmatpush2.bf16.msra.mxu0 0
  %827 = vmatprep.subr.bf16.mxu0 0
  %828 = vmatpush2.bf16.msra.mxu0 0
  %829 = vmatprep.subr.bf16.mxu0 0
  %830 = vmatpush2.bf16.msra.mxu0 0
  %831 = vmatprep.subr.bf16.mxu0 0
  %832 = vmatpush2.bf16.msra.mxu0 0
  %833 = vmatprep.subr.bf16.mxu0 0
  %834 = vmatpush2.bf16.msra.mxu0 0
  %835 = vmatprep.mubr.bf16.mxu0 0
  %836 = vmatmul.mubr.bf16.gmra.mxu0 %v795
  %v837 = vpop.f32.mrf.mxu0
  %v838 = vadd.f32 0.0, %v837
  %v839 = vpop.f32.mrf.mxu0
  %v840 = vpop.f32.mrf.mxu0
  %v841 = vadd.f32 0.0, %v840
  %v842 = vpop.f32.mrf.mxu0
  %843 = vmatprep.mubr.bf16.mxu0 0
  %844 = vmatmul.mubr.bf16.gmra.mxu0 %v798
  %v845 = vpop.f32.mrf.mxu0
  %v846 = vadd.f32 0.0, %v845
  %v847 = vpop.f32.mrf.mxu0
  %v848 = vpop.f32.mrf.mxu0
  %v849 = vadd.f32 0.0, %v848
  %v850 = vpop.f32.mrf.mxu0
  %851 = vmatprep.mubr.bf16.mxu0 0
  %852 = vmatmul.mubr.bf16.gmra.mxu0 %v801
  %v853 = vpop.f32.mrf.mxu0
  %v854 = vadd.f32 0.0, %v853
  %v855 = vpop.f32.mrf.mxu0
  %v856 = vpop.f32.mrf.mxu0
  %v857 = vpop.f32.mrf.mxu0
  %858 = vdwg.mxu0
  %v859 = vadd.f32 %v112, %v838
  %v860 = vadd.f32 %v115, %v841
  %v861 = vadd.f32 %v120, %v846
  %v862 = vadd.f32 %v123, %v849
  %v863 = vadd.f32 %v128, %v854
  %v864 = vld [vmem:[%s6 + $0x10] sm:$0x1]
  %v865 = vlaneseq
  %v866 = vshrl.u32 %v865, 7
  %v867 = vsub.s32 0, %v866
  %v868 = vrot.slane %v864, %v867
  %v869 = vadd.f32 %v859, %v868
  %v870 = vadd.f32 %v860, %v868
  %v871 = vadd.f32 %v861, %v868
  %v872 = vadd.f32 %v862, %v868
  %v873 = vadd.f32 %v863, %v868
  %v874 = vld [vmem:[%s6 + $0x8] sm:$0x1]
  %v875 = vld [vmem:[%s6 + $0xc] sm:$0x1]
  %v876 = vsel %vm148, %v869, 0.0
  %877 = vadd.xlane.f32.xlu0 %v876
  %v878 = vpop.xlane.xlu0 %877
  %v879 = vsel %vm148, %v870, 0.0
  %880 = vadd.xlane.f32.xlu0 %v879
  %v881 = vpop.xlane.xlu0 %880
  %v882 = vsel %vm148, %v871, 0.0
  %883 = vadd.xlane.f32.xlu0 %v882
  %v884 = vpop.xlane.xlu0 %883
  %v885 = vsel %vm148, %v872, 0.0
  %886 = vadd.xlane.f32.xlu0 %v885
  %v887 = vpop.xlane.xlu0 %886
  %v888 = vsel %vm148, %v873, 0.0
  %889 = vadd.xlane.f32.xlu0 %v888
  %v890 = vpop.xlane.xlu0 %889
  %v891 = vmul.f32 %v878, %v164
  %v892 = vmul.f32 %v881, %v164
  %v893 = vmul.f32 %v884, %v164
  %v894 = vmul.f32 %v887, %v164
  %v895 = vmul.f32 %v890, %v164
  %v896 = vsub.f32 %v869, %v891
  %v897 = vsub.f32 %v870, %v892
  %v898 = vsub.f32 %v871, %v893
  %v899 = vsub.f32 %v872, %v894
  %v900 = vsub.f32 %v873, %v895
  %v901 = vmul.f32 %v896, %v896
  %v902 = vmul.f32 %v897, %v897
  %v903 = vmul.f32 %v898, %v898
  %v904 = vmul.f32 %v899, %v899
  %v905 = vmul.f32 %v900, %v900
  %v906 = vsel %vm148, %v901, 0.0
  %907 = vadd.xlane.f32.xlu0 %v906
  %v908 = vpop.xlane.xlu0 %907
  %v909 = vsel %vm148, %v902, 0.0
  %910 = vadd.xlane.f32.xlu0 %v909
  %v911 = vpop.xlane.xlu0 %910
  %v912 = vsel %vm148, %v903, 0.0
  %913 = vadd.xlane.f32.xlu0 %v912
  %v914 = vpop.xlane.xlu0 %913
  %v915 = vsel %vm148, %v904, 0.0
  %916 = vadd.xlane.f32.xlu0 %v915
  %v917 = vpop.xlane.xlu0 %916
  %v918 = vsel %vm148, %v905, 0.0
  %919 = vadd.xlane.f32.xlu0 %v918
  %v920 = vpop.xlane.xlu0 %919
  %v921 = vmul.f32 %v908, %v164
  %v922 = vmul.f32 %v911, %v164
  %v923 = vmul.f32 %v914, %v164
  %v924 = vmul.f32 %v917, %v164
  %v925 = vmul.f32 %v920, %v164
  %v926 = vadd.f32 %v921, 1e-06
  %v927 = vadd.f32 %v922, 1e-06
  %v928 = vadd.f32 %v923, 1e-06
  %v929 = vadd.f32 %v924, 1e-06
  %v930 = vadd.f32 %v925, 1e-06
  %v931 = vrsqrt.pop %v926
  %v932 = vrsqrt.pop %v927
  %v933 = vrsqrt.pop %v928
  %v934 = vrsqrt.pop %v929
  %v935 = vrsqrt.pop %v930
  %v936 = vmul.f32 %v896, %v931
  %v937 = vmul.f32 %v897, %v932
  %v938 = vmul.f32 %v898, %v933
  %v939 = vmul.f32 %v899, %v934
  %v940 = vmul.f32 %v900, %v935
  %v941 = vlaneseq
  %v942 = vshrl.u32 %v941, 7
  %v943 = vsub.s32 0, %v942
  %v944 = vrot.slane %v874, %v943
  %v945 = vmul.f32 %v936, %v944
  %v946 = vmul.f32 %v937, %v944
  %v947 = vmul.f32 %v938, %v944
  %v948 = vmul.f32 %v939, %v944
  %v949 = vmul.f32 %v940, %v944
  %v950 = vlaneseq
  %v951 = vshrl.u32 %v950, 7
  %v952 = vsub.s32 0, %v951
  %v953 = vrot.slane %v875, %v952
  %v954 = vadd.f32 %v945, %v953
  %v955 = vadd.f32 %v946, %v953
  %v956 = vadd.f32 %v947, %v953
  %v957 = vadd.f32 %v948, %v953
  %v958 = vadd.f32 %v949, %v953
  %v959 = vpack.c.bf16 %v955, %v954
  %v960 = vpack.c.bf16 %v957, %v956
  %v961 = vpack.c.bf16 %v958, %v958
  %v962 = vlaneseq
  %v963 = vshrl.u32 %v962, 7
  %v964 = vsub.s32 0, %v963
  %v965 = vrot.slane %v145, %v964
  %v966 = vunpack.c.h.b16 %v140
  %v967 = vunpack.c.h.b16 %v141
  %v968 = vunpack.c.h.b16 %v142
  %v969 = vunpack.c.h.b16 %v143
  %v970 = vpack.c.b16 %v967, %v966
  %v971 = vpack.c.b16 %v969, %v968
  %v975 = vsel %vm148, %v959, 0
  %v978 = vsel %vm148, %v960, 0
  %v981 = vsel %vm148, %v961, 0
  %983 = vmatprep.subr.bf16.mxu0 0
  %984 = vmatpush1.bf16.msra.mxu0 0
  %985 = vmatprep.subr.bf16.mxu0 0
  %986 = vmatpush1.bf16.msra.mxu0 0
  %987 = vmatprep.subr.bf16.mxu0 0
  %988 = vmatpush1.bf16.msra.mxu0 0
  %989 = vmatprep.subr.bf16.mxu0 0
  %990 = vmatpush1.bf16.msra.mxu0 0
  %991 = vmatprep.subr.bf16.mxu0 0
  %992 = vmatpush1.bf16.msra.mxu0 0
  %993 = vmatprep.subr.bf16.mxu0 0
  %994 = vmatpush1.bf16.msra.mxu0 0
  %995 = vmatprep.subr.bf16.mxu0 0
  %996 = vmatpush1.bf16.msra.mxu0 %v971
  %997 = vmatprep.subr.bf16.mxu0 0
  %998 = vmatpush1.bf16.msra.mxu0 %v970
  %999 = vmatprep.subr.bf16.mxu0 0
  %1000 = vmatpush2.bf16.msra.mxu0 0
  %1001 = vmatprep.subr.bf16.mxu0 0
  %1002 = vmatpush2.bf16.msra.mxu0 0
  %1003 = vmatprep.subr.bf16.mxu0 0
  %1004 = vmatpush2.bf16.msra.mxu0 0
  %1005 = vmatprep.subr.bf16.mxu0 0
  %1006 = vmatpush2.bf16.msra.mxu0 0
  %1007 = vmatprep.subr.bf16.mxu0 0
  %1008 = vmatpush2.bf16.msra.mxu0 0
  %1009 = vmatprep.subr.bf16.mxu0 0
  %1010 = vmatpush2.bf16.msra.mxu0 0
  %1011 = vmatprep.subr.bf16.mxu0 0
  %1012 = vmatpush2.bf16.msra.mxu0 0
  %1013 = vmatprep.subr.bf16.mxu0 0
  %1014 = vmatpush2.bf16.msra.mxu0 0
  %1015 = vmatprep.mubr.bf16.mxu0 0
  %1016 = vmatmul.mubr.bf16.gmra.mxu0 %v975
  %v1017 = vpop.f32.mrf.mxu0
  %v1018 = vadd.f32 %v965, %v1017
  %v1019 = vpop.f32.mrf.mxu0
  %v1020 = vpop.f32.mrf.mxu0
  %v1021 = vadd.f32 %v965, %v1020
  %v1022 = vpop.f32.mrf.mxu0
  %1023 = vmatprep.mubr.bf16.mxu0 0
  %1024 = vmatmul.mubr.bf16.gmra.mxu0 %v978
  %v1025 = vpop.f32.mrf.mxu0
  %v1026 = vadd.f32 %v965, %v1025
  %v1027 = vpop.f32.mrf.mxu0
  %v1028 = vpop.f32.mrf.mxu0
  %v1029 = vadd.f32 %v965, %v1028
  %v1030 = vpop.f32.mrf.mxu0
  %1031 = vmatprep.mubr.bf16.mxu0 0
  %1032 = vmatmul.mubr.bf16.gmra.mxu0 %v981
  %v1033 = vpop.f32.mrf.mxu0
  %v1034 = vadd.f32 %v965, %v1033
  %v1035 = vpop.f32.mrf.mxu0
  %v1036 = vpop.f32.mrf.mxu0
  %v1037 = vpop.f32.mrf.mxu0
  %1038 = vdwg.mxu0
  %v1039 = vmul.f32 %v1018, 0.5
  %v1040 = vmul.f32 %v1021, 0.5
  %v1041 = vmul.f32 %v1026, 0.5
  %v1042 = vmul.f32 %v1029, 0.5
  %v1043 = vmul.f32 %v1034, 0.5
  %v1044 = vmul.f32 %v1018, 0.044715
  %v1045 = vmul.f32 %v1021, 0.044715
  %v1046 = vmul.f32 %v1026, 0.044715
  %v1047 = vmul.f32 %v1029, 0.044715
  %v1048 = vmul.f32 %v1034, 0.044715
  %v1049 = vmul.f32 %v1044, %v1018
  %v1050 = vmul.f32 %v1045, %v1021
  %v1051 = vmul.f32 %v1046, %v1026
  %v1052 = vmul.f32 %v1047, %v1029
  %v1053 = vmul.f32 %v1048, %v1034
  %v1054 = vmul.f32 %v1049, %v1018
  %v1055 = vmul.f32 %v1050, %v1021
  %v1056 = vmul.f32 %v1051, %v1026
  %v1057 = vmul.f32 %v1052, %v1029
  %v1058 = vmul.f32 %v1053, %v1034
  %v1059 = vadd.f32 %v1018, %v1054
  %v1060 = vadd.f32 %v1021, %v1055
  %v1061 = vadd.f32 %v1026, %v1056
  %v1062 = vadd.f32 %v1029, %v1057
  %v1063 = vadd.f32 %v1034, %v1058
  %v1064 = vmul.f32 %v1059, 0.7978846
  %v1065 = vmul.f32 %v1060, 0.7978846
  %v1066 = vmul.f32 %v1061, 0.7978846
  %v1067 = vmul.f32 %v1062, 0.7978846
  %v1068 = vmul.f32 %v1063, 0.7978846
  %v1069 = vtanh.pop %v1064
  %v1070 = vtanh.pop %v1065
  %v1071 = vtanh.pop %v1066
  %v1072 = vtanh.pop %v1067
  %v1073 = vtanh.pop %v1068
  %v1074 = vadd.f32 %v1069, 1.0
  %v1075 = vadd.f32 %v1070, 1.0
  %v1076 = vadd.f32 %v1071, 1.0
  %v1077 = vadd.f32 %v1072, 1.0
  %v1078 = vadd.f32 %v1073, 1.0
  %v1079 = vmul.f32 %v1039, %v1074
  %v1080 = vmul.f32 %v1040, %v1075
  %v1081 = vmul.f32 %v1041, %v1076
  %v1082 = vmul.f32 %v1042, %v1077
  %v1083 = vmul.f32 %v1043, %v1078
  %v1084 = vpack.c.bf16 %v1080, %v1079
  %v1085 = vpack.c.bf16 %v1082, %v1081
  %v1086 = vpack.c.bf16 %v1083, %v1083
  %v1087 = vld [vmem:[%s5] sm:$0xf]
  %v1088 = vld [vmem:[%s5 + $0x4] sm:$0xf]
  %v1089 = vld [vmem:[%s5 + $0x8] sm:$0xf]
  %v1090 = vld [vmem:[%s5 + $0xc] sm:$0xf]
  %v1091 = vld [vmem:[%s5 + $0x10] sm:$0xf]
  %v1092 = vld [vmem:[%s5 + $0x14] sm:$0xf]
  %v1093 = vld [vmem:[%s5 + $0x18] sm:$0xf]
  %v1094 = vld [vmem:[%s5 + $0x1c] sm:$0xf]
  %v1095 = vld [vmem:[%s5 + $0x20] sm:$0xf]
  %v1096 = vld [vmem:[%s5 + $0x24] sm:$0xf]
  %v1097 = vld [vmem:[%s5 + $0x28] sm:$0xf]
  %v1098 = vld [vmem:[%s5 + $0x2c] sm:$0xf]
  %v1099 = vld [vmem:[%s5 + $0x30] sm:$0xf]
  %v1100 = vld [vmem:[%s5 + $0x34] sm:$0xf]
  %v1101 = vld [vmem:[%s5 + $0x38] sm:$0xf]
  %v1102 = vld [vmem:[%s5 + $0x3c] sm:$0xf]
  %v1103 = vld [vmem:[%s6 + $0x14] sm:$0x1]
  %v1104 = vlaneseq
  %v1105 = vshrl.u32 %v1104, 7
  %v1106 = vsub.s32 0, %v1105
  %v1107 = vrot.slane %v1103, %v1106
  %v1124 = vunpack.c.l.b16 %v1087
  %v1125 = vunpack.c.l.b16 %v1088
  %v1126 = vunpack.c.l.b16 %v1089
  %v1127 = vunpack.c.l.b16 %v1090
  %v1128 = vunpack.c.l.b16 %v1091
  %v1129 = vunpack.c.l.b16 %v1092
  %v1130 = vunpack.c.l.b16 %v1093
  %v1131 = vunpack.c.l.b16 %v1094
  %v1132 = vunpack.c.l.b16 %v1095
  %v1133 = vunpack.c.l.b16 %v1096
  %v1134 = vunpack.c.l.b16 %v1097
  %v1135 = vunpack.c.l.b16 %v1098
  %v1136 = vunpack.c.l.b16 %v1099
  %v1137 = vunpack.c.l.b16 %v1100
  %v1138 = vunpack.c.l.b16 %v1101
  %v1139 = vunpack.c.l.b16 %v1102
  %v1140 = vpack.c.b16 %v1125, %v1124
  %v1141 = vpack.c.b16 %v1127, %v1126
  %v1142 = vpack.c.b16 %v1129, %v1128
  %v1143 = vpack.c.b16 %v1131, %v1130
  %v1144 = vpack.c.b16 %v1133, %v1132
  %v1145 = vpack.c.b16 %v1135, %v1134
  %v1146 = vpack.c.b16 %v1137, %v1136
  %v1147 = vpack.c.b16 %v1139, %v1138
  %1156 = vmatprep.subr.bf16.mxu0 0
  %1157 = vmatpush1.bf16.msra.mxu0 %v1147
  %1158 = vmatprep.subr.bf16.mxu0 0
  %1159 = vmatpush1.bf16.msra.mxu0 %v1146
  %1160 = vmatprep.subr.bf16.mxu0 0
  %1161 = vmatpush1.bf16.msra.mxu0 %v1145
  %1162 = vmatprep.subr.bf16.mxu0 0
  %1163 = vmatpush1.bf16.msra.mxu0 %v1144
  %1164 = vmatprep.subr.bf16.mxu0 0
  %1165 = vmatpush1.bf16.msra.mxu0 %v1143
  %1166 = vmatprep.subr.bf16.mxu0 0
  %1167 = vmatpush1.bf16.msra.mxu0 %v1142
  %1168 = vmatprep.subr.bf16.mxu0 0
  %1169 = vmatpush1.bf16.msra.mxu0 %v1141
  %1170 = vmatprep.subr.bf16.mxu0 0
  %1171 = vmatpush1.bf16.msra.mxu0 %v1140
  %1172 = vmatprep.subr.bf16.mxu0 0
  %1173 = vmatpush2.bf16.msra.mxu0 0
  %1174 = vmatprep.subr.bf16.mxu0 0
  %1175 = vmatpush2.bf16.msra.mxu0 0
  %1176 = vmatprep.subr.bf16.mxu0 0
  %1177 = vmatpush2.bf16.msra.mxu0 0
  %1178 = vmatprep.subr.bf16.mxu0 0
  %1179 = vmatpush2.bf16.msra.mxu0 0
  %1180 = vmatprep.subr.bf16.mxu0 0
  %1181 = vmatpush2.bf16.msra.mxu0 0
  %1182 = vmatprep.subr.bf16.mxu0 0
  %1183 = vmatpush2.bf16.msra.mxu0 0
  %1184 = vmatprep.subr.bf16.mxu0 0
  %1185 = vmatpush2.bf16.msra.mxu0 0
  %1186 = vmatprep.subr.bf16.mxu0 0
  %1187 = vmatpush2.bf16.msra.mxu0 0
  %1188 = vmatprep.mubr.bf16.mxu0 0
  %1189 = vmatmul.mubr.bf16.gmra.mxu0 %v1084
  %v1190 = vpop.f32.mrf.mxu0
  %v1191 = vadd.f32 %v1107, %v1190
  %v1192 = vpop.f32.mrf.mxu0
  %v1193 = vpop.f32.mrf.mxu0
  %v1194 = vadd.f32 %v1107, %v1193
  %v1195 = vpop.f32.mrf.mxu0
  %1196 = vmatprep.mubr.bf16.mxu0 0
  %1197 = vmatmul.mubr.bf16.gmra.mxu0 %v1085
  %v1198 = vpop.f32.mrf.mxu0
  %v1199 = vadd.f32 %v1107, %v1198
  %v1200 = vpop.f32.mrf.mxu0
  %v1201 = vpop.f32.mrf.mxu0
  %v1202 = vadd.f32 %v1107, %v1201
  %v1203 = vpop.f32.mrf.mxu0
  %1204 = vmatprep.mubr.bf16.mxu0 0
  %1205 = vmatmul.mubr.bf16.gmra.mxu0 %v1086
  %v1206 = vpop.f32.mrf.mxu0
  %v1207 = vadd.f32 %v1107, %v1206
  %v1208 = vpop.f32.mrf.mxu0
  %v1209 = vpop.f32.mrf.mxu0
  %v1210 = vpop.f32.mrf.mxu0
  %1211 = vdwg.mxu0
  %v1212 = vadd.f32 %v869, %v1191
  %v1213 = vadd.f32 %v870, %v1194
  %v1214 = vadd.f32 %v871, %v1199
  %v1215 = vadd.f32 %v872, %v1202
  %v1216 = vadd.f32 %v873, %v1207
  %s1217 = scalar_lea.vmem %s4, 32
  %v1218 = vld [vmem:[%s1217] sm:$0xff]
  %v1219 = vld [vmem:[%s1217 + $0x8] sm:$0xff]
  %v1220 = vld [vmem:[%s1217 + $0x10] sm:$0xff]
  %v1221 = vld [vmem:[%s1217 + $0x18] sm:$0xff]
  %v1222 = vld [vmem:[%s7 + $0x5] sm:$0x1]
  %v1223 = vld [vmem:[%s7 + $0x1] sm:$0x1]
  %v1224 = vld [vmem:[%s6 + $0x1] sm:$0x1]
  %v1225 = vld [vmem:[%s6 + $0x5] sm:$0x1]
  %v1226 = vsel %vm148, %v1212, 0.0
  %1227 = vadd.xlane.f32.xlu0 %v1226
  %v1228 = vpop.xlane.xlu0 %1227
  %v1229 = vsel %vm148, %v1213, 0.0
  %1230 = vadd.xlane.f32.xlu0 %v1229
  %v1231 = vpop.xlane.xlu0 %1230
  %v1232 = vsel %vm148, %v1214, 0.0
  %1233 = vadd.xlane.f32.xlu0 %v1232
  %v1234 = vpop.xlane.xlu0 %1233
  %v1235 = vsel %vm148, %v1215, 0.0
  %1236 = vadd.xlane.f32.xlu0 %v1235
  %v1237 = vpop.xlane.xlu0 %1236
  %v1238 = vsel %vm148, %v1216, 0.0
  %1239 = vadd.xlane.f32.xlu0 %v1238
  %v1240 = vpop.xlane.xlu0 %1239
  %v1241 = vmul.f32 %v1228, %v164
  %v1242 = vmul.f32 %v1231, %v164
  %v1243 = vmul.f32 %v1234, %v164
  %v1244 = vmul.f32 %v1237, %v164
  %v1245 = vmul.f32 %v1240, %v164
  %v1246 = vsub.f32 %v1212, %v1241
  %v1247 = vsub.f32 %v1213, %v1242
  %v1248 = vsub.f32 %v1214, %v1243
  %v1249 = vsub.f32 %v1215, %v1244
  %v1250 = vsub.f32 %v1216, %v1245
  %v1251 = vmul.f32 %v1246, %v1246
  %v1252 = vmul.f32 %v1247, %v1247
  %v1253 = vmul.f32 %v1248, %v1248
  %v1254 = vmul.f32 %v1249, %v1249
  %v1255 = vmul.f32 %v1250, %v1250
  %v1256 = vsel %vm148, %v1251, 0.0
  %1257 = vadd.xlane.f32.xlu0 %v1256
  %v1258 = vpop.xlane.xlu0 %1257
  %v1259 = vsel %vm148, %v1252, 0.0
  %1260 = vadd.xlane.f32.xlu0 %v1259
  %v1261 = vpop.xlane.xlu0 %1260
  %v1262 = vsel %vm148, %v1253, 0.0
  %1263 = vadd.xlane.f32.xlu0 %v1262
  %v1264 = vpop.xlane.xlu0 %1263
  %v1265 = vsel %vm148, %v1254, 0.0
  %1266 = vadd.xlane.f32.xlu0 %v1265
  %v1267 = vpop.xlane.xlu0 %1266
  %v1268 = vsel %vm148, %v1255, 0.0
  %1269 = vadd.xlane.f32.xlu0 %v1268
  %v1270 = vpop.xlane.xlu0 %1269
  %v1271 = vmul.f32 %v1258, %v164
  %v1272 = vmul.f32 %v1261, %v164
  %v1273 = vmul.f32 %v1264, %v164
  %v1274 = vmul.f32 %v1267, %v164
  %v1275 = vmul.f32 %v1270, %v164
  %v1276 = vadd.f32 %v1271, 1e-06
  %v1277 = vadd.f32 %v1272, 1e-06
  %v1278 = vadd.f32 %v1273, 1e-06
  %v1279 = vadd.f32 %v1274, 1e-06
  %v1280 = vadd.f32 %v1275, 1e-06
  %v1281 = vrsqrt.pop %v1276
  %v1282 = vrsqrt.pop %v1277
  %v1283 = vrsqrt.pop %v1278
  %v1284 = vrsqrt.pop %v1279
  %v1285 = vrsqrt.pop %v1280
  %v1286 = vmul.f32 %v1246, %v1281
  %v1287 = vmul.f32 %v1247, %v1282
  %v1288 = vmul.f32 %v1248, %v1283
  %v1289 = vmul.f32 %v1249, %v1284
  %v1290 = vmul.f32 %v1250, %v1285
  %v1291 = vlaneseq
  %v1292 = vshrl.u32 %v1291, 7
  %v1293 = vsub.s32 0, %v1292
  %v1294 = vrot.slane %v1224, %v1293
  %v1295 = vmul.f32 %v1286, %v1294
  %v1296 = vmul.f32 %v1287, %v1294
  %v1297 = vmul.f32 %v1288, %v1294
  %v1298 = vmul.f32 %v1289, %v1294
  %v1299 = vmul.f32 %v1290, %v1294
  %v1300 = vlaneseq
  %v1301 = vshrl.u32 %v1300, 7
  %v1302 = vsub.s32 0, %v1301
  %v1303 = vrot.slane %v1225, %v1302
  %v1304 = vadd.f32 %v1295, %v1303
  %v1305 = vadd.f32 %v1296, %v1303
  %v1306 = vadd.f32 %v1297, %v1303
  %v1307 = vadd.f32 %v1298, %v1303
  %v1308 = vadd.f32 %v1299, %v1303
  %v1309 = vpack.c.bf16 %v1305, %v1304
  %v1310 = vpack.c.bf16 %v1307, %v1306
  %v1311 = vpack.c.bf16 %v1308, %v1308
  %v1312 = vlaneseq
  %v1313 = vshrl.u32 %v1312, 7
  %v1314 = vsub.s32 0, %v1313
  %v1315 = vrot.slane %v1222, %v1314
  %v1320 = vunpack.c.l.b16 %v1218
  %v1321 = vunpack.c.l.b16 %v1219
  %v1322 = vunpack.c.l.b16 %v1220
  %v1323 = vunpack.c.l.b16 %v1221
  %v1324 = vpack.c.b16 %v1321, %v1320
  %v1325 = vpack.c.b16 %v1323, %v1322
  %v1329 = vsel %vm148, %v1309, 0
  %v1332 = vsel %vm148, %v1310, 0
  %v1335 = vsel %vm148, %v1311, 0
  %1337 = vmatprep.subr.bf16.mxu0 0
  %1338 = vmatpush1.bf16.msra.mxu0 0
  %1339 = vmatprep.subr.bf16.mxu0 0
  %1340 = vmatpush1.bf16.msra.mxu0 0
  %1341 = vmatprep.subr.bf16.mxu0 0
  %1342 = vmatpush1.bf16.msra.mxu0 0
  %1343 = vmatprep.subr.bf16.mxu0 0
  %1344 = vmatpush1.bf16.msra.mxu0 0
  %1345 = vmatprep.subr.bf16.mxu0 0
  %1346 = vmatpush1.bf16.msra.mxu0 0
  %1347 = vmatprep.subr.bf16.mxu0 0
  %1348 = vmatpush1.bf16.msra.mxu0 0
  %1349 = vmatprep.subr.bf16.mxu0 0
  %1350 = vmatpush1.bf16.msra.mxu0 %v1325
  %1351 = vmatprep.subr.bf16.mxu0 0
  %1352 = vmatpush1.bf16.msra.mxu0 %v1324
  %1353 = vmatprep.subr.bf16.mxu0 0
  %1354 = vmatpush2.bf16.msra.mxu0 0
  %1355 = vmatprep.subr.bf16.mxu0 0
  %1356 = vmatpush2.bf16.msra.mxu0 0
  %1357 = vmatprep.subr.bf16.mxu0 0
  %1358 = vmatpush2.bf16.msra.mxu0 0
  %1359 = vmatprep.subr.bf16.mxu0 0
  %1360 = vmatpush2.bf16.msra.mxu0 0
  %1361 = vmatprep.subr.bf16.mxu0 0
  %1362 = vmatpush2.bf16.msra.mxu0 0
  %1363 = vmatprep.subr.bf16.mxu0 0
  %1364 = vmatpush2.bf16.msra.mxu0 0
  %1365 = vmatprep.subr.bf16.mxu0 0
  %1366 = vmatpush2.bf16.msra.mxu0 0
  %1367 = vmatprep.subr.bf16.mxu0 0
  %1368 = vmatpush2.bf16.msra.mxu0 0
  %1369 = vmatprep.mubr.bf16.mxu0 0
  %1370 = vmatmul.mubr.bf16.gmra.mxu0 %v1329
  %v1371 = vpop.f32.mrf.mxu0
  %v1372 = vadd.f32 %v1315, %v1371
  %v1373 = vpop.f32.mrf.mxu0
  %v1374 = vpop.f32.mrf.mxu0
  %v1375 = vadd.f32 %v1315, %v1374
  %v1376 = vpop.f32.mrf.mxu0
  %1377 = vmatprep.mubr.bf16.mxu0 0
  %1378 = vmatmul.mubr.bf16.gmra.mxu0 %v1332
  %v1379 = vpop.f32.mrf.mxu0
  %v1380 = vadd.f32 %v1315, %v1379
  %v1381 = vpop.f32.mrf.mxu0
  %v1382 = vpop.f32.mrf.mxu0
  %v1383 = vadd.f32 %v1315, %v1382
  %v1384 = vpop.f32.mrf.mxu0
  %1385 = vmatprep.mubr.bf16.mxu0 0
  %1386 = vmatmul.mubr.bf16.gmra.mxu0 %v1335
  %v1387 = vpop.f32.mrf.mxu0
  %v1388 = vadd.f32 %v1315, %v1387
  %v1389 = vpop.f32.mrf.mxu0
  %v1390 = vpop.f32.mrf.mxu0
  %v1391 = vpop.f32.mrf.mxu0
  %1392 = vdwg.mxu0
  %v1393 = vpack.c.bf16 %v1375, %v1372
  %v1394 = vpack.c.bf16 %v1383, %v1380
  %v1395 = vpack.c.bf16 %v1388, %v1388
  %1399 = vrot.lane.b32.xlu0 %v1393, 96
  %v1400 = vpop.permute.xlu0 %1399
  %1401 = vrot.lane.b32.xlu0 %v1394, 96
  %v1402 = vpop.permute.xlu0 %1401
  %1403 = vrot.lane.b32.xlu0 %v1395, 96
  %v1404 = vpop.permute.xlu0 %1403
  %v1406 = vsel %vm329, %v1393, 0
  %v1409 = vsel %vm329, %v1394, 0
  %v1412 = vsel %vm329, %v1395, 0
  %v1415 = vsel %vm329, %v1400, 0
  %v1418 = vsel %vm329, %v1402, 0
  %v1421 = vsel %vm329, %v1404, 0
  %1423 = vmatprep.subr.bf16.mxu0 0
  %1424 = vmatpush1.bf16.xpose.msra.mxu0 0
  %1425 = vmatprep.subr.bf16.mxu0 0
  %1426 = vmatpush1.bf16.xpose.msra.mxu0 0
  %1427 = vmatprep.subr.bf16.mxu0 0
  %1428 = vmatpush1.bf16.xpose.msra.mxu0 0
  %1429 = vmatprep.subr.bf16.mxu0 0
  %1430 = vmatpush1.bf16.xpose.msra.mxu0 0
  %1431 = vmatprep.subr.bf16.mxu0 0
  %1432 = vmatpush1.bf16.xpose.msra.mxu0 0
  %1433 = vmatprep.subr.bf16.mxu0 0
  %1434 = vmatpush1.bf16.xpose.msra.mxu0 %v1421
  %1435 = vmatprep.subr.bf16.mxu0 0
  %1436 = vmatpush1.bf16.xpose.msra.mxu0 %v1418
  %1437 = vmatprep.subr.bf16.mxu0 0
  %1438 = vmatpush1.bf16.xpose.msra.mxu0 %v1415
  %1439 = vmatprep.subr.bf16.mxu0 0
  %1440 = vmatpush2.bf16.xpose.msra.mxu0 0
  %1441 = vmatprep.subr.bf16.mxu0 0
  %1442 = vmatpush2.bf16.xpose.msra.mxu0 0
  %1443 = vmatprep.subr.bf16.mxu0 0
  %1444 = vmatpush2.bf16.xpose.msra.mxu0 0
  %1445 = vmatprep.subr.bf16.mxu0 0
  %1446 = vmatpush2.bf16.xpose.msra.mxu0 0
  %1447 = vmatprep.subr.bf16.mxu0 0
  %1448 = vmatpush2.bf16.xpose.msra.mxu0 0
  %1449 = vmatprep.subr.bf16.mxu0 0
  %1450 = vmatpush2.bf16.xpose.msra.mxu0 0
  %1451 = vmatprep.subr.bf16.mxu0 0
  %1452 = vmatpush2.bf16.xpose.msra.mxu0 0
  %1453 = vmatprep.subr.bf16.mxu0 0
  %1454 = vmatpush2.bf16.xpose.msra.mxu0 0
  %1455 = vmatprep.mubr.bf16.mxu0 0
  %1456 = vmatmul.mubr.bf16.gmra.mxu0 %v1406
  %v1457 = vpop.f32.mrf.mxu0
  %v1458 = vadd.f32 %v133, %v1457
  %v1459 = vpop.f32.mrf.mxu0
  %v1460 = vpop.f32.mrf.mxu0
  %v1461 = vadd.f32 %v134, %v1460
  %v1462 = vpop.f32.mrf.mxu0
  %1463 = vmatprep.mubr.bf16.mxu0 0
  %1464 = vmatmul.mubr.bf16.gmra.mxu0 %v1409
  %v1465 = vpop.f32.mrf.mxu0
  %v1466 = vadd.f32 %v135, %v1465
  %v1467 = vpop.f32.mrf.mxu0
  %v1468 = vpop.f32.mrf.mxu0
  %v1469 = vadd.f32 %v136, %v1468
  %v1470 = vpop.f32.mrf.mxu0
  %1471 = vmatprep.mubr.bf16.mxu0 0
  %1472 = vmatmul.mubr.bf16.gmra.mxu0 %v1412
  %v1473 = vpop.f32.mrf.mxu0
  %v1474 = vadd.f32 %v137, %v1473
  %v1475 = vpop.f32.mrf.mxu0
  %v1476 = vpop.f32.mrf.mxu0
  %v1477 = vpop.f32.mrf.mxu0
  %1478 = vdwg.mxu0
  %v1479 = vsel %vm404, %v1458, -inf
  %1480 = vmax.xlane.f32.xlu0 %v1479
  %v1481 = vpop.xlane.xlu0 %1480
  %v1482 = vsel %vm404, %v1461, -inf
  %1483 = vmax.xlane.f32.xlu0 %v1482
  %v1484 = vpop.xlane.xlu0 %1483
  %v1485 = vsel %vm404, %v1466, -inf
  %1486 = vmax.xlane.f32.xlu0 %v1485
  %v1487 = vpop.xlane.xlu0 %1486
  %v1488 = vsel %vm404, %v1469, -inf
  %1489 = vmax.xlane.f32.xlu0 %v1488
  %v1490 = vpop.xlane.xlu0 %1489
  %v1491 = vsel %vm404, %v1474, -inf
  %1492 = vmax.xlane.f32.xlu0 %v1491
  %v1493 = vpop.xlane.xlu0 %1492
  %v1494 = vsub.f32 %v1458, %v1481
  %v1495 = vsub.f32 %v1461, %v1484
  %v1496 = vsub.f32 %v1466, %v1487
  %v1497 = vsub.f32 %v1469, %v1490
  %v1498 = vsub.f32 %v1474, %v1493
  %v1499 = vmul.f32 %v1494, 1.442695
  %v1500 = vpow.pop %v1499
  %v1501 = vmul.f32 %v1495, 1.442695
  %v1502 = vpow.pop %v1501
  %v1503 = vmul.f32 %v1496, 1.442695
  %v1504 = vpow.pop %v1503
  %v1505 = vmul.f32 %v1497, 1.442695
  %v1506 = vpow.pop %v1505
  %v1507 = vmul.f32 %v1498, 1.442695
  %v1508 = vpow.pop %v1507
  %v1509 = vsel %vm404, %v1500, 0.0
  %1510 = vadd.xlane.f32.xlu0 %v1509
  %v1511 = vpop.xlane.xlu0 %1510
  %v1512 = vsel %vm404, %v1502, 0.0
  %1513 = vadd.xlane.f32.xlu0 %v1512
  %v1514 = vpop.xlane.xlu0 %1513
  %v1515 = vsel %vm404, %v1504, 0.0
  %1516 = vadd.xlane.f32.xlu0 %v1515
  %v1517 = vpop.xlane.xlu0 %1516
  %v1518 = vsel %vm404, %v1506, 0.0
  %1519 = vadd.xlane.f32.xlu0 %v1518
  %v1520 = vpop.xlane.xlu0 %1519
  %v1521 = vsel %vm404, %v1508, 0.0
  %1522 = vadd.xlane.f32.xlu0 %v1521
  %v1523 = vpop.xlane.xlu0 %1522
  %v1524 = vpack.c.bf16 %v1502, %v1500
  %v1525 = vpack.c.bf16 %v1506, %v1504
  %v1526 = vpack.c.bf16 %v1508, %v1508
  %1527 = vrot.lane.b32.xlu0 %v1393, 64
  %v1528 = vpop.permute.xlu0 %1527
  %1529 = vrot.lane.b32.xlu0 %v1394, 64
  %v1530 = vpop.permute.xlu0 %1529
  %1531 = vrot.lane.b32.xlu0 %v1395, 64
  %v1532 = vpop.permute.xlu0 %1531
  %v1536 = vsel %vm404, %v1524, 0
  %v1539 = vsel %vm404, %v1525, 0
  %v1542 = vsel %vm404, %v1526, 0
  %v1545 = vsel %vm470, %v1532, 0
  %1547 = vmatprep.subr.bf16.mxu0 0
  %1548 = vmatpush1.bf16.msra.mxu0 0
  %1549 = vmatprep.subr.bf16.mxu0 0
  %1550 = vmatpush1.bf16.msra.mxu0 0
  %1551 = vmatprep.subr.bf16.mxu0 0
  %1552 = vmatpush1.bf16.msra.mxu0 0
  %1553 = vmatprep.subr.bf16.mxu0 0
  %1554 = vmatpush1.bf16.msra.mxu0 0
  %1555 = vmatprep.subr.bf16.mxu0 0
  %1556 = vmatpush1.bf16.msra.mxu0 0
  %1557 = vmatprep.subr.bf16.mxu0 0
  %1558 = vmatpush1.bf16.msra.mxu0 %v1545
  %1559 = vmatprep.subr.bf16.mxu0 0
  %1560 = vmatpush1.bf16.msra.mxu0 %v1530
  %1561 = vmatprep.subr.bf16.mxu0 0
  %1562 = vmatpush1.bf16.msra.mxu0 %v1528
  %1563 = vmatprep.subr.bf16.mxu0 0
  %1564 = vmatpush2.bf16.msra.mxu0 0
  %1565 = vmatprep.subr.bf16.mxu0 0
  %1566 = vmatpush2.bf16.msra.mxu0 0
  %1567 = vmatprep.subr.bf16.mxu0 0
  %1568 = vmatpush2.bf16.msra.mxu0 0
  %1569 = vmatprep.subr.bf16.mxu0 0
  %1570 = vmatpush2.bf16.msra.mxu0 0
  %1571 = vmatprep.subr.bf16.mxu0 0
  %1572 = vmatpush2.bf16.msra.mxu0 0
  %1573 = vmatprep.subr.bf16.mxu0 0
  %1574 = vmatpush2.bf16.msra.mxu0 0
  %1575 = vmatprep.subr.bf16.mxu0 0
  %1576 = vmatpush2.bf16.msra.mxu0 0
  %1577 = vmatprep.subr.bf16.mxu0 0
  %1578 = vmatpush2.bf16.msra.mxu0 0
  %1579 = vmatprep.mubr.bf16.mxu0 0
  %1580 = vmatmul.mubr.bf16.gmra.mxu0 %v1536
  %v1581 = vpop.f32.mrf.mxu0
  %v1582 = vadd.f32 0.0, %v1581
  %v1583 = vpop.f32.mrf.mxu0
  %v1584 = vpop.f32.mrf.mxu0
  %v1585 = vadd.f32 0.0, %v1584
  %v1586 = vpop.f32.mrf.mxu0
  %1587 = vmatprep.mubr.bf16.mxu0 0
  %1588 = vmatmul.mubr.bf16.gmra.mxu0 %v1539
  %v1589 = vpop.f32.mrf.mxu0
  %v1590 = vadd.f32 0.0, %v1589
  %v1591 = vpop.f32.mrf.mxu0
  %v1592 = vpop.f32.mrf.mxu0
  %v1593 = vadd.f32 0.0, %v1592
  %v1594 = vpop.f32.mrf.mxu0
  %1595 = vmatprep.mubr.bf16.mxu0 0
  %1596 = vmatmul.mubr.bf16.gmra.mxu0 %v1542
  %v1597 = vpop.f32.mrf.mxu0
  %v1598 = vadd.f32 0.0, %v1597
  %v1599 = vpop.f32.mrf.mxu0
  %v1600 = vpop.f32.mrf.mxu0
  %v1601 = vpop.f32.mrf.mxu0
  %1602 = vdwg.mxu0
  %v1603 = vrcp.pop %v1511
  %v1604 = vrcp.pop %v1514
  %v1605 = vrcp.pop %v1517
  %v1606 = vrcp.pop %v1520
  %v1607 = vrcp.pop %v1523
  %v1608 = vmul.f32 %v1582, %v1603
  %v1609 = vmul.f32 %v1585, %v1604
  %v1610 = vmul.f32 %v1590, %v1605
  %v1611 = vmul.f32 %v1593, %v1606
  %v1612 = vmul.f32 %v1598, %v1607
  %1613 = vrot.lane.b32.xlu0 %v1393, 112
  %v1614 = vpop.permute.xlu0 %1613
  %1615 = vrot.lane.b32.xlu0 %v1394, 112
  %v1616 = vpop.permute.xlu0 %1615
  %1617 = vrot.lane.b32.xlu0 %v1395, 112
  %v1618 = vpop.permute.xlu0 %1617
  %1619 = vrot.lane.b32.xlu0 %v1393, 80
  %v1620 = vpop.permute.xlu0 %1619
  %1621 = vrot.lane.b32.xlu0 %v1394, 80
  %v1622 = vpop.permute.xlu0 %1621
  %1623 = vrot.lane.b32.xlu0 %v1395, 80
  %v1624 = vpop.permute.xlu0 %1623
  %v1626 = vsel %vm329, %v1614, 0
  %v1629 = vsel %vm329, %v1616, 0
  %v1632 = vsel %vm329, %v1618, 0
  %v1635 = vsel %vm329, %v1620, 0
  %v1638 = vsel %vm329, %v1622, 0
  %v1641 = vsel %vm329, %v1624, 0
  %1643 = vmatprep.subr.bf16.mxu0 0
  %1644 = vmatpush1.bf16.xpose.msra.mxu0 0
  %1645 = vmatprep.subr.bf16.mxu0 0
  %1646 = vmatpush1.bf16.xpose.msra.mxu0 0
  %1647 = vmatprep.subr.bf16.mxu0 0
  %1648 = vmatpush1.bf16.xpose.msra.mxu0 0
  %1649 = vmatprep.subr.bf16.mxu0 0
  %1650 = vmatpush1.bf16.xpose.msra.mxu0 0
  %1651 = vmatprep.subr.bf16.mxu0 0
  %1652 = vmatpush1.bf16.xpose.msra.mxu0 0
  %1653 = vmatprep.subr.bf16.mxu0 0
  %1654 = vmatpush1.bf16.xpose.msra.mxu0 %v1641
  %1655 = vmatprep.subr.bf16.mxu0 0
  %1656 = vmatpush1.bf16.xpose.msra.mxu0 %v1638
  %1657 = vmatprep.subr.bf16.mxu0 0
  %1658 = vmatpush1.bf16.xpose.msra.mxu0 %v1635
  %1659 = vmatprep.subr.bf16.mxu0 0
  %1660 = vmatpush2.bf16.xpose.msra.mxu0 0
  %1661 = vmatprep.subr.bf16.mxu0 0
  %1662 = vmatpush2.bf16.xpose.msra.mxu0 0
  %1663 = vmatprep.subr.bf16.mxu0 0
  %1664 = vmatpush2.bf16.xpose.msra.mxu0 0
  %1665 = vmatprep.subr.bf16.mxu0 0
  %1666 = vmatpush2.bf16.xpose.msra.mxu0 0
  %1667 = vmatprep.subr.bf16.mxu0 0
  %1668 = vmatpush2.bf16.xpose.msra.mxu0 0
  %1669 = vmatprep.subr.bf16.mxu0 0
  %1670 = vmatpush2.bf16.xpose.msra.mxu0 0
  %1671 = vmatprep.subr.bf16.mxu0 0
  %1672 = vmatpush2.bf16.xpose.msra.mxu0 0
  %1673 = vmatprep.subr.bf16.mxu0 0
  %1674 = vmatpush2.bf16.xpose.msra.mxu0 0
  %1675 = vmatprep.mubr.bf16.mxu0 0
  %1676 = vmatmul.mubr.bf16.gmra.mxu0 %v1626
  %v1677 = vpop.f32.mrf.mxu0
  %v1678 = vadd.f32 %v133, %v1677
  %v1679 = vpop.f32.mrf.mxu0
  %v1680 = vpop.f32.mrf.mxu0
  %v1681 = vadd.f32 %v134, %v1680
  %v1682 = vpop.f32.mrf.mxu0
  %1683 = vmatprep.mubr.bf16.mxu0 0
  %1684 = vmatmul.mubr.bf16.gmra.mxu0 %v1629
  %v1685 = vpop.f32.mrf.mxu0
  %v1686 = vadd.f32 %v135, %v1685
  %v1687 = vpop.f32.mrf.mxu0
  %v1688 = vpop.f32.mrf.mxu0
  %v1689 = vadd.f32 %v136, %v1688
  %v1690 = vpop.f32.mrf.mxu0
  %1691 = vmatprep.mubr.bf16.mxu0 0
  %1692 = vmatmul.mubr.bf16.gmra.mxu0 %v1632
  %v1693 = vpop.f32.mrf.mxu0
  %v1694 = vadd.f32 %v137, %v1693
  %v1695 = vpop.f32.mrf.mxu0
  %v1696 = vpop.f32.mrf.mxu0
  %v1697 = vpop.f32.mrf.mxu0
  %1698 = vdwg.mxu0
  %v1699 = vsel %vm404, %v1678, -inf
  %1700 = vmax.xlane.f32.xlu0 %v1699
  %v1701 = vpop.xlane.xlu0 %1700
  %v1702 = vsel %vm404, %v1681, -inf
  %1703 = vmax.xlane.f32.xlu0 %v1702
  %v1704 = vpop.xlane.xlu0 %1703
  %v1705 = vsel %vm404, %v1686, -inf
  %1706 = vmax.xlane.f32.xlu0 %v1705
  %v1707 = vpop.xlane.xlu0 %1706
  %v1708 = vsel %vm404, %v1689, -inf
  %1709 = vmax.xlane.f32.xlu0 %v1708
  %v1710 = vpop.xlane.xlu0 %1709
  %v1711 = vsel %vm404, %v1694, -inf
  %1712 = vmax.xlane.f32.xlu0 %v1711
  %v1713 = vpop.xlane.xlu0 %1712
  %v1714 = vsub.f32 %v1678, %v1701
  %v1715 = vsub.f32 %v1681, %v1704
  %v1716 = vsub.f32 %v1686, %v1707
  %v1717 = vsub.f32 %v1689, %v1710
  %v1718 = vsub.f32 %v1694, %v1713
  %v1719 = vmul.f32 %v1714, 1.442695
  %v1720 = vpow.pop %v1719
  %v1721 = vmul.f32 %v1715, 1.442695
  %v1722 = vpow.pop %v1721
  %v1723 = vmul.f32 %v1716, 1.442695
  %v1724 = vpow.pop %v1723
  %v1725 = vmul.f32 %v1717, 1.442695
  %v1726 = vpow.pop %v1725
  %v1727 = vmul.f32 %v1718, 1.442695
  %v1728 = vpow.pop %v1727
  %v1729 = vsel %vm404, %v1720, 0.0
  %1730 = vadd.xlane.f32.xlu0 %v1729
  %v1731 = vpop.xlane.xlu0 %1730
  %v1732 = vsel %vm404, %v1722, 0.0
  %1733 = vadd.xlane.f32.xlu0 %v1732
  %v1734 = vpop.xlane.xlu0 %1733
  %v1735 = vsel %vm404, %v1724, 0.0
  %1736 = vadd.xlane.f32.xlu0 %v1735
  %v1737 = vpop.xlane.xlu0 %1736
  %v1738 = vsel %vm404, %v1726, 0.0
  %1739 = vadd.xlane.f32.xlu0 %v1738
  %v1740 = vpop.xlane.xlu0 %1739
  %v1741 = vsel %vm404, %v1728, 0.0
  %1742 = vadd.xlane.f32.xlu0 %v1741
  %v1743 = vpop.xlane.xlu0 %1742
  %v1744 = vpack.c.bf16 %v1722, %v1720
  %v1745 = vpack.c.bf16 %v1726, %v1724
  %v1746 = vpack.c.bf16 %v1728, %v1728
  %1747 = vrot.lane.b32.xlu0 %v1393, 48
  %v1748 = vpop.permute.xlu0 %1747
  %1749 = vrot.lane.b32.xlu0 %v1394, 48
  %v1750 = vpop.permute.xlu0 %1749
  %1751 = vrot.lane.b32.xlu0 %v1395, 48
  %v1752 = vpop.permute.xlu0 %1751
  %v1756 = vsel %vm404, %v1744, 0
  %v1759 = vsel %vm404, %v1745, 0
  %v1762 = vsel %vm404, %v1746, 0
  %v1765 = vsel %vm470, %v1752, 0
  %1767 = vmatprep.subr.bf16.mxu0 0
  %1768 = vmatpush1.bf16.msra.mxu0 0
  %1769 = vmatprep.subr.bf16.mxu0 0
  %1770 = vmatpush1.bf16.msra.mxu0 0
  %1771 = vmatprep.subr.bf16.mxu0 0
  %1772 = vmatpush1.bf16.msra.mxu0 0
  %1773 = vmatprep.subr.bf16.mxu0 0
  %1774 = vmatpush1.bf16.msra.mxu0 0
  %1775 = vmatprep.subr.bf16.mxu0 0
  %1776 = vmatpush1.bf16.msra.mxu0 0
  %1777 = vmatprep.subr.bf16.mxu0 0
  %1778 = vmatpush1.bf16.msra.mxu0 %v1765
  %1779 = vmatprep.subr.bf16.mxu0 0
  %1780 = vmatpush1.bf16.msra.mxu0 %v1750
  %1781 = vmatprep.subr.bf16.mxu0 0
  %1782 = vmatpush1.bf16.msra.mxu0 %v1748
  %1783 = vmatprep.subr.bf16.mxu0 0
  %1784 = vmatpush2.bf16.msra.mxu0 0
  %1785 = vmatprep.subr.bf16.mxu0 0
  %1786 = vmatpush2.bf16.msra.mxu0 0
  %1787 = vmatprep.subr.bf16.mxu0 0
  %1788 = vmatpush2.bf16.msra.mxu0 0
  %1789 = vmatprep.subr.bf16.mxu0 0
  %1790 = vmatpush2.bf16.msra.mxu0 0
  %1791 = vmatprep.subr.bf16.mxu0 0
  %1792 = vmatpush2.bf16.msra.mxu0 0
  %1793 = vmatprep.subr.bf16.mxu0 0
  %1794 = vmatpush2.bf16.msra.mxu0 0
  %1795 = vmatprep.subr.bf16.mxu0 0
  %1796 = vmatpush2.bf16.msra.mxu0 0
  %1797 = vmatprep.subr.bf16.mxu0 0
  %1798 = vmatpush2.bf16.msra.mxu0 0
  %1799 = vmatprep.mubr.bf16.mxu0 0
  %1800 = vmatmul.mubr.bf16.gmra.mxu0 %v1756
  %v1801 = vpop.f32.mrf.mxu0
  %v1802 = vadd.f32 0.0, %v1801
  %v1803 = vpop.f32.mrf.mxu0
  %v1804 = vpop.f32.mrf.mxu0
  %v1805 = vadd.f32 0.0, %v1804
  %v1806 = vpop.f32.mrf.mxu0
  %1807 = vmatprep.mubr.bf16.mxu0 0
  %1808 = vmatmul.mubr.bf16.gmra.mxu0 %v1759
  %v1809 = vpop.f32.mrf.mxu0
  %v1810 = vadd.f32 0.0, %v1809
  %v1811 = vpop.f32.mrf.mxu0
  %v1812 = vpop.f32.mrf.mxu0
  %v1813 = vadd.f32 0.0, %v1812
  %v1814 = vpop.f32.mrf.mxu0
  %1815 = vmatprep.mubr.bf16.mxu0 0
  %1816 = vmatmul.mubr.bf16.gmra.mxu0 %v1762
  %v1817 = vpop.f32.mrf.mxu0
  %v1818 = vadd.f32 0.0, %v1817
  %v1819 = vpop.f32.mrf.mxu0
  %v1820 = vpop.f32.mrf.mxu0
  %v1821 = vpop.f32.mrf.mxu0
  %1822 = vdwg.mxu0
  %v1823 = vrcp.pop %v1731
  %v1824 = vrcp.pop %v1734
  %v1825 = vrcp.pop %v1737
  %v1826 = vrcp.pop %v1740
  %v1827 = vrcp.pop %v1743
  %v1828 = vmul.f32 %v1802, %v1823
  %v1829 = vmul.f32 %v1805, %v1824
  %v1830 = vmul.f32 %v1810, %v1825
  %v1831 = vmul.f32 %v1813, %v1826
  %v1832 = vmul.f32 %v1818, %v1827
  %1838 = vrot.lane.b32.xlu0 %v1828, 16
  %v1839 = vpop.permute.xlu0 %1838
  %1840 = vrot.lane.b32.xlu0 %v1829, 16
  %v1841 = vpop.permute.xlu0 %1840
  %1842 = vrot.lane.b32.xlu0 %v1830, 16
  %v1843 = vpop.permute.xlu0 %1842
  %1844 = vrot.lane.b32.xlu0 %v1831, 16
  %v1845 = vpop.permute.xlu0 %1844
  %1846 = vrot.lane.b32.xlu0 %v1832, 16
  %v1847 = vpop.permute.xlu0 %1846
  %v1853 = vsel %vm329, %v1608, %v1839
  %v1854 = vsel %vm329, %v1609, %v1841
  %v1855 = vsel %vm329, %v1610, %v1843
  %v1856 = vsel %vm329, %v1611, %v1845
  %v1857 = vsel %vm329, %v1612, %v1847
  %v1858 = vpack.c.bf16 %v1854, %v1853
  %v1859 = vpack.c.bf16 %v1856, %v1855
  %v1860 = vpack.c.bf16 %v1857, %v1857
  %1861 = vrot.lane.b32.xlu0 %v1324, 32
  %v1862 = vpop.permute.xlu0 %1861
  %1863 = vrot.lane.b32.xlu0 %v1325, 32
  %v1864 = vpop.permute.xlu0 %1863
  %v1868 = vsel %vm148, %v1858, 0
  %v1871 = vsel %vm148, %v1859, 0
  %v1874 = vsel %vm148, %v1860, 0
  %1876 = vmatprep.subr.bf16.mxu0 0
  %1877 = vmatpush1.bf16.msra.mxu0 0
  %1878 = vmatprep.subr.bf16.mxu0 0
  %1879 = vmatpush1.bf16.msra.mxu0 0
  %1880 = vmatprep.subr.bf16.mxu0 0
  %1881 = vmatpush1.bf16.msra.mxu0 0
  %1882 = vmatprep.subr.bf16.mxu0 0
  %1883 = vmatpush1.bf16.msra.mxu0 0
  %1884 = vmatprep.subr.bf16.mxu0 0
  %1885 = vmatpush1.bf16.msra.mxu0 0
  %1886 = vmatprep.subr.bf16.mxu0 0
  %1887 = vmatpush1.bf16.msra.mxu0 0
  %1888 = vmatprep.subr.bf16.mxu0 0
  %1889 = vmatpush1.bf16.msra.mxu0 %v1864
  %1890 = vmatprep.subr.bf16.mxu0 0
  %1891 = vmatpush1.bf16.msra.mxu0 %v1862
  %1892 = vmatprep.subr.bf16.mxu0 0
  %1893 = vmatpush2.bf16.msra.mxu0 0
  %1894 = vmatprep.subr.bf16.mxu0 0
  %1895 = vmatpush2.bf16.msra.mxu0 0
  %1896 = vmatprep.subr.bf16.mxu0 0
  %1897 = vmatpush2.bf16.msra.mxu0 0
  %1898 = vmatprep.subr.bf16.mxu0 0
  %1899 = vmatpush2.bf16.msra.mxu0 0
  %1900 = vmatprep.subr.bf16.mxu0 0
  %1901 = vmatpush2.bf16.msra.mxu0 0
  %1902 = vmatprep.subr.bf16.mxu0 0
  %1903 = vmatpush2.bf16.msra.mxu0 0
  %1904 = vmatprep.subr.bf16.mxu0 0
  %1905 = vmatpush2.bf16.msra.mxu0 0
  %1906 = vmatprep.subr.bf16.mxu0 0
  %1907 = vmatpush2.bf16.msra.mxu0 0
  %1908 = vmatprep.mubr.bf16.mxu0 0
  %1909 = vmatmul.mubr.bf16.gmra.mxu0 %v1868
  %v1910 = vpop.f32.mrf.mxu0
  %v1911 = vadd.f32 0.0, %v1910
  %v1912 = vpop.f32.mrf.mxu0
  %v1913 = vpop.f32.mrf.mxu0
  %v1914 = vadd.f32 0.0, %v1913
  %v1915 = vpop.f32.mrf.mxu0
  %1916 = vmatprep.mubr.bf16.mxu0 0
  %1917 = vmatmul.mubr.bf16.gmra.mxu0 %v1871
  %v1918 = vpop.f32.mrf.mxu0
  %v1919 = vadd.f32 0.0, %v1918
  %v1920 = vpop.f32.mrf.mxu0
  %v1921 = vpop.f32.mrf.mxu0
  %v1922 = vadd.f32 0.0, %v1921
  %v1923 = vpop.f32.mrf.mxu0
  %1924 = vmatprep.mubr.bf16.mxu0 0
  %1925 = vmatmul.mubr.bf16.gmra.mxu0 %v1874
  %v1926 = vpop.f32.mrf.mxu0
  %v1927 = vadd.f32 0.0, %v1926
  %v1928 = vpop.f32.mrf.mxu0
  %v1929 = vpop.f32.mrf.mxu0
  %v1930 = vpop.f32.mrf.mxu0
  %1931 = vdwg.mxu0
  %v1932 = vadd.f32 %v1212, %v1911
  %v1933 = vadd.f32 %v1213, %v1914
  %v1934 = vadd.f32 %v1214, %v1919
  %v1935 = vadd.f32 %v1215, %v1922
  %v1936 = vadd.f32 %v1216, %v1927
  %v1937 = vld [vmem:[%s6 + $0x11] sm:$0x1]
  %v1938 = vlaneseq
  %v1939 = vshrl.u32 %v1938, 7
  %v1940 = vsub.s32 0, %v1939
  %v1941 = vrot.slane %v1937, %v1940
  %v1942 = vadd.f32 %v1932, %v1941
  %v1943 = vadd.f32 %v1933, %v1941
  %v1944 = vadd.f32 %v1934, %v1941
  %v1945 = vadd.f32 %v1935, %v1941
  %v1946 = vadd.f32 %v1936, %v1941
  %v1947 = vld [vmem:[%s6 + $0x9] sm:$0x1]
  %v1948 = vld [vmem:[%s6 + $0xd] sm:$0x1]
  %v1949 = vsel %vm148, %v1942, 0.0
  %1950 = vadd.xlane.f32.xlu0 %v1949
  %v1951 = vpop.xlane.xlu0 %1950
  %v1952 = vsel %vm148, %v1943, 0.0
  %1953 = vadd.xlane.f32.xlu0 %v1952
  %v1954 = vpop.xlane.xlu0 %1953
  %v1955 = vsel %vm148, %v1944, 0.0
  %1956 = vadd.xlane.f32.xlu0 %v1955
  %v1957 = vpop.xlane.xlu0 %1956
  %v1958 = vsel %vm148, %v1945, 0.0
  %1959 = vadd.xlane.f32.xlu0 %v1958
  %v1960 = vpop.xlane.xlu0 %1959
  %v1961 = vsel %vm148, %v1946, 0.0
  %1962 = vadd.xlane.f32.xlu0 %v1961
  %v1963 = vpop.xlane.xlu0 %1962
  %v1964 = vmul.f32 %v1951, %v164
  %v1965 = vmul.f32 %v1954, %v164
  %v1966 = vmul.f32 %v1957, %v164
  %v1967 = vmul.f32 %v1960, %v164
  %v1968 = vmul.f32 %v1963, %v164
  %v1969 = vsub.f32 %v1942, %v1964
  %v1970 = vsub.f32 %v1943, %v1965
  %v1971 = vsub.f32 %v1944, %v1966
  %v1972 = vsub.f32 %v1945, %v1967
  %v1973 = vsub.f32 %v1946, %v1968
  %v1974 = vmul.f32 %v1969, %v1969
  %v1975 = vmul.f32 %v1970, %v1970
  %v1976 = vmul.f32 %v1971, %v1971
  %v1977 = vmul.f32 %v1972, %v1972
  %v1978 = vmul.f32 %v1973, %v1973
  %v1979 = vsel %vm148, %v1974, 0.0
  %1980 = vadd.xlane.f32.xlu0 %v1979
  %v1981 = vpop.xlane.xlu0 %1980
  %v1982 = vsel %vm148, %v1975, 0.0
  %1983 = vadd.xlane.f32.xlu0 %v1982
  %v1984 = vpop.xlane.xlu0 %1983
  %v1985 = vsel %vm148, %v1976, 0.0
  %1986 = vadd.xlane.f32.xlu0 %v1985
  %v1987 = vpop.xlane.xlu0 %1986
  %v1988 = vsel %vm148, %v1977, 0.0
  %1989 = vadd.xlane.f32.xlu0 %v1988
  %v1990 = vpop.xlane.xlu0 %1989
  %v1991 = vsel %vm148, %v1978, 0.0
  %1992 = vadd.xlane.f32.xlu0 %v1991
  %v1993 = vpop.xlane.xlu0 %1992
  %v1994 = vmul.f32 %v1981, %v164
  %v1995 = vmul.f32 %v1984, %v164
  %v1996 = vmul.f32 %v1987, %v164
  %v1997 = vmul.f32 %v1990, %v164
  %v1998 = vmul.f32 %v1993, %v164
  %v1999 = vadd.f32 %v1994, 1e-06
  %v2000 = vadd.f32 %v1995, 1e-06
  %v2001 = vadd.f32 %v1996, 1e-06
  %v2002 = vadd.f32 %v1997, 1e-06
  %v2003 = vadd.f32 %v1998, 1e-06
  %v2004 = vrsqrt.pop %v1999
  %v2005 = vrsqrt.pop %v2000
  %v2006 = vrsqrt.pop %v2001
  %v2007 = vrsqrt.pop %v2002
  %v2008 = vrsqrt.pop %v2003
  %v2009 = vmul.f32 %v1969, %v2004
  %v2010 = vmul.f32 %v1970, %v2005
  %v2011 = vmul.f32 %v1971, %v2006
  %v2012 = vmul.f32 %v1972, %v2007
  %v2013 = vmul.f32 %v1973, %v2008
  %v2014 = vlaneseq
  %v2015 = vshrl.u32 %v2014, 7
  %v2016 = vsub.s32 0, %v2015
  %v2017 = vrot.slane %v1947, %v2016
  %v2018 = vmul.f32 %v2009, %v2017
  %v2019 = vmul.f32 %v2010, %v2017
  %v2020 = vmul.f32 %v2011, %v2017
  %v2021 = vmul.f32 %v2012, %v2017
  %v2022 = vmul.f32 %v2013, %v2017
  %v2023 = vlaneseq
  %v2024 = vshrl.u32 %v2023, 7
  %v2025 = vsub.s32 0, %v2024
  %v2026 = vrot.slane %v1948, %v2025
  %v2027 = vadd.f32 %v2018, %v2026
  %v2028 = vadd.f32 %v2019, %v2026
  %v2029 = vadd.f32 %v2020, %v2026
  %v2030 = vadd.f32 %v2021, %v2026
  %v2031 = vadd.f32 %v2022, %v2026
  %v2032 = vpack.c.bf16 %v2028, %v2027
  %v2033 = vpack.c.bf16 %v2030, %v2029
  %v2034 = vpack.c.bf16 %v2031, %v2031
  %v2035 = vlaneseq
  %v2036 = vshrl.u32 %v2035, 7
  %v2037 = vsub.s32 0, %v2036
  %v2038 = vrot.slane %v1223, %v2037
  %v2039 = vunpack.c.h.b16 %v1218
  %v2040 = vunpack.c.h.b16 %v1219
  %v2041 = vunpack.c.h.b16 %v1220
  %v2042 = vunpack.c.h.b16 %v1221
  %v2043 = vpack.c.b16 %v2040, %v2039
  %v2044 = vpack.c.b16 %v2042, %v2041
  %v2048 = vsel %vm148, %v2032, 0
  %v2051 = vsel %vm148, %v2033, 0
  %v2054 = vsel %vm148, %v2034, 0
  %2056 = vmatprep.subr.bf16.mxu0 0
  %2057 = vmatpush1.bf16.msra.mxu0 0
  %2058 = vmatprep.subr.bf16.mxu0 0
  %2059 = vmatpush1.bf16.msra.mxu0 0
  %2060 = vmatprep.subr.bf16.mxu0 0
  %2061 = vmatpush1.bf16.msra.mxu0 0
  %2062 = vmatprep.subr.bf16.mxu0 0
  %2063 = vmatpush1.bf16.msra.mxu0 0
  %2064 = vmatprep.subr.bf16.mxu0 0
  %2065 = vmatpush1.bf16.msra.mxu0 0
  %2066 = vmatprep.subr.bf16.mxu0 0
  %2067 = vmatpush1.bf16.msra.mxu0 0
  %2068 = vmatprep.subr.bf16.mxu0 0
  %2069 = vmatpush1.bf16.msra.mxu0 %v2044
  %2070 = vmatprep.subr.bf16.mxu0 0
  %2071 = vmatpush1.bf16.msra.mxu0 %v2043
  %2072 = vmatprep.subr.bf16.mxu0 0
  %2073 = vmatpush2.bf16.msra.mxu0 0
  %2074 = vmatprep.subr.bf16.mxu0 0
  %2075 = vmatpush2.bf16.msra.mxu0 0
  %2076 = vmatprep.subr.bf16.mxu0 0
  %2077 = vmatpush2.bf16.msra.mxu0 0
  %2078 = vmatprep.subr.bf16.mxu0 0
  %2079 = vmatpush2.bf16.msra.mxu0 0
  %2080 = vmatprep.subr.bf16.mxu0 0
  %2081 = vmatpush2.bf16.msra.mxu0 0
  %2082 = vmatprep.subr.bf16.mxu0 0
  %2083 = vmatpush2.bf16.msra.mxu0 0
  %2084 = vmatprep.subr.bf16.mxu0 0
  %2085 = vmatpush2.bf16.msra.mxu0 0
  %2086 = vmatprep.subr.bf16.mxu0 0
  %2087 = vmatpush2.bf16.msra.mxu0 0
  %2088 = vmatprep.mubr.bf16.mxu0 0
  %2089 = vmatmul.mubr.bf16.gmra.mxu0 %v2048
  %v2090 = vpop.f32.mrf.mxu0
  %v2091 = vadd.f32 %v2038, %v2090
  %v2092 = vpop.f32.mrf.mxu0
  %v2093 = vpop.f32.mrf.mxu0
  %v2094 = vadd.f32 %v2038, %v2093
  %v2095 = vpop.f32.mrf.mxu0
  %2096 = vmatprep.mubr.bf16.mxu0 0
  %2097 = vmatmul.mubr.bf16.gmra.mxu0 %v2051
  %v2098 = vpop.f32.mrf.mxu0
  %v2099 = vadd.f32 %v2038, %v2098
  %v2100 = vpop.f32.mrf.mxu0
  %v2101 = vpop.f32.mrf.mxu0
  %v2102 = vadd.f32 %v2038, %v2101
  %v2103 = vpop.f32.mrf.mxu0
  %2104 = vmatprep.mubr.bf16.mxu0 0
  %2105 = vmatmul.mubr.bf16.gmra.mxu0 %v2054
  %v2106 = vpop.f32.mrf.mxu0
  %v2107 = vadd.f32 %v2038, %v2106
  %v2108 = vpop.f32.mrf.mxu0
  %v2109 = vpop.f32.mrf.mxu0
  %v2110 = vpop.f32.mrf.mxu0
  %2111 = vdwg.mxu0
  %v2112 = vmul.f32 %v2091, 0.5
  %v2113 = vmul.f32 %v2094, 0.5
  %v2114 = vmul.f32 %v2099, 0.5
  %v2115 = vmul.f32 %v2102, 0.5
  %v2116 = vmul.f32 %v2107, 0.5
  %v2117 = vmul.f32 %v2091, 0.044715
  %v2118 = vmul.f32 %v2094, 0.044715
  %v2119 = vmul.f32 %v2099, 0.044715
  %v2120 = vmul.f32 %v2102, 0.044715
  %v2121 = vmul.f32 %v2107, 0.044715
  %v2122 = vmul.f32 %v2117, %v2091
  %v2123 = vmul.f32 %v2118, %v2094
  %v2124 = vmul.f32 %v2119, %v2099
  %v2125 = vmul.f32 %v2120, %v2102
  %v2126 = vmul.f32 %v2121, %v2107
  %v2127 = vmul.f32 %v2122, %v2091
  %v2128 = vmul.f32 %v2123, %v2094
  %v2129 = vmul.f32 %v2124, %v2099
  %v2130 = vmul.f32 %v2125, %v2102
  %v2131 = vmul.f32 %v2126, %v2107
  %v2132 = vadd.f32 %v2091, %v2127
  %v2133 = vadd.f32 %v2094, %v2128
  %v2134 = vadd.f32 %v2099, %v2129
  %v2135 = vadd.f32 %v2102, %v2130
  %v2136 = vadd.f32 %v2107, %v2131
  %v2137 = vmul.f32 %v2132, 0.7978846
  %v2138 = vmul.f32 %v2133, 0.7978846
  %v2139 = vmul.f32 %v2134, 0.7978846
  %v2140 = vmul.f32 %v2135, 0.7978846
  %v2141 = vmul.f32 %v2136, 0.7978846
  %v2142 = vtanh.pop %v2137
  %v2143 = vtanh.pop %v2138
  %v2144 = vtanh.pop %v2139
  %v2145 = vtanh.pop %v2140
  %v2146 = vtanh.pop %v2141
  %v2147 = vadd.f32 %v2142, 1.0
  %v2148 = vadd.f32 %v2143, 1.0
  %v2149 = vadd.f32 %v2144, 1.0
  %v2150 = vadd.f32 %v2145, 1.0
  %v2151 = vadd.f32 %v2146, 1.0
  %v2152 = vmul.f32 %v2112, %v2147
  %v2153 = vmul.f32 %v2113, %v2148
  %v2154 = vmul.f32 %v2114, %v2149
  %v2155 = vmul.f32 %v2115, %v2150
  %v2156 = vmul.f32 %v2116, %v2151
  %v2157 = vpack.c.bf16 %v2153, %v2152
  %v2158 = vpack.c.bf16 %v2155, %v2154
  %v2159 = vpack.c.bf16 %v2156, %v2156
  %s2160 = scalar_lea.vmem %s5, 64
  %v2161 = vld [vmem:[%s2160] sm:$0xf]
  %v2162 = vld [vmem:[%s2160 + $0x4] sm:$0xf]
  %v2163 = vld [vmem:[%s2160 + $0x8] sm:$0xf]
  %v2164 = vld [vmem:[%s2160 + $0xc] sm:$0xf]
  %v2165 = vld [vmem:[%s2160 + $0x10] sm:$0xf]
  %v2166 = vld [vmem:[%s2160 + $0x14] sm:$0xf]
  %v2167 = vld [vmem:[%s2160 + $0x18] sm:$0xf]
  %v2168 = vld [vmem:[%s2160 + $0x1c] sm:$0xf]
  %v2169 = vld [vmem:[%s2160 + $0x20] sm:$0xf]
  %v2170 = vld [vmem:[%s2160 + $0x24] sm:$0xf]
  %v2171 = vld [vmem:[%s2160 + $0x28] sm:$0xf]
  %v2172 = vld [vmem:[%s2160 + $0x2c] sm:$0xf]
  %v2173 = vld [vmem:[%s2160 + $0x30] sm:$0xf]
  %v2174 = vld [vmem:[%s2160 + $0x34] sm:$0xf]
  %v2175 = vld [vmem:[%s2160 + $0x38] sm:$0xf]
  %v2176 = vld [vmem:[%s2160 + $0x3c] sm:$0xf]
  %v2177 = vld [vmem:[%s6 + $0x15] sm:$0x1]
  %v2178 = vlaneseq
  %v2179 = vshrl.u32 %v2178, 7
  %v2180 = vsub.s32 0, %v2179
  %v2181 = vrot.slane %v2177, %v2180
  %v2198 = vunpack.c.l.b16 %v2161
  %v2199 = vunpack.c.l.b16 %v2162
  %v2200 = vunpack.c.l.b16 %v2163
  %v2201 = vunpack.c.l.b16 %v2164
  %v2202 = vunpack.c.l.b16 %v2165
  %v2203 = vunpack.c.l.b16 %v2166
  %v2204 = vunpack.c.l.b16 %v2167
  %v2205 = vunpack.c.l.b16 %v2168
  %v2206 = vunpack.c.l.b16 %v2169
  %v2207 = vunpack.c.l.b16 %v2170
  %v2208 = vunpack.c.l.b16 %v2171
  %v2209 = vunpack.c.l.b16 %v2172
  %v2210 = vunpack.c.l.b16 %v2173
  %v2211 = vunpack.c.l.b16 %v2174
  %v2212 = vunpack.c.l.b16 %v2175
  %v2213 = vunpack.c.l.b16 %v2176
  %v2214 = vpack.c.b16 %v2199, %v2198
  %v2215 = vpack.c.b16 %v2201, %v2200
  %v2216 = vpack.c.b16 %v2203, %v2202
  %v2217 = vpack.c.b16 %v2205, %v2204
  %v2218 = vpack.c.b16 %v2207, %v2206
  %v2219 = vpack.c.b16 %v2209, %v2208
  %v2220 = vpack.c.b16 %v2211, %v2210
  %v2221 = vpack.c.b16 %v2213, %v2212
  %2230 = vmatprep.subr.bf16.mxu0 0
  %2231 = vmatpush1.bf16.msra.mxu0 %v2221
  %2232 = vmatprep.subr.bf16.mxu0 0
  %2233 = vmatpush1.bf16.msra.mxu0 %v2220
  %2234 = vmatprep.subr.bf16.mxu0 0
  %2235 = vmatpush1.bf16.msra.mxu0 %v2219
  %2236 = vmatprep.subr.bf16.mxu0 0
  %2237 = vmatpush1.bf16.msra.mxu0 %v2218
  %2238 = vmatprep.subr.bf16.mxu0 0
  %2239 = vmatpush1.bf16.msra.mxu0 %v2217
  %2240 = vmatprep.subr.bf16.mxu0 0
  %2241 = vmatpush1.bf16.msra.mxu0 %v2216
  %2242 = vmatprep.subr.bf16.mxu0 0
  %2243 = vmatpush1.bf16.msra.mxu0 %v2215
  %2244 = vmatprep.subr.bf16.mxu0 0
  %2245 = vmatpush1.bf16.msra.mxu0 %v2214
  %2246 = vmatprep.subr.bf16.mxu0 0
  %2247 = vmatpush2.bf16.msra.mxu0 0
  %2248 = vmatprep.subr.bf16.mxu0 0
  %2249 = vmatpush2.bf16.msra.mxu0 0
  %2250 = vmatprep.subr.bf16.mxu0 0
  %2251 = vmatpush2.bf16.msra.mxu0 0
  %2252 = vmatprep.subr.bf16.mxu0 0
  %2253 = vmatpush2.bf16.msra.mxu0 0
  %2254 = vmatprep.subr.bf16.mxu0 0
  %2255 = vmatpush2.bf16.msra.mxu0 0
  %2256 = vmatprep.subr.bf16.mxu0 0
  %2257 = vmatpush2.bf16.msra.mxu0 0
  %2258 = vmatprep.subr.bf16.mxu0 0
  %2259 = vmatpush2.bf16.msra.mxu0 0
  %2260 = vmatprep.subr.bf16.mxu0 0
  %2261 = vmatpush2.bf16.msra.mxu0 0
  %2262 = vmatprep.mubr.bf16.mxu0 0
  %2263 = vmatmul.mubr.bf16.gmra.mxu0 %v2157
  %v2264 = vpop.f32.mrf.mxu0
  %v2265 = vadd.f32 %v2181, %v2264
  %v2266 = vpop.f32.mrf.mxu0
  %v2267 = vpop.f32.mrf.mxu0
  %v2268 = vadd.f32 %v2181, %v2267
  %v2269 = vpop.f32.mrf.mxu0
  %2270 = vmatprep.mubr.bf16.mxu0 0
  %2271 = vmatmul.mubr.bf16.gmra.mxu0 %v2158
  %v2272 = vpop.f32.mrf.mxu0
  %v2273 = vadd.f32 %v2181, %v2272
  %v2274 = vpop.f32.mrf.mxu0
  %v2275 = vpop.f32.mrf.mxu0
  %v2276 = vadd.f32 %v2181, %v2275
  %v2277 = vpop.f32.mrf.mxu0
  %2278 = vmatprep.mubr.bf16.mxu0 0
  %2279 = vmatmul.mubr.bf16.gmra.mxu0 %v2159
  %v2280 = vpop.f32.mrf.mxu0
  %v2281 = vadd.f32 %v2181, %v2280
  %v2282 = vpop.f32.mrf.mxu0
  %v2283 = vpop.f32.mrf.mxu0
  %v2284 = vpop.f32.mrf.mxu0
  %2285 = vdwg.mxu0
  %v2286 = vadd.f32 %v1942, %v2265
  %v2287 = vadd.f32 %v1943, %v2268
  %v2288 = vadd.f32 %v1944, %v2273
  %v2289 = vadd.f32 %v1945, %v2276
  %v2290 = vadd.f32 %v1946, %v2281
  %s2291 = scalar_lea.vmem %s4, 64
  %v2292 = vld [vmem:[%s2291] sm:$0xff]
  %v2293 = vld [vmem:[%s2291 + $0x8] sm:$0xff]
  %v2294 = vld [vmem:[%s2291 + $0x10] sm:$0xff]
  %v2295 = vld [vmem:[%s2291 + $0x18] sm:$0xff]
  %v2296 = vld [vmem:[%s7 + $0x6] sm:$0x1]
  %v2297 = vld [vmem:[%s7 + $0x2] sm:$0x1]
  %v2298 = vld [vmem:[%s6 + $0x2] sm:$0x1]
  %v2299 = vld [vmem:[%s6 + $0x6] sm:$0x1]
  %v2300 = vsel %vm148, %v2286, 0.0
  %2301 = vadd.xlane.f32.xlu0 %v2300
  %v2302 = vpop.xlane.xlu0 %2301
  %v2303 = vsel %vm148, %v2287, 0.0
  %2304 = vadd.xlane.f32.xlu0 %v2303
  %v2305 = vpop.xlane.xlu0 %2304
  %v2306 = vsel %vm148, %v2288, 0.0
  %2307 = vadd.xlane.f32.xlu0 %v2306
  %v2308 = vpop.xlane.xlu0 %2307
  %v2309 = vsel %vm148, %v2289, 0.0
  %2310 = vadd.xlane.f32.xlu0 %v2309
  %v2311 = vpop.xlane.xlu0 %2310
  %v2312 = vsel %vm148, %v2290, 0.0
  %2313 = vadd.xlane.f32.xlu0 %v2312
  %v2314 = vpop.xlane.xlu0 %2313
  %v2315 = vmul.f32 %v2302, %v164
  %v2316 = vmul.f32 %v2305, %v164
  %v2317 = vmul.f32 %v2308, %v164
  %v2318 = vmul.f32 %v2311, %v164
  %v2319 = vmul.f32 %v2314, %v164
  %v2320 = vsub.f32 %v2286, %v2315
  %v2321 = vsub.f32 %v2287, %v2316
  %v2322 = vsub.f32 %v2288, %v2317
  %v2323 = vsub.f32 %v2289, %v2318
  %v2324 = vsub.f32 %v2290, %v2319
  %v2325 = vmul.f32 %v2320, %v2320
  %v2326 = vmul.f32 %v2321, %v2321
  %v2327 = vmul.f32 %v2322, %v2322
  %v2328 = vmul.f32 %v2323, %v2323
  %v2329 = vmul.f32 %v2324, %v2324
  %v2330 = vsel %vm148, %v2325, 0.0
  %2331 = vadd.xlane.f32.xlu0 %v2330
  %v2332 = vpop.xlane.xlu0 %2331
  %v2333 = vsel %vm148, %v2326, 0.0
  %2334 = vadd.xlane.f32.xlu0 %v2333
  %v2335 = vpop.xlane.xlu0 %2334
  %v2336 = vsel %vm148, %v2327, 0.0
  %2337 = vadd.xlane.f32.xlu0 %v2336
  %v2338 = vpop.xlane.xlu0 %2337
  %v2339 = vsel %vm148, %v2328, 0.0
  %2340 = vadd.xlane.f32.xlu0 %v2339
  %v2341 = vpop.xlane.xlu0 %2340
  %v2342 = vsel %vm148, %v2329, 0.0
  %2343 = vadd.xlane.f32.xlu0 %v2342
  %v2344 = vpop.xlane.xlu0 %2343
  %v2345 = vmul.f32 %v2332, %v164
  %v2346 = vmul.f32 %v2335, %v164
  %v2347 = vmul.f32 %v2338, %v164
  %v2348 = vmul.f32 %v2341, %v164
  %v2349 = vmul.f32 %v2344, %v164
  %v2350 = vadd.f32 %v2345, 1e-06
  %v2351 = vadd.f32 %v2346, 1e-06
  %v2352 = vadd.f32 %v2347, 1e-06
  %v2353 = vadd.f32 %v2348, 1e-06
  %v2354 = vadd.f32 %v2349, 1e-06
  %v2355 = vrsqrt.pop %v2350
  %v2356 = vrsqrt.pop %v2351
  %v2357 = vrsqrt.pop %v2352
  %v2358 = vrsqrt.pop %v2353
  %v2359 = vrsqrt.pop %v2354
  %v2360 = vmul.f32 %v2320, %v2355
  %v2361 = vmul.f32 %v2321, %v2356
  %v2362 = vmul.f32 %v2322, %v2357
  %v2363 = vmul.f32 %v2323, %v2358
  %v2364 = vmul.f32 %v2324, %v2359
  %v2365 = vlaneseq
  %v2366 = vshrl.u32 %v2365, 7
  %v2367 = vsub.s32 0, %v2366
  %v2368 = vrot.slane %v2298, %v2367
  %v2369 = vmul.f32 %v2360, %v2368
  %v2370 = vmul.f32 %v2361, %v2368
  %v2371 = vmul.f32 %v2362, %v2368
  %v2372 = vmul.f32 %v2363, %v2368
  %v2373 = vmul.f32 %v2364, %v2368
  %v2374 = vlaneseq
  %v2375 = vshrl.u32 %v2374, 7
  %v2376 = vsub.s32 0, %v2375
  %v2377 = vrot.slane %v2299, %v2376
  %v2378 = vadd.f32 %v2369, %v2377
  %v2379 = vadd.f32 %v2370, %v2377
  %v2380 = vadd.f32 %v2371, %v2377
  %v2381 = vadd.f32 %v2372, %v2377
  %v2382 = vadd.f32 %v2373, %v2377
  %v2383 = vpack.c.bf16 %v2379, %v2378
  %v2384 = vpack.c.bf16 %v2381, %v2380
  %v2385 = vpack.c.bf16 %v2382, %v2382
  %v2386 = vlaneseq
  %v2387 = vshrl.u32 %v2386, 7
  %v2388 = vsub.s32 0, %v2387
  %v2389 = vrot.slane %v2296, %v2388
  %v2394 = vunpack.c.l.b16 %v2292
  %v2395 = vunpack.c.l.b16 %v2293
  %v2396 = vunpack.c.l.b16 %v2294
  %v2397 = vunpack.c.l.b16 %v2295
  %v2398 = vpack.c.b16 %v2395, %v2394
  %v2399 = vpack.c.b16 %v2397, %v2396
  %v2403 = vsel %vm148, %v2383, 0
  %v2406 = vsel %vm148, %v2384, 0
  %v2409 = vsel %vm148, %v2385, 0
  %2411 = vmatprep.subr.bf16.mxu0 0
  %2412 = vmatpush1.bf16.msra.mxu0 0
  %2413 = vmatprep.subr.bf16.mxu0 0
  %2414 = vmatpush1.bf16.msra.mxu0 0
  %2415 = vmatprep.subr.bf16.mxu0 0
  %2416 = vmatpush1.bf16.msra.mxu0 0
  %2417 = vmatprep.subr.bf16.mxu0 0
  %2418 = vmatpush1.bf16.msra.mxu0 0
  %2419 = vmatprep.subr.bf16.mxu0 0
  %2420 = vmatpush1.bf16.msra.mxu0 0
  %2421 = vmatprep.subr.bf16.mxu0 0
  %2422 = vmatpush1.bf16.msra.mxu0 0
  %2423 = vmatprep.subr.bf16.mxu0 0
  %2424 = vmatpush1.bf16.msra.mxu0 %v2399
  %2425 = vmatprep.subr.bf16.mxu0 0
  %2426 = vmatpush1.bf16.msra.mxu0 %v2398
  %2427 = vmatprep.subr.bf16.mxu0 0
  %2428 = vmatpush2.bf16.msra.mxu0 0
  %2429 = vmatprep.subr.bf16.mxu0 0
  %2430 = vmatpush2.bf16.msra.mxu0 0
  %2431 = vmatprep.subr.bf16.mxu0 0
  %2432 = vmatpush2.bf16.msra.mxu0 0
  %2433 = vmatprep.subr.bf16.mxu0 0
  %2434 = vmatpush2.bf16.msra.mxu0 0
  %2435 = vmatprep.subr.bf16.mxu0 0
  %2436 = vmatpush2.bf16.msra.mxu0 0
  %2437 = vmatprep.subr.bf16.mxu0 0
  %2438 = vmatpush2.bf16.msra.mxu0 0
  %2439 = vmatprep.subr.bf16.mxu0 0
  %2440 = vmatpush2.bf16.msra.mxu0 0
  %2441 = vmatprep.subr.bf16.mxu0 0
  %2442 = vmatpush2.bf16.msra.mxu0 0
  %2443 = vmatprep.mubr.bf16.mxu0 0
  %2444 = vmatmul.mubr.bf16.gmra.mxu0 %v2403
  %v2445 = vpop.f32.mrf.mxu0
  %v2446 = vadd.f32 %v2389, %v2445
  %v2447 = vpop.f32.mrf.mxu0
  %v2448 = vpop.f32.mrf.mxu0
  %v2449 = vadd.f32 %v2389, %v2448
  %v2450 = vpop.f32.mrf.mxu0
  %2451 = vmatprep.mubr.bf16.mxu0 0
  %2452 = vmatmul.mubr.bf16.gmra.mxu0 %v2406
  %v2453 = vpop.f32.mrf.mxu0
  %v2454 = vadd.f32 %v2389, %v2453
  %v2455 = vpop.f32.mrf.mxu0
  %v2456 = vpop.f32.mrf.mxu0
  %v2457 = vadd.f32 %v2389, %v2456
  %v2458 = vpop.f32.mrf.mxu0
  %2459 = vmatprep.mubr.bf16.mxu0 0
  %2460 = vmatmul.mubr.bf16.gmra.mxu0 %v2409
  %v2461 = vpop.f32.mrf.mxu0
  %v2462 = vadd.f32 %v2389, %v2461
  %v2463 = vpop.f32.mrf.mxu0
  %v2464 = vpop.f32.mrf.mxu0
  %v2465 = vpop.f32.mrf.mxu0
  %2466 = vdwg.mxu0
  %v2467 = vpack.c.bf16 %v2449, %v2446
  %v2468 = vpack.c.bf16 %v2457, %v2454
  %v2469 = vpack.c.bf16 %v2462, %v2462
  %2473 = vrot.lane.b32.xlu0 %v2467, 96
  %v2474 = vpop.permute.xlu0 %2473
  %2475 = vrot.lane.b32.xlu0 %v2468, 96
  %v2476 = vpop.permute.xlu0 %2475
  %2477 = vrot.lane.b32.xlu0 %v2469, 96
  %v2478 = vpop.permute.xlu0 %2477
  %v2480 = vsel %vm329, %v2467, 0
  %v2483 = vsel %vm329, %v2468, 0
  %v2486 = vsel %vm329, %v2469, 0
  %v2489 = vsel %vm329, %v2474, 0
  %v2492 = vsel %vm329, %v2476, 0
  %v2495 = vsel %vm329, %v2478, 0
  %2497 = vmatprep.subr.bf16.mxu0 0
  %2498 = vmatpush1.bf16.xpose.msra.mxu0 0
  %2499 = vmatprep.subr.bf16.mxu0 0
  %2500 = vmatpush1.bf16.xpose.msra.mxu0 0
  %2501 = vmatprep.subr.bf16.mxu0 0
  %2502 = vmatpush1.bf16.xpose.msra.mxu0 0
  %2503 = vmatprep.subr.bf16.mxu0 0
  %2504 = vmatpush1.bf16.xpose.msra.mxu0 0
  %2505 = vmatprep.subr.bf16.mxu0 0
  %2506 = vmatpush1.bf16.xpose.msra.mxu0 0
  %2507 = vmatprep.subr.bf16.mxu0 0
  %2508 = vmatpush1.bf16.xpose.msra.mxu0 %v2495
  %2509 = vmatprep.subr.bf16.mxu0 0
  %2510 = vmatpush1.bf16.xpose.msra.mxu0 %v2492
  %2511 = vmatprep.subr.bf16.mxu0 0
  %2512 = vmatpush1.bf16.xpose.msra.mxu0 %v2489
  %2513 = vmatprep.subr.bf16.mxu0 0
  %2514 = vmatpush2.bf16.xpose.msra.mxu0 0
  %2515 = vmatprep.subr.bf16.mxu0 0
  %2516 = vmatpush2.bf16.xpose.msra.mxu0 0
  %2517 = vmatprep.subr.bf16.mxu0 0
  %2518 = vmatpush2.bf16.xpose.msra.mxu0 0
  %2519 = vmatprep.subr.bf16.mxu0 0
  %2520 = vmatpush2.bf16.xpose.msra.mxu0 0
  %2521 = vmatprep.subr.bf16.mxu0 0
  %2522 = vmatpush2.bf16.xpose.msra.mxu0 0
  %2523 = vmatprep.subr.bf16.mxu0 0
  %2524 = vmatpush2.bf16.xpose.msra.mxu0 0
  %2525 = vmatprep.subr.bf16.mxu0 0
  %2526 = vmatpush2.bf16.xpose.msra.mxu0 0
  %2527 = vmatprep.subr.bf16.mxu0 0
  %2528 = vmatpush2.bf16.xpose.msra.mxu0 0
  %2529 = vmatprep.mubr.bf16.mxu0 0
  %2530 = vmatmul.mubr.bf16.gmra.mxu0 %v2480
  %v2531 = vpop.f32.mrf.mxu0
  %v2532 = vadd.f32 %v133, %v2531
  %v2533 = vpop.f32.mrf.mxu0
  %v2534 = vpop.f32.mrf.mxu0
  %v2535 = vadd.f32 %v134, %v2534
  %v2536 = vpop.f32.mrf.mxu0
  %2537 = vmatprep.mubr.bf16.mxu0 0
  %2538 = vmatmul.mubr.bf16.gmra.mxu0 %v2483
  %v2539 = vpop.f32.mrf.mxu0
  %v2540 = vadd.f32 %v135, %v2539
  %v2541 = vpop.f32.mrf.mxu0
  %v2542 = vpop.f32.mrf.mxu0
  %v2543 = vadd.f32 %v136, %v2542
  %v2544 = vpop.f32.mrf.mxu0
  %2545 = vmatprep.mubr.bf16.mxu0 0
  %2546 = vmatmul.mubr.bf16.gmra.mxu0 %v2486
  %v2547 = vpop.f32.mrf.mxu0
  %v2548 = vadd.f32 %v137, %v2547
  %v2549 = vpop.f32.mrf.mxu0
  %v2550 = vpop.f32.mrf.mxu0
  %v2551 = vpop.f32.mrf.mxu0
  %2552 = vdwg.mxu0
  %v2553 = vsel %vm404, %v2532, -inf
  %2554 = vmax.xlane.f32.xlu0 %v2553
  %v2555 = vpop.xlane.xlu0 %2554
  %v2556 = vsel %vm404, %v2535, -inf
  %2557 = vmax.xlane.f32.xlu0 %v2556
  %v2558 = vpop.xlane.xlu0 %2557
  %v2559 = vsel %vm404, %v2540, -inf
  %2560 = vmax.xlane.f32.xlu0 %v2559
  %v2561 = vpop.xlane.xlu0 %2560
  %v2562 = vsel %vm404, %v2543, -inf
  %2563 = vmax.xlane.f32.xlu0 %v2562
  %v2564 = vpop.xlane.xlu0 %2563
  %v2565 = vsel %vm404, %v2548, -inf
  %2566 = vmax.xlane.f32.xlu0 %v2565
  %v2567 = vpop.xlane.xlu0 %2566
  %v2568 = vsub.f32 %v2532, %v2555
  %v2569 = vsub.f32 %v2535, %v2558
  %v2570 = vsub.f32 %v2540, %v2561
  %v2571 = vsub.f32 %v2543, %v2564
  %v2572 = vsub.f32 %v2548, %v2567
  %v2573 = vmul.f32 %v2568, 1.442695
  %v2574 = vpow.pop %v2573
  %v2575 = vmul.f32 %v2569, 1.442695
  %v2576 = vpow.pop %v2575
  %v2577 = vmul.f32 %v2570, 1.442695
  %v2578 = vpow.pop %v2577
  %v2579 = vmul.f32 %v2571, 1.442695
  %v2580 = vpow.pop %v2579
  %v2581 = vmul.f32 %v2572, 1.442695
  %v2582 = vpow.pop %v2581
  %v2583 = vsel %vm404, %v2574, 0.0
  %2584 = vadd.xlane.f32.xlu0 %v2583
  %v2585 = vpop.xlane.xlu0 %2584
  %v2586 = vsel %vm404, %v2576, 0.0
  %2587 = vadd.xlane.f32.xlu0 %v2586
  %v2588 = vpop.xlane.xlu0 %2587
  %v2589 = vsel %vm404, %v2578, 0.0
  %2590 = vadd.xlane.f32.xlu0 %v2589
  %v2591 = vpop.xlane.xlu0 %2590
  %v2592 = vsel %vm404, %v2580, 0.0
  %2593 = vadd.xlane.f32.xlu0 %v2592
  %v2594 = vpop.xlane.xlu0 %2593
  %v2595 = vsel %vm404, %v2582, 0.0
  %2596 = vadd.xlane.f32.xlu0 %v2595
  %v2597 = vpop.xlane.xlu0 %2596
  %v2598 = vpack.c.bf16 %v2576, %v2574
  %v2599 = vpack.c.bf16 %v2580, %v2578
  %v2600 = vpack.c.bf16 %v2582, %v2582
  %2601 = vrot.lane.b32.xlu0 %v2467, 64
  %v2602 = vpop.permute.xlu0 %2601
  %2603 = vrot.lane.b32.xlu0 %v2468, 64
  %v2604 = vpop.permute.xlu0 %2603
  %2605 = vrot.lane.b32.xlu0 %v2469, 64
  %v2606 = vpop.permute.xlu0 %2605
  %v2610 = vsel %vm404, %v2598, 0
  %v2613 = vsel %vm404, %v2599, 0
  %v2616 = vsel %vm404, %v2600, 0
  %v2619 = vsel %vm470, %v2606, 0
  %2621 = vmatprep.subr.bf16.mxu0 0
  %2622 = vmatpush1.bf16.msra.mxu0 0
  %2623 = vmatprep.subr.bf16.mxu0 0
  %2624 = vmatpush1.bf16.msra.mxu0 0
  %2625 = vmatprep.subr.bf16.mxu0 0
  %2626 = vmatpush1.bf16.msra.mxu0 0
  %2627 = vmatprep.subr.bf16.mxu0 0
  %2628 = vmatpush1.bf16.msra.mxu0 0
  %2629 = vmatprep.subr.bf16.mxu0 0
  %2630 = vmatpush1.bf16.msra.mxu0 0
  %2631 = vmatprep.subr.bf16.mxu0 0
  %2632 = vmatpush1.bf16.msra.mxu0 %v2619
  %2633 = vmatprep.subr.bf16.mxu0 0
  %2634 = vmatpush1.bf16.msra.mxu0 %v2604
  %2635 = vmatprep.subr.bf16.mxu0 0
  %2636 = vmatpush1.bf16.msra.mxu0 %v2602
  %2637 = vmatprep.subr.bf16.mxu0 0
  %2638 = vmatpush2.bf16.msra.mxu0 0
  %2639 = vmatprep.subr.bf16.mxu0 0
  %2640 = vmatpush2.bf16.msra.mxu0 0
  %2641 = vmatprep.subr.bf16.mxu0 0
  %2642 = vmatpush2.bf16.msra.mxu0 0
  %2643 = vmatprep.subr.bf16.mxu0 0
  %2644 = vmatpush2.bf16.msra.mxu0 0
  %2645 = vmatprep.subr.bf16.mxu0 0
  %2646 = vmatpush2.bf16.msra.mxu0 0
  %2647 = vmatprep.subr.bf16.mxu0 0
  %2648 = vmatpush2.bf16.msra.mxu0 0
  %2649 = vmatprep.subr.bf16.mxu0 0
  %2650 = vmatpush2.bf16.msra.mxu0 0
  %2651 = vmatprep.subr.bf16.mxu0 0
  %2652 = vmatpush2.bf16.msra.mxu0 0
  %2653 = vmatprep.mubr.bf16.mxu0 0
  %2654 = vmatmul.mubr.bf16.gmra.mxu0 %v2610
  %v2655 = vpop.f32.mrf.mxu0
  %v2656 = vadd.f32 0.0, %v2655
  %v2657 = vpop.f32.mrf.mxu0
  %v2658 = vpop.f32.mrf.mxu0
  %v2659 = vadd.f32 0.0, %v2658
  %v2660 = vpop.f32.mrf.mxu0
  %2661 = vmatprep.mubr.bf16.mxu0 0
  %2662 = vmatmul.mubr.bf16.gmra.mxu0 %v2613
  %v2663 = vpop.f32.mrf.mxu0
  %v2664 = vadd.f32 0.0, %v2663
  %v2665 = vpop.f32.mrf.mxu0
  %v2666 = vpop.f32.mrf.mxu0
  %v2667 = vadd.f32 0.0, %v2666
  %v2668 = vpop.f32.mrf.mxu0
  %2669 = vmatprep.mubr.bf16.mxu0 0
  %2670 = vmatmul.mubr.bf16.gmra.mxu0 %v2616
  %v2671 = vpop.f32.mrf.mxu0
  %v2672 = vadd.f32 0.0, %v2671
  %v2673 = vpop.f32.mrf.mxu0
  %v2674 = vpop.f32.mrf.mxu0
  %v2675 = vpop.f32.mrf.mxu0
  %2676 = vdwg.mxu0
  %v2677 = vrcp.pop %v2585
  %v2678 = vrcp.pop %v2588
  %v2679 = vrcp.pop %v2591
  %v2680 = vrcp.pop %v2594
  %v2681 = vrcp.pop %v2597
  %v2682 = vmul.f32 %v2656, %v2677
  %v2683 = vmul.f32 %v2659, %v2678
  %v2684 = vmul.f32 %v2664, %v2679
  %v2685 = vmul.f32 %v2667, %v2680
  %v2686 = vmul.f32 %v2672, %v2681
  %2687 = vrot.lane.b32.xlu0 %v2467, 112
  %v2688 = vpop.permute.xlu0 %2687
  %2689 = vrot.lane.b32.xlu0 %v2468, 112
  %v2690 = vpop.permute.xlu0 %2689
  %2691 = vrot.lane.b32.xlu0 %v2469, 112
  %v2692 = vpop.permute.xlu0 %2691
  %2693 = vrot.lane.b32.xlu0 %v2467, 80
  %v2694 = vpop.permute.xlu0 %2693
  %2695 = vrot.lane.b32.xlu0 %v2468, 80
  %v2696 = vpop.permute.xlu0 %2695
  %2697 = vrot.lane.b32.xlu0 %v2469, 80
  %v2698 = vpop.permute.xlu0 %2697
  %v2700 = vsel %vm329, %v2688, 0
  %v2703 = vsel %vm329, %v2690, 0
  %v2706 = vsel %vm329, %v2692, 0
  %v2709 = vsel %vm329, %v2694, 0
  %v2712 = vsel %vm329, %v2696, 0
  %v2715 = vsel %vm329, %v2698, 0
  %2717 = vmatprep.subr.bf16.mxu0 0
  %2718 = vmatpush1.bf16.xpose.msra.mxu0 0
  %2719 = vmatprep.subr.bf16.mxu0 0
  %2720 = vmatpush1.bf16.xpose.msra.mxu0 0
  %2721 = vmatprep.subr.bf16.mxu0 0
  %2722 = vmatpush1.bf16.xpose.msra.mxu0 0
  %2723 = vmatprep.subr.bf16.mxu0 0
  %2724 = vmatpush1.bf16.xpose.msra.mxu0 0
  %2725 = vmatprep.subr.bf16.mxu0 0
  %2726 = vmatpush1.bf16.xpose.msra.mxu0 0
  %2727 = vmatprep.subr.bf16.mxu0 0
  %2728 = vmatpush1.bf16.xpose.msra.mxu0 %v2715
  %2729 = vmatprep.subr.bf16.mxu0 0
  %2730 = vmatpush1.bf16.xpose.msra.mxu0 %v2712
  %2731 = vmatprep.subr.bf16.mxu0 0
  %2732 = vmatpush1.bf16.xpose.msra.mxu0 %v2709
  %2733 = vmatprep.subr.bf16.mxu0 0
  %2734 = vmatpush2.bf16.xpose.msra.mxu0 0
  %2735 = vmatprep.subr.bf16.mxu0 0
  %2736 = vmatpush2.bf16.xpose.msra.mxu0 0
  %2737 = vmatprep.subr.bf16.mxu0 0
  %2738 = vmatpush2.bf16.xpose.msra.mxu0 0
  %2739 = vmatprep.subr.bf16.mxu0 0
  %2740 = vmatpush2.bf16.xpose.msra.mxu0 0
  %2741 = vmatprep.subr.bf16.mxu0 0
  %2742 = vmatpush2.bf16.xpose.msra.mxu0 0
  %2743 = vmatprep.subr.bf16.mxu0 0
  %2744 = vmatpush2.bf16.xpose.msra.mxu0 0
  %2745 = vmatprep.subr.bf16.mxu0 0
  %2746 = vmatpush2.bf16.xpose.msra.mxu0 0
  %2747 = vmatprep.subr.bf16.mxu0 0
  %2748 = vmatpush2.bf16.xpose.msra.mxu0 0
  %2749 = vmatprep.mubr.bf16.mxu0 0
  %2750 = vmatmul.mubr.bf16.gmra.mxu0 %v2700
  %v2751 = vpop.f32.mrf.mxu0
  %v2752 = vadd.f32 %v133, %v2751
  %v2753 = vpop.f32.mrf.mxu0
  %v2754 = vpop.f32.mrf.mxu0
  %v2755 = vadd.f32 %v134, %v2754
  %v2756 = vpop.f32.mrf.mxu0
  %2757 = vmatprep.mubr.bf16.mxu0 0
  %2758 = vmatmul.mubr.bf16.gmra.mxu0 %v2703
  %v2759 = vpop.f32.mrf.mxu0
  %v2760 = vadd.f32 %v135, %v2759
  %v2761 = vpop.f32.mrf.mxu0
  %v2762 = vpop.f32.mrf.mxu0
  %v2763 = vadd.f32 %v136, %v2762
  %v2764 = vpop.f32.mrf.mxu0
  %2765 = vmatprep.mubr.bf16.mxu0 0
  %2766 = vmatmul.mubr.bf16.gmra.mxu0 %v2706
  %v2767 = vpop.f32.mrf.mxu0
  %v2768 = vadd.f32 %v137, %v2767
  %v2769 = vpop.f32.mrf.mxu0
  %v2770 = vpop.f32.mrf.mxu0
  %v2771 = vpop.f32.mrf.mxu0
  %2772 = vdwg.mxu0
  %v2773 = vsel %vm404, %v2752, -inf
  %2774 = vmax.xlane.f32.xlu0 %v2773
  %v2775 = vpop.xlane.xlu0 %2774
  %v2776 = vsel %vm404, %v2755, -inf
  %2777 = vmax.xlane.f32.xlu0 %v2776
  %v2778 = vpop.xlane.xlu0 %2777
  %v2779 = vsel %vm404, %v2760, -inf
  %2780 = vmax.xlane.f32.xlu0 %v2779
  %v2781 = vpop.xlane.xlu0 %2780
  %v2782 = vsel %vm404, %v2763, -inf
  %2783 = vmax.xlane.f32.xlu0 %v2782
  %v2784 = vpop.xlane.xlu0 %2783
  %v2785 = vsel %vm404, %v2768, -inf
  %2786 = vmax.xlane.f32.xlu0 %v2785
  %v2787 = vpop.xlane.xlu0 %2786
  %v2788 = vsub.f32 %v2752, %v2775
  %v2789 = vsub.f32 %v2755, %v2778
  %v2790 = vsub.f32 %v2760, %v2781
  %v2791 = vsub.f32 %v2763, %v2784
  %v2792 = vsub.f32 %v2768, %v2787
  %v2793 = vmul.f32 %v2788, 1.442695
  %v2794 = vpow.pop %v2793
  %v2795 = vmul.f32 %v2789, 1.442695
  %v2796 = vpow.pop %v2795
  %v2797 = vmul.f32 %v2790, 1.442695
  %v2798 = vpow.pop %v2797
  %v2799 = vmul.f32 %v2791, 1.442695
  %v2800 = vpow.pop %v2799
  %v2801 = vmul.f32 %v2792, 1.442695
  %v2802 = vpow.pop %v2801
  %v2803 = vsel %vm404, %v2794, 0.0
  %2804 = vadd.xlane.f32.xlu0 %v2803
  %v2805 = vpop.xlane.xlu0 %2804
  %v2806 = vsel %vm404, %v2796, 0.0
  %2807 = vadd.xlane.f32.xlu0 %v2806
  %v2808 = vpop.xlane.xlu0 %2807
  %v2809 = vsel %vm404, %v2798, 0.0
  %2810 = vadd.xlane.f32.xlu0 %v2809
  %v2811 = vpop.xlane.xlu0 %2810
  %v2812 = vsel %vm404, %v2800, 0.0
  %2813 = vadd.xlane.f32.xlu0 %v2812
  %v2814 = vpop.xlane.xlu0 %2813
  %v2815 = vsel %vm404, %v2802, 0.0
  %2816 = vadd.xlane.f32.xlu0 %v2815
  %v2817 = vpop.xlane.xlu0 %2816
  %v2818 = vpack.c.bf16 %v2796, %v2794
  %v2819 = vpack.c.bf16 %v2800, %v2798
  %v2820 = vpack.c.bf16 %v2802, %v2802
  %2821 = vrot.lane.b32.xlu0 %v2467, 48
  %v2822 = vpop.permute.xlu0 %2821
  %2823 = vrot.lane.b32.xlu0 %v2468, 48
  %v2824 = vpop.permute.xlu0 %2823
  %2825 = vrot.lane.b32.xlu0 %v2469, 48
  %v2826 = vpop.permute.xlu0 %2825
  %v2830 = vsel %vm404, %v2818, 0
  %v2833 = vsel %vm404, %v2819, 0
  %v2836 = vsel %vm404, %v2820, 0
  %v2839 = vsel %vm470, %v2826, 0
  %2841 = vmatprep.subr.bf16.mxu0 0
  %2842 = vmatpush1.bf16.msra.mxu0 0
  %2843 = vmatprep.subr.bf16.mxu0 0
  %2844 = vmatpush1.bf16.msra.mxu0 0
  %2845 = vmatprep.subr.bf16.mxu0 0
  %2846 = vmatpush1.bf16.msra.mxu0 0
  %2847 = vmatprep.subr.bf16.mxu0 0
  %2848 = vmatpush1.bf16.msra.mxu0 0
  %2849 = vmatprep.subr.bf16.mxu0 0
  %2850 = vmatpush1.bf16.msra.mxu0 0
  %2851 = vmatprep.subr.bf16.mxu0 0
  %2852 = vmatpush1.bf16.msra.mxu0 %v2839
  %2853 = vmatprep.subr.bf16.mxu0 0
  %2854 = vmatpush1.bf16.msra.mxu0 %v2824
  %2855 = vmatprep.subr.bf16.mxu0 0
  %2856 = vmatpush1.bf16.msra.mxu0 %v2822
  %2857 = vmatprep.subr.bf16.mxu0 0
  %2858 = vmatpush2.bf16.msra.mxu0 0
  %2859 = vmatprep.subr.bf16.mxu0 0
  %2860 = vmatpush2.bf16.msra.mxu0 0
  %2861 = vmatprep.subr.bf16.mxu0 0
  %2862 = vmatpush2.bf16.msra.mxu0 0
  %2863 = vmatprep.subr.bf16.mxu0 0
  %2864 = vmatpush2.bf16.msra.mxu0 0
  %2865 = vmatprep.subr.bf16.mxu0 0
  %2866 = vmatpush2.bf16.msra.mxu0 0
  %2867 = vmatprep.subr.bf16.mxu0 0
  %2868 = vmatpush2.bf16.msra.mxu0 0
  %2869 = vmatprep.subr.bf16.mxu0 0
  %2870 = vmatpush2.bf16.msra.mxu0 0
  %2871 = vmatprep.subr.bf16.mxu0 0
  %2872 = vmatpush2.bf16.msra.mxu0 0
  %2873 = vmatprep.mubr.bf16.mxu0 0
  %2874 = vmatmul.mubr.bf16.gmra.mxu0 %v2830
  %v2875 = vpop.f32.mrf.mxu0
  %v2876 = vadd.f32 0.0, %v2875
  %v2877 = vpop.f32.mrf.mxu0
  %v2878 = vpop.f32.mrf.mxu0
  %v2879 = vadd.f32 0.0, %v2878
  %v2880 = vpop.f32.mrf.mxu0
  %2881 = vmatprep.mubr.bf16.mxu0 0
  %2882 = vmatmul.mubr.bf16.gmra.mxu0 %v2833
  %v2883 = vpop.f32.mrf.mxu0
  %v2884 = vadd.f32 0.0, %v2883
  %v2885 = vpop.f32.mrf.mxu0
  %v2886 = vpop.f32.mrf.mxu0
  %v2887 = vadd.f32 0.0, %v2886
  %v2888 = vpop.f32.mrf.mxu0
  %2889 = vmatprep.mubr.bf16.mxu0 0
  %2890 = vmatmul.mubr.bf16.gmra.mxu0 %v2836
  %v2891 = vpop.f32.mrf.mxu0
  %v2892 = vadd.f32 0.0, %v2891
  %v2893 = vpop.f32.mrf.mxu0
  %v2894 = vpop.f32.mrf.mxu0
  %v2895 = vpop.f32.mrf.mxu0
  %2896 = vdwg.mxu0
  %v2897 = vrcp.pop %v2805
  %v2898 = vrcp.pop %v2808
  %v2899 = vrcp.pop %v2811
  %v2900 = vrcp.pop %v2814
  %v2901 = vrcp.pop %v2817
  %v2902 = vmul.f32 %v2876, %v2897
  %v2903 = vmul.f32 %v2879, %v2898
  %v2904 = vmul.f32 %v2884, %v2899
  %v2905 = vmul.f32 %v2887, %v2900
  %v2906 = vmul.f32 %v2892, %v2901
  %2912 = vrot.lane.b32.xlu0 %v2902, 16
  %v2913 = vpop.permute.xlu0 %2912
  %2914 = vrot.lane.b32.xlu0 %v2903, 16
  %v2915 = vpop.permute.xlu0 %2914
  %2916 = vrot.lane.b32.xlu0 %v2904, 16
  %v2917 = vpop.permute.xlu0 %2916
  %2918 = vrot.lane.b32.xlu0 %v2905, 16
  %v2919 = vpop.permute.xlu0 %2918
  %2920 = vrot.lane.b32.xlu0 %v2906, 16
  %v2921 = vpop.permute.xlu0 %2920
  %v2927 = vsel %vm329, %v2682, %v2913
  %v2928 = vsel %vm329, %v2683, %v2915
  %v2929 = vsel %vm329, %v2684, %v2917
  %v2930 = vsel %vm329, %v2685, %v2919
  %v2931 = vsel %vm329, %v2686, %v2921
  %v2932 = vpack.c.bf16 %v2928, %v2927
  %v2933 = vpack.c.bf16 %v2930, %v2929
  %v2934 = vpack.c.bf16 %v2931, %v2931
  %2935 = vrot.lane.b32.xlu0 %v2398, 32
  %v2936 = vpop.permute.xlu0 %2935
  %2937 = vrot.lane.b32.xlu0 %v2399, 32
  %v2938 = vpop.permute.xlu0 %2937
  %v2942 = vsel %vm148, %v2932, 0
  %v2945 = vsel %vm148, %v2933, 0
  %v2948 = vsel %vm148, %v2934, 0
  %2950 = vmatprep.subr.bf16.mxu0 0
  %2951 = vmatpush1.bf16.msra.mxu0 0
  %2952 = vmatprep.subr.bf16.mxu0 0
  %2953 = vmatpush1.bf16.msra.mxu0 0
  %2954 = vmatprep.subr.bf16.mxu0 0
  %2955 = vmatpush1.bf16.msra.mxu0 0
  %2956 = vmatprep.subr.bf16.mxu0 0
  %2957 = vmatpush1.bf16.msra.mxu0 0
  %2958 = vmatprep.subr.bf16.mxu0 0
  %2959 = vmatpush1.bf16.msra.mxu0 0
  %2960 = vmatprep.subr.bf16.mxu0 0
  %2961 = vmatpush1.bf16.msra.mxu0 0
  %2962 = vmatprep.subr.bf16.mxu0 0
  %2963 = vmatpush1.bf16.msra.mxu0 %v2938
  %2964 = vmatprep.subr.bf16.mxu0 0
  %2965 = vmatpush1.bf16.msra.mxu0 %v2936
  %2966 = vmatprep.subr.bf16.mxu0 0
  %2967 = vmatpush2.bf16.msra.mxu0 0
  %2968 = vmatprep.subr.bf16.mxu0 0
  %2969 = vmatpush2.bf16.msra.mxu0 0
  %2970 = vmatprep.subr.bf16.mxu0 0
  %2971 = vmatpush2.bf16.msra.mxu0 0
  %2972 = vmatprep.subr.bf16.mxu0 0
  %2973 = vmatpush2.bf16.msra.mxu0 0
  %2974 = vmatprep.subr.bf16.mxu0 0
  %2975 = vmatpush2.bf16.msra.mxu0 0
  %2976 = vmatprep.subr.bf16.mxu0 0
  %2977 = vmatpush2.bf16.msra.mxu0 0
  %2978 = vmatprep.subr.bf16.mxu0 0
  %2979 = vmatpush2.bf16.msra.mxu0 0
  %2980 = vmatprep.subr.bf16.mxu0 0
  %2981 = vmatpush2.bf16.msra.mxu0 0
  %2982 = vmatprep.mubr.bf16.mxu0 0
  %2983 = vmatmul.mubr.bf16.gmra.mxu0 %v2942
  %v2984 = vpop.f32.mrf.mxu0
  %v2985 = vadd.f32 0.0, %v2984
  %v2986 = vpop.f32.mrf.mxu0
  %v2987 = vpop.f32.mrf.mxu0
  %v2988 = vadd.f32 0.0, %v2987
  %v2989 = vpop.f32.mrf.mxu0
  %2990 = vmatprep.mubr.bf16.mxu0 0
  %2991 = vmatmul.mubr.bf16.gmra.mxu0 %v2945
  %v2992 = vpop.f32.mrf.mxu0
  %v2993 = vadd.f32 0.0, %v2992
  %v2994 = vpop.f32.mrf.mxu0
  %v2995 = vpop.f32.mrf.mxu0
  %v2996 = vadd.f32 0.0, %v2995
  %v2997 = vpop.f32.mrf.mxu0
  %2998 = vmatprep.mubr.bf16.mxu0 0
  %2999 = vmatmul.mubr.bf16.gmra.mxu0 %v2948
  %v3000 = vpop.f32.mrf.mxu0
  %v3001 = vadd.f32 0.0, %v3000
  %v3002 = vpop.f32.mrf.mxu0
  %v3003 = vpop.f32.mrf.mxu0
  %v3004 = vpop.f32.mrf.mxu0
  %3005 = vdwg.mxu0
  %v3006 = vadd.f32 %v2286, %v2985
  %v3007 = vadd.f32 %v2287, %v2988
  %v3008 = vadd.f32 %v2288, %v2993
  %v3009 = vadd.f32 %v2289, %v2996
  %v3010 = vadd.f32 %v2290, %v3001
  %v3011 = vld [vmem:[%s6 + $0x12] sm:$0x1]
  %v3012 = vlaneseq
  %v3013 = vshrl.u32 %v3012, 7
  %v3014 = vsub.s32 0, %v3013
  %v3015 = vrot.slane %v3011, %v3014
  %v3016 = vadd.f32 %v3006, %v3015
  %v3017 = vadd.f32 %v3007, %v3015
  %v3018 = vadd.f32 %v3008, %v3015
  %v3019 = vadd.f32 %v3009, %v3015
  %v3020 = vadd.f32 %v3010, %v3015
  %v3021 = vld [vmem:[%s6 + $0xa] sm:$0x1]
  %v3022 = vld [vmem:[%s6 + $0xe] sm:$0x1]
  %v3023 = vsel %vm148, %v3016, 0.0
  %3024 = vadd.xlane.f32.xlu0 %v3023
  %v3025 = vpop.xlane.xlu0 %3024
  %v3026 = vsel %vm148, %v3017, 0.0
  %3027 = vadd.xlane.f32.xlu0 %v3026
  %v3028 = vpop.xlane.xlu0 %3027
  %v3029 = vsel %vm148, %v3018, 0.0
  %3030 = vadd.xlane.f32.xlu0 %v3029
  %v3031 = vpop.xlane.xlu0 %3030
  %v3032 = vsel %vm148, %v3019, 0.0
  %3033 = vadd.xlane.f32.xlu0 %v3032
  %v3034 = vpop.xlane.xlu0 %3033
  %v3035 = vsel %vm148, %v3020, 0.0
  %3036 = vadd.xlane.f32.xlu0 %v3035
  %v3037 = vpop.xlane.xlu0 %3036
  %v3038 = vmul.f32 %v3025, %v164
  %v3039 = vmul.f32 %v3028, %v164
  %v3040 = vmul.f32 %v3031, %v164
  %v3041 = vmul.f32 %v3034, %v164
  %v3042 = vmul.f32 %v3037, %v164
  %v3043 = vsub.f32 %v3016, %v3038
  %v3044 = vsub.f32 %v3017, %v3039
  %v3045 = vsub.f32 %v3018, %v3040
  %v3046 = vsub.f32 %v3019, %v3041
  %v3047 = vsub.f32 %v3020, %v3042
  %v3048 = vmul.f32 %v3043, %v3043
  %v3049 = vmul.f32 %v3044, %v3044
  %v3050 = vmul.f32 %v3045, %v3045
  %v3051 = vmul.f32 %v3046, %v3046
  %v3052 = vmul.f32 %v3047, %v3047
  %v3053 = vsel %vm148, %v3048, 0.0
  %3054 = vadd.xlane.f32.xlu0 %v3053
  %v3055 = vpop.xlane.xlu0 %3054
  %v3056 = vsel %vm148, %v3049, 0.0
  %3057 = vadd.xlane.f32.xlu0 %v3056
  %v3058 = vpop.xlane.xlu0 %3057
  %v3059 = vsel %vm148, %v3050, 0.0
  %3060 = vadd.xlane.f32.xlu0 %v3059
  %v3061 = vpop.xlane.xlu0 %3060
  %v3062 = vsel %vm148, %v3051, 0.0
  %3063 = vadd.xlane.f32.xlu0 %v3062
  %v3064 = vpop.xlane.xlu0 %3063
  %v3065 = vsel %vm148, %v3052, 0.0
  %3066 = vadd.xlane.f32.xlu0 %v3065
  %v3067 = vpop.xlane.xlu0 %3066
  %v3068 = vmul.f32 %v3055, %v164
  %v3069 = vmul.f32 %v3058, %v164
  %v3070 = vmul.f32 %v3061, %v164
  %v3071 = vmul.f32 %v3064, %v164
  %v3072 = vmul.f32 %v3067, %v164
  %v3073 = vadd.f32 %v3068, 1e-06
  %v3074 = vadd.f32 %v3069, 1e-06
  %v3075 = vadd.f32 %v3070, 1e-06
  %v3076 = vadd.f32 %v3071, 1e-06
  %v3077 = vadd.f32 %v3072, 1e-06
  %v3078 = vrsqrt.pop %v3073
  %v3079 = vrsqrt.pop %v3074
  %v3080 = vrsqrt.pop %v3075
  %v3081 = vrsqrt.pop %v3076
  %v3082 = vrsqrt.pop %v3077
  %v3083 = vmul.f32 %v3043, %v3078
  %v3084 = vmul.f32 %v3044, %v3079
  %v3085 = vmul.f32 %v3045, %v3080
  %v3086 = vmul.f32 %v3046, %v3081
  %v3087 = vmul.f32 %v3047, %v3082
  %v3088 = vlaneseq
  %v3089 = vshrl.u32 %v3088, 7
  %v3090 = vsub.s32 0, %v3089
  %v3091 = vrot.slane %v3021, %v3090
  %v3092 = vmul.f32 %v3083, %v3091
  %v3093 = vmul.f32 %v3084, %v3091
  %v3094 = vmul.f32 %v3085, %v3091
  %v3095 = vmul.f32 %v3086, %v3091
  %v3096 = vmul.f32 %v3087, %v3091
  %v3097 = vlaneseq
  %v3098 = vshrl.u32 %v3097, 7
  %v3099 = vsub.s32 0, %v3098
  %v3100 = vrot.slane %v3022, %v3099
  %v3101 = vadd.f32 %v3092, %v3100
  %v3102 = vadd.f32 %v3093, %v3100
  %v3103 = vadd.f32 %v3094, %v3100
  %v3104 = vadd.f32 %v3095, %v3100
  %v3105 = vadd.f32 %v3096, %v3100
  %v3106 = vpack.c.bf16 %v3102, %v3101
  %v3107 = vpack.c.bf16 %v3104, %v3103
  %v3108 = vpack.c.bf16 %v3105, %v3105
  %v3109 = vlaneseq
  %v3110 = vshrl.u32 %v3109, 7
  %v3111 = vsub.s32 0, %v3110
  %v3112 = vrot.slane %v2297, %v3111
  %v3113 = vunpack.c.h.b16 %v2292
  %v3114 = vunpack.c.h.b16 %v2293
  %v3115 = vunpack.c.h.b16 %v2294
  %v3116 = vunpack.c.h.b16 %v2295
  %v3117 = vpack.c.b16 %v3114, %v3113
  %v3118 = vpack.c.b16 %v3116, %v3115
  %v3122 = vsel %vm148, %v3106, 0
  %v3125 = vsel %vm148, %v3107, 0
  %v3128 = vsel %vm148, %v3108, 0
  %3130 = vmatprep.subr.bf16.mxu0 0
  %3131 = vmatpush1.bf16.msra.mxu0 0
  %3132 = vmatprep.subr.bf16.mxu0 0
  %3133 = vmatpush1.bf16.msra.mxu0 0
  %3134 = vmatprep.subr.bf16.mxu0 0
  %3135 = vmatpush1.bf16.msra.mxu0 0
  %3136 = vmatprep.subr.bf16.mxu0 0
  %3137 = vmatpush1.bf16.msra.mxu0 0
  %3138 = vmatprep.subr.bf16.mxu0 0
  %3139 = vmatpush1.bf16.msra.mxu0 0
  %3140 = vmatprep.subr.bf16.mxu0 0
  %3141 = vmatpush1.bf16.msra.mxu0 0
  %3142 = vmatprep.subr.bf16.mxu0 0
  %3143 = vmatpush1.bf16.msra.mxu0 %v3118
  %3144 = vmatprep.subr.bf16.mxu0 0
  %3145 = vmatpush1.bf16.msra.mxu0 %v3117
  %3146 = vmatprep.subr.bf16.mxu0 0
  %3147 = vmatpush2.bf16.msra.mxu0 0
  %3148 = vmatprep.subr.bf16.mxu0 0
  %3149 = vmatpush2.bf16.msra.mxu0 0
  %3150 = vmatprep.subr.bf16.mxu0 0
  %3151 = vmatpush2.bf16.msra.mxu0 0
  %3152 = vmatprep.subr.bf16.mxu0 0
  %3153 = vmatpush2.bf16.msra.mxu0 0
  %3154 = vmatprep.subr.bf16.mxu0 0
  %3155 = vmatpush2.bf16.msra.mxu0 0
  %3156 = vmatprep.subr.bf16.mxu0 0
  %3157 = vmatpush2.bf16.msra.mxu0 0
  %3158 = vmatprep.subr.bf16.mxu0 0
  %3159 = vmatpush2.bf16.msra.mxu0 0
  %3160 = vmatprep.subr.bf16.mxu0 0
  %3161 = vmatpush2.bf16.msra.mxu0 0
  %3162 = vmatprep.mubr.bf16.mxu0 0
  %3163 = vmatmul.mubr.bf16.gmra.mxu0 %v3122
  %v3164 = vpop.f32.mrf.mxu0
  %v3165 = vadd.f32 %v3112, %v3164
  %v3166 = vpop.f32.mrf.mxu0
  %v3167 = vpop.f32.mrf.mxu0
  %v3168 = vadd.f32 %v3112, %v3167
  %v3169 = vpop.f32.mrf.mxu0
  %3170 = vmatprep.mubr.bf16.mxu0 0
  %3171 = vmatmul.mubr.bf16.gmra.mxu0 %v3125
  %v3172 = vpop.f32.mrf.mxu0
  %v3173 = vadd.f32 %v3112, %v3172
  %v3174 = vpop.f32.mrf.mxu0
  %v3175 = vpop.f32.mrf.mxu0
  %v3176 = vadd.f32 %v3112, %v3175
  %v3177 = vpop.f32.mrf.mxu0
  %3178 = vmatprep.mubr.bf16.mxu0 0
  %3179 = vmatmul.mubr.bf16.gmra.mxu0 %v3128
  %v3180 = vpop.f32.mrf.mxu0
  %v3181 = vadd.f32 %v3112, %v3180
  %v3182 = vpop.f32.mrf.mxu0
  %v3183 = vpop.f32.mrf.mxu0
  %v3184 = vpop.f32.mrf.mxu0
  %3185 = vdwg.mxu0
  %v3186 = vmul.f32 %v3165, 0.5
  %v3187 = vmul.f32 %v3168, 0.5
  %v3188 = vmul.f32 %v3173, 0.5
  %v3189 = vmul.f32 %v3176, 0.5
  %v3190 = vmul.f32 %v3181, 0.5
  %v3191 = vmul.f32 %v3165, 0.044715
  %v3192 = vmul.f32 %v3168, 0.044715
  %v3193 = vmul.f32 %v3173, 0.044715
  %v3194 = vmul.f32 %v3176, 0.044715
  %v3195 = vmul.f32 %v3181, 0.044715
  %v3196 = vmul.f32 %v3191, %v3165
  %v3197 = vmul.f32 %v3192, %v3168
  %v3198 = vmul.f32 %v3193, %v3173
  %v3199 = vmul.f32 %v3194, %v3176
  %v3200 = vmul.f32 %v3195, %v3181
  %v3201 = vmul.f32 %v3196, %v3165
  %v3202 = vmul.f32 %v3197, %v3168
  %v3203 = vmul.f32 %v3198, %v3173
  %v3204 = vmul.f32 %v3199, %v3176
  %v3205 = vmul.f32 %v3200, %v3181
  %v3206 = vadd.f32 %v3165, %v3201
  %v3207 = vadd.f32 %v3168, %v3202
  %v3208 = vadd.f32 %v3173, %v3203
  %v3209 = vadd.f32 %v3176, %v3204
  %v3210 = vadd.f32 %v3181, %v3205
  %v3211 = vmul.f32 %v3206, 0.7978846
  %v3212 = vmul.f32 %v3207, 0.7978846
  %v3213 = vmul.f32 %v3208, 0.7978846
  %v3214 = vmul.f32 %v3209, 0.7978846
  %v3215 = vmul.f32 %v3210, 0.7978846
  %v3216 = vtanh.pop %v3211
  %v3217 = vtanh.pop %v3212
  %v3218 = vtanh.pop %v3213
  %v3219 = vtanh.pop %v3214
  %v3220 = vtanh.pop %v3215
  %v3221 = vadd.f32 %v3216, 1.0
  %v3222 = vadd.f32 %v3217, 1.0
  %v3223 = vadd.f32 %v3218, 1.0
  %v3224 = vadd.f32 %v3219, 1.0
  %v3225 = vadd.f32 %v3220, 1.0
  %v3226 = vmul.f32 %v3186, %v3221
  %v3227 = vmul.f32 %v3187, %v3222
  %v3228 = vmul.f32 %v3188, %v3223
  %v3229 = vmul.f32 %v3189, %v3224
  %v3230 = vmul.f32 %v3190, %v3225
  %v3231 = vpack.c.bf16 %v3227, %v3226
  %v3232 = vpack.c.bf16 %v3229, %v3228
  %v3233 = vpack.c.bf16 %v3230, %v3230
  %s3234 = scalar_lea.vmem %s5, 128
  %v3235 = vld [vmem:[%s3234] sm:$0xf]
  %v3236 = vld [vmem:[%s3234 + $0x4] sm:$0xf]
  %v3237 = vld [vmem:[%s3234 + $0x8] sm:$0xf]
  %v3238 = vld [vmem:[%s3234 + $0xc] sm:$0xf]
  %v3239 = vld [vmem:[%s3234 + $0x10] sm:$0xf]
  %v3240 = vld [vmem:[%s3234 + $0x14] sm:$0xf]
  %v3241 = vld [vmem:[%s3234 + $0x18] sm:$0xf]
  %v3242 = vld [vmem:[%s3234 + $0x1c] sm:$0xf]
  %v3243 = vld [vmem:[%s3234 + $0x20] sm:$0xf]
  %v3244 = vld [vmem:[%s3234 + $0x24] sm:$0xf]
  %v3245 = vld [vmem:[%s3234 + $0x28] sm:$0xf]
  %v3246 = vld [vmem:[%s3234 + $0x2c] sm:$0xf]
  %v3247 = vld [vmem:[%s3234 + $0x30] sm:$0xf]
  %v3248 = vld [vmem:[%s3234 + $0x34] sm:$0xf]
  %v3249 = vld [vmem:[%s3234 + $0x38] sm:$0xf]
  %v3250 = vld [vmem:[%s3234 + $0x3c] sm:$0xf]
  %v3251 = vld [vmem:[%s6 + $0x16] sm:$0x1]
  %v3252 = vlaneseq
  %v3253 = vshrl.u32 %v3252, 7
  %v3254 = vsub.s32 0, %v3253
  %v3255 = vrot.slane %v3251, %v3254
  %v3272 = vunpack.c.l.b16 %v3235
  %v3273 = vunpack.c.l.b16 %v3236
  %v3274 = vunpack.c.l.b16 %v3237
  %v3275 = vunpack.c.l.b16 %v3238
  %v3276 = vunpack.c.l.b16 %v3239
  %v3277 = vunpack.c.l.b16 %v3240
  %v3278 = vunpack.c.l.b16 %v3241
  %v3279 = vunpack.c.l.b16 %v3242
  %v3280 = vunpack.c.l.b16 %v3243
  %v3281 = vunpack.c.l.b16 %v3244
  %v3282 = vunpack.c.l.b16 %v3245
  %v3283 = vunpack.c.l.b16 %v3246
  %v3284 = vunpack.c.l.b16 %v3247
  %v3285 = vunpack.c.l.b16 %v3248
  %v3286 = vunpack.c.l.b16 %v3249
  %v3287 = vunpack.c.l.b16 %v3250
  %v3288 = vpack.c.b16 %v3273, %v3272
  %v3289 = vpack.c.b16 %v3275, %v3274
  %v3290 = vpack.c.b16 %v3277, %v3276
  %v3291 = vpack.c.b16 %v3279, %v3278
  %v3292 = vpack.c.b16 %v3281, %v3280
  %v3293 = vpack.c.b16 %v3283, %v3282
  %v3294 = vpack.c.b16 %v3285, %v3284
  %v3295 = vpack.c.b16 %v3287, %v3286
  %3304 = vmatprep.subr.bf16.mxu0 0
  %3305 = vmatpush1.bf16.msra.mxu0 %v3295
  %3306 = vmatprep.subr.bf16.mxu0 0
  %3307 = vmatpush1.bf16.msra.mxu0 %v3294
  %3308 = vmatprep.subr.bf16.mxu0 0
  %3309 = vmatpush1.bf16.msra.mxu0 %v3293
  %3310 = vmatprep.subr.bf16.mxu0 0
  %3311 = vmatpush1.bf16.msra.mxu0 %v3292
  %3312 = vmatprep.subr.bf16.mxu0 0
  %3313 = vmatpush1.bf16.msra.mxu0 %v3291
  %3314 = vmatprep.subr.bf16.mxu0 0
  %3315 = vmatpush1.bf16.msra.mxu0 %v3290
  %3316 = vmatprep.subr.bf16.mxu0 0
  %3317 = vmatpush1.bf16.msra.mxu0 %v3289
  %3318 = vmatprep.subr.bf16.mxu0 0
  %3319 = vmatpush1.bf16.msra.mxu0 %v3288
  %3320 = vmatprep.subr.bf16.mxu0 0
  %3321 = vmatpush2.bf16.msra.mxu0 0
  %3322 = vmatprep.subr.bf16.mxu0 0
  %3323 = vmatpush2.bf16.msra.mxu0 0
  %3324 = vmatprep.subr.bf16.mxu0 0
  %3325 = vmatpush2.bf16.msra.mxu0 0
  %3326 = vmatprep.subr.bf16.mxu0 0
  %3327 = vmatpush2.bf16.msra.mxu0 0
  %3328 = vmatprep.subr.bf16.mxu0 0
  %3329 = vmatpush2.bf16.msra.mxu0 0
  %3330 = vmatprep.subr.bf16.mxu0 0
  %3331 = vmatpush2.bf16.msra.mxu0 0
  %3332 = vmatprep.subr.bf16.mxu0 0
  %3333 = vmatpush2.bf16.msra.mxu0 0
  %3334 = vmatprep.subr.bf16.mxu0 0
  %3335 = vmatpush2.bf16.msra.mxu0 0
  %3336 = vmatprep.mubr.bf16.mxu0 0
  %3337 = vmatmul.mubr.bf16.gmra.mxu0 %v3231
  %v3338 = vpop.f32.mrf.mxu0
  %v3339 = vadd.f32 %v3255, %v3338
  %v3340 = vpop.f32.mrf.mxu0
  %v3341 = vpop.f32.mrf.mxu0
  %v3342 = vadd.f32 %v3255, %v3341
  %v3343 = vpop.f32.mrf.mxu0
  %3344 = vmatprep.mubr.bf16.mxu0 0
  %3345 = vmatmul.mubr.bf16.gmra.mxu0 %v3232
  %v3346 = vpop.f32.mrf.mxu0
  %v3347 = vadd.f32 %v3255, %v3346
  %v3348 = vpop.f32.mrf.mxu0
  %v3349 = vpop.f32.mrf.mxu0
  %v3350 = vadd.f32 %v3255, %v3349
  %v3351 = vpop.f32.mrf.mxu0
  %3352 = vmatprep.mubr.bf16.mxu0 0
  %3353 = vmatmul.mubr.bf16.gmra.mxu0 %v3233
  %v3354 = vpop.f32.mrf.mxu0
  %v3355 = vadd.f32 %v3255, %v3354
  %v3356 = vpop.f32.mrf.mxu0
  %v3357 = vpop.f32.mrf.mxu0
  %v3358 = vpop.f32.mrf.mxu0
  %3359 = vdwg.mxu0
  %v3360 = vadd.f32 %v3016, %v3339
  %v3361 = vadd.f32 %v3017, %v3342
  %v3362 = vadd.f32 %v3018, %v3347
  %v3363 = vadd.f32 %v3019, %v3350
  %v3364 = vadd.f32 %v3020, %v3355
  %v3365 = vsel %vm148, %v3360, 0.0
  %3366 = vadd.xlane.f32.xlu0 %v3365
  %v3367 = vpop.xlane.xlu0 %3366
  %v3368 = vsel %vm148, %v3361, 0.0
  %3369 = vadd.xlane.f32.xlu0 %v3368
  %v3370 = vpop.xlane.xlu0 %3369
  %v3371 = vsel %vm148, %v3362, 0.0
  %3372 = vadd.xlane.f32.xlu0 %v3371
  %v3373 = vpop.xlane.xlu0 %3372
  %v3374 = vsel %vm148, %v3363, 0.0
  %3375 = vadd.xlane.f32.xlu0 %v3374
  %v3376 = vpop.xlane.xlu0 %3375
  %v3377 = vsel %vm148, %v3364, 0.0
  %3378 = vadd.xlane.f32.xlu0 %v3377
  %v3379 = vpop.xlane.xlu0 %3378
  %v3380 = vmul.f32 %v3367, %v164
  %v3381 = vmul.f32 %v3370, %v164
  %v3382 = vmul.f32 %v3373, %v164
  %v3383 = vmul.f32 %v3376, %v164
  %v3384 = vmul.f32 %v3379, %v164
  %v3385 = vsub.f32 %v3360, %v3380
  %v3386 = vsub.f32 %v3361, %v3381
  %v3387 = vsub.f32 %v3362, %v3382
  %v3388 = vsub.f32 %v3363, %v3383
  %v3389 = vsub.f32 %v3364, %v3384
  %v3390 = vmul.f32 %v3385, %v3385
  %v3391 = vmul.f32 %v3386, %v3386
  %v3392 = vmul.f32 %v3387, %v3387
  %v3393 = vmul.f32 %v3388, %v3388
  %v3394 = vmul.f32 %v3389, %v3389
  %v3395 = vsel %vm148, %v3390, 0.0
  %3396 = vadd.xlane.f32.xlu0 %v3395
  %v3397 = vpop.xlane.xlu0 %3396
  %v3398 = vsel %vm148, %v3391, 0.0
  %3399 = vadd.xlane.f32.xlu0 %v3398
  %v3400 = vpop.xlane.xlu0 %3399
  %v3401 = vsel %vm148, %v3392, 0.0
  %3402 = vadd.xlane.f32.xlu0 %v3401
  %v3403 = vpop.xlane.xlu0 %3402
  %v3404 = vsel %vm148, %v3393, 0.0
  %3405 = vadd.xlane.f32.xlu0 %v3404
  %v3406 = vpop.xlane.xlu0 %3405
  %v3407 = vsel %vm148, %v3394, 0.0
  %3408 = vadd.xlane.f32.xlu0 %v3407
  %v3409 = vpop.xlane.xlu0 %3408
  %v3410 = vmul.f32 %v3397, %v164
  %v3411 = vmul.f32 %v3400, %v164
  %v3412 = vmul.f32 %v3403, %v164
  %v3413 = vmul.f32 %v3406, %v164
  %v3414 = vmul.f32 %v3409, %v164
  %v3415 = vadd.f32 %v3410, 1e-06
  %v3416 = vadd.f32 %v3411, 1e-06
  %v3417 = vadd.f32 %v3412, 1e-06
  %v3418 = vadd.f32 %v3413, 1e-06
  %v3419 = vadd.f32 %v3414, 1e-06
  %v3420 = vrsqrt.pop %v3415
  %v3421 = vrsqrt.pop %v3416
  %v3422 = vrsqrt.pop %v3417
  %v3423 = vrsqrt.pop %v3418
  %v3424 = vrsqrt.pop %v3419
  %v3425 = vmul.f32 %v3385, %v3420
  %v3426 = vmul.f32 %v3386, %v3421
  %v3427 = vmul.f32 %v3387, %v3422
  %v3428 = vmul.f32 %v3388, %v3423
  %v3429 = vmul.f32 %v3389, %v3424
  %v3430 = vlaneseq
  %v3431 = vshrl.u32 %v3430, 7
  %v3432 = vsub.s32 0, %v3431
  %v3433 = vrot.slane %v138, %v3432
  %v3434 = vmul.f32 %v3425, %v3433
  %v3435 = vmul.f32 %v3426, %v3433
  %v3436 = vmul.f32 %v3427, %v3433
  %v3437 = vmul.f32 %v3428, %v3433
  %v3438 = vmul.f32 %v3429, %v3433
  %v3439 = vlaneseq
  %v3440 = vshrl.u32 %v3439, 7
  %v3441 = vsub.s32 0, %v3440
  %v3442 = vrot.slane %v139, %v3441
  %v3443 = vadd.f32 %v3434, %v3442
  %v3444 = vadd.f32 %v3435, %v3442
  %v3445 = vadd.f32 %v3436, %v3442
  %v3446 = vadd.f32 %v3437, %v3442
  %v3447 = vadd.f32 %v3438, %v3442
  %3448 = vst.msk [vmem:[%s8] sm:$0xff] %vm148, %v3443
  %3449 = vst.msk [vmem:[%s8 + $0x8] sm:$0xff] %vm148, %v3444
  %3450 = vst.msk [vmem:[%s8 + $0x10] sm:$0xff] %vm148, %v3445
  %3451 = vst.msk [vmem:[%s8 + $0x18] sm:$0xff] %vm148, %v3446
  %3452 = vst.msk [vmem:[%s8 + $0x20] sm:$0xff] %vm148, %v3447
  %s3453 = scalar_lea.vmem %s4, 96
  %v3454 = vld [vmem:[%s3453] sm:$0xff]
  %v3455 = vld [vmem:[%s3453 + $0x8] sm:$0xff]
  %v3456 = vld [vmem:[%s3453 + $0x10] sm:$0xff]
  %v3457 = vld [vmem:[%s3453 + $0x18] sm:$0xff]
  %v3458 = vld [vmem:[%s7 + $0x7] sm:$0x1]
  %v3459 = vld [vmem:[%s7 + $0x3] sm:$0x1]
  %v3460 = vld [vmem:[%s6 + $0x3] sm:$0x1]
  %v3461 = vld [vmem:[%s6 + $0x7] sm:$0x1]
  %v3462 = vlaneseq
  %v3463 = vshrl.u32 %v3462, 7
  %v3464 = vsub.s32 0, %v3463
  %v3465 = vrot.slane %v3460, %v3464
  %v3466 = vmul.f32 %v3425, %v3465
  %v3467 = vmul.f32 %v3426, %v3465
  %v3468 = vmul.f32 %v3427, %v3465
  %v3469 = vmul.f32 %v3428, %v3465
  %v3470 = vmul.f32 %v3429, %v3465
  %v3471 = vlaneseq
  %v3472 = vshrl.u32 %v3471, 7
  %v3473 = vsub.s32 0, %v3472
  %v3474 = vrot.slane %v3461, %v3473
  %v3475 = vadd.f32 %v3466, %v3474
  %v3476 = vadd.f32 %v3467, %v3474
  %v3477 = vadd.f32 %v3468, %v3474
  %v3478 = vadd.f32 %v3469, %v3474
  %v3479 = vadd.f32 %v3470, %v3474
  %v3480 = vpack.c.bf16 %v3476, %v3475
  %v3481 = vpack.c.bf16 %v3478, %v3477
  %v3482 = vpack.c.bf16 %v3479, %v3479
  %v3483 = vlaneseq
  %v3484 = vshrl.u32 %v3483, 7
  %v3485 = vsub.s32 0, %v3484
  %v3486 = vrot.slane %v3458, %v3485
  %v3491 = vunpack.c.l.b16 %v3454
  %v3492 = vunpack.c.l.b16 %v3455
  %v3493 = vunpack.c.l.b16 %v3456
  %v3494 = vunpack.c.l.b16 %v3457
  %v3495 = vpack.c.b16 %v3492, %v3491
  %v3496 = vpack.c.b16 %v3494, %v3493
  %v3500 = vsel %vm148, %v3480, 0
  %v3503 = vsel %vm148, %v3481, 0
  %v3506 = vsel %vm148, %v3482, 0
  %3508 = vmatprep.subr.bf16.mxu0 0
  %3509 = vmatpush1.bf16.msra.mxu0 0
  %3510 = vmatprep.subr.bf16.mxu0 0
  %3511 = vmatpush1.bf16.msra.mxu0 0
  %3512 = vmatprep.subr.bf16.mxu0 0
  %3513 = vmatpush1.bf16.msra.mxu0 0
  %3514 = vmatprep.subr.bf16.mxu0 0
  %3515 = vmatpush1.bf16.msra.mxu0 0
  %3516 = vmatprep.subr.bf16.mxu0 0
  %3517 = vmatpush1.bf16.msra.mxu0 0
  %3518 = vmatprep.subr.bf16.mxu0 0
  %3519 = vmatpush1.bf16.msra.mxu0 0
  %3520 = vmatprep.subr.bf16.mxu0 0
  %3521 = vmatpush1.bf16.msra.mxu0 %v3496
  %3522 = vmatprep.subr.bf16.mxu0 0
  %3523 = vmatpush1.bf16.msra.mxu0 %v3495
  %3524 = vmatprep.subr.bf16.mxu0 0
  %3525 = vmatpush2.bf16.msra.mxu0 0
  %3526 = vmatprep.subr.bf16.mxu0 0
  %3527 = vmatpush2.bf16.msra.mxu0 0
  %3528 = vmatprep.subr.bf16.mxu0 0
  %3529 = vmatpush2.bf16.msra.mxu0 0
  %3530 = vmatprep.subr.bf16.mxu0 0
  %3531 = vmatpush2.bf16.msra.mxu0 0
  %3532 = vmatprep.subr.bf16.mxu0 0
  %3533 = vmatpush2.bf16.msra.mxu0 0
  %3534 = vmatprep.subr.bf16.mxu0 0
  %3535 = vmatpush2.bf16.msra.mxu0 0
  %3536 = vmatprep.subr.bf16.mxu0 0
  %3537 = vmatpush2.bf16.msra.mxu0 0
  %3538 = vmatprep.subr.bf16.mxu0 0
  %3539 = vmatpush2.bf16.msra.mxu0 0
  %3540 = vmatprep.mubr.bf16.mxu0 0
  %3541 = vmatmul.mubr.bf16.gmra.mxu0 %v3500
  %v3542 = vpop.f32.mrf.mxu0
  %v3543 = vadd.f32 %v3486, %v3542
  %v3544 = vpop.f32.mrf.mxu0
  %v3545 = vpop.f32.mrf.mxu0
  %v3546 = vadd.f32 %v3486, %v3545
  %v3547 = vpop.f32.mrf.mxu0
  %3548 = vmatprep.mubr.bf16.mxu0 0
  %3549 = vmatmul.mubr.bf16.gmra.mxu0 %v3503
  %v3550 = vpop.f32.mrf.mxu0
  %v3551 = vadd.f32 %v3486, %v3550
  %v3552 = vpop.f32.mrf.mxu0
  %v3553 = vpop.f32.mrf.mxu0
  %v3554 = vadd.f32 %v3486, %v3553
  %v3555 = vpop.f32.mrf.mxu0
  %3556 = vmatprep.mubr.bf16.mxu0 0
  %3557 = vmatmul.mubr.bf16.gmra.mxu0 %v3506
  %v3558 = vpop.f32.mrf.mxu0
  %v3559 = vadd.f32 %v3486, %v3558
  %v3560 = vpop.f32.mrf.mxu0
  %v3561 = vpop.f32.mrf.mxu0
  %v3562 = vpop.f32.mrf.mxu0
  %3563 = vdwg.mxu0
  %v3564 = vpack.c.bf16 %v3546, %v3543
  %v3565 = vpack.c.bf16 %v3554, %v3551
  %v3566 = vpack.c.bf16 %v3559, %v3559
  %3570 = vrot.lane.b32.xlu0 %v3564, 96
  %v3571 = vpop.permute.xlu0 %3570
  %3572 = vrot.lane.b32.xlu0 %v3565, 96
  %v3573 = vpop.permute.xlu0 %3572
  %3574 = vrot.lane.b32.xlu0 %v3566, 96
  %v3575 = vpop.permute.xlu0 %3574
  %v3577 = vsel %vm329, %v3564, 0
  %v3580 = vsel %vm329, %v3565, 0
  %v3583 = vsel %vm329, %v3566, 0
  %v3586 = vsel %vm329, %v3571, 0
  %v3589 = vsel %vm329, %v3573, 0
  %v3592 = vsel %vm329, %v3575, 0
  %3594 = vmatprep.subr.bf16.mxu0 0
  %3595 = vmatpush1.bf16.xpose.msra.mxu0 0
  %3596 = vmatprep.subr.bf16.mxu0 0
  %3597 = vmatpush1.bf16.xpose.msra.mxu0 0
  %3598 = vmatprep.subr.bf16.mxu0 0
  %3599 = vmatpush1.bf16.xpose.msra.mxu0 0
  %3600 = vmatprep.subr.bf16.mxu0 0
  %3601 = vmatpush1.bf16.xpose.msra.mxu0 0
  %3602 = vmatprep.subr.bf16.mxu0 0
  %3603 = vmatpush1.bf16.xpose.msra.mxu0 0
  %3604 = vmatprep.subr.bf16.mxu0 0
  %3605 = vmatpush1.bf16.xpose.msra.mxu0 %v3592
  %3606 = vmatprep.subr.bf16.mxu0 0
  %3607 = vmatpush1.bf16.xpose.msra.mxu0 %v3589
  %3608 = vmatprep.subr.bf16.mxu0 0
  %3609 = vmatpush1.bf16.xpose.msra.mxu0 %v3586
  %3610 = vmatprep.subr.bf16.mxu0 0
  %3611 = vmatpush2.bf16.xpose.msra.mxu0 0
  %3612 = vmatprep.subr.bf16.mxu0 0
  %3613 = vmatpush2.bf16.xpose.msra.mxu0 0
  %3614 = vmatprep.subr.bf16.mxu0 0
  %3615 = vmatpush2.bf16.xpose.msra.mxu0 0
  %3616 = vmatprep.subr.bf16.mxu0 0
  %3617 = vmatpush2.bf16.xpose.msra.mxu0 0
  %3618 = vmatprep.subr.bf16.mxu0 0
  %3619 = vmatpush2.bf16.xpose.msra.mxu0 0
  %3620 = vmatprep.subr.bf16.mxu0 0
  %3621 = vmatpush2.bf16.xpose.msra.mxu0 0
  %3622 = vmatprep.subr.bf16.mxu0 0
  %3623 = vmatpush2.bf16.xpose.msra.mxu0 0
  %3624 = vmatprep.subr.bf16.mxu0 0
  %3625 = vmatpush2.bf16.xpose.msra.mxu0 0
  %3626 = vmatprep.mubr.bf16.mxu0 0
  %3627 = vmatmul.mubr.bf16.gmra.mxu0 %v3577
  %v3628 = vpop.f32.mrf.mxu0
  %v3629 = vadd.f32 %v133, %v3628
  %v3630 = vpop.f32.mrf.mxu0
  %v3631 = vpop.f32.mrf.mxu0
  %v3632 = vadd.f32 %v134, %v3631
  %v3633 = vpop.f32.mrf.mxu0
  %3634 = vmatprep.mubr.bf16.mxu0 0
  %3635 = vmatmul.mubr.bf16.gmra.mxu0 %v3580
  %v3636 = vpop.f32.mrf.mxu0
  %v3637 = vadd.f32 %v135, %v3636
  %v3638 = vpop.f32.mrf.mxu0
  %v3639 = vpop.f32.mrf.mxu0
  %v3640 = vadd.f32 %v136, %v3639
  %v3641 = vpop.f32.mrf.mxu0
  %3642 = vmatprep.mubr.bf16.mxu0 0
  %3643 = vmatmul.mubr.bf16.gmra.mxu0 %v3583
  %v3644 = vpop.f32.mrf.mxu0
  %v3645 = vadd.f32 %v137, %v3644
  %v3646 = vpop.f32.mrf.mxu0
  %v3647 = vpop.f32.mrf.mxu0
  %v3648 = vpop.f32.mrf.mxu0
  %3649 = vdwg.mxu0
  %v3650 = vsel %vm404, %v3629, -inf
  %3651 = vmax.xlane.f32.xlu0 %v3650
  %v3652 = vpop.xlane.xlu0 %3651
  %v3653 = vsel %vm404, %v3632, -inf
  %3654 = vmax.xlane.f32.xlu0 %v3653
  %v3655 = vpop.xlane.xlu0 %3654
  %v3656 = vsel %vm404, %v3637, -inf
  %3657 = vmax.xlane.f32.xlu0 %v3656
  %v3658 = vpop.xlane.xlu0 %3657
  %v3659 = vsel %vm404, %v3640, -inf
  %3660 = vmax.xlane.f32.xlu0 %v3659
  %v3661 = vpop.xlane.xlu0 %3660
  %v3662 = vsel %vm404, %v3645, -inf
  %3663 = vmax.xlane.f32.xlu0 %v3662
  %v3664 = vpop.xlane.xlu0 %3663
  %v3665 = vsub.f32 %v3629, %v3652
  %v3666 = vsub.f32 %v3632, %v3655
  %v3667 = vsub.f32 %v3637, %v3658
  %v3668 = vsub.f32 %v3640, %v3661
  %v3669 = vsub.f32 %v3645, %v3664
  %v3670 = vmul.f32 %v3665, 1.442695
  %v3671 = vpow.pop %v3670
  %v3672 = vmul.f32 %v3666, 1.442695
  %v3673 = vpow.pop %v3672
  %v3674 = vmul.f32 %v3667, 1.442695
  %v3675 = vpow.pop %v3674
  %v3676 = vmul.f32 %v3668, 1.442695
  %v3677 = vpow.pop %v3676
  %v3678 = vmul.f32 %v3669, 1.442695
  %v3679 = vpow.pop %v3678
  %v3680 = vsel %vm404, %v3671, 0.0
  %3681 = vadd.xlane.f32.xlu0 %v3680
  %v3682 = vpop.xlane.xlu0 %3681
  %v3683 = vsel %vm404, %v3673, 0.0
  %3684 = vadd.xlane.f32.xlu0 %v3683
  %v3685 = vpop.xlane.xlu0 %3684
  %v3686 = vsel %vm404, %v3675, 0.0
  %3687 = vadd.xlane.f32.xlu0 %v3686
  %v3688 = vpop.xlane.xlu0 %3687
  %v3689 = vsel %vm404, %v3677, 0.0
  %3690 = vadd.xlane.f32.xlu0 %v3689
  %v3691 = vpop.xlane.xlu0 %3690
  %v3692 = vsel %vm404, %v3679, 0.0
  %3693 = vadd.xlane.f32.xlu0 %v3692
  %v3694 = vpop.xlane.xlu0 %3693
  %v3695 = vpack.c.bf16 %v3673, %v3671
  %v3696 = vpack.c.bf16 %v3677, %v3675
  %v3697 = vpack.c.bf16 %v3679, %v3679
  %3698 = vrot.lane.b32.xlu0 %v3564, 64
  %v3699 = vpop.permute.xlu0 %3698
  %3700 = vrot.lane.b32.xlu0 %v3565, 64
  %v3701 = vpop.permute.xlu0 %3700
  %3702 = vrot.lane.b32.xlu0 %v3566, 64
  %v3703 = vpop.permute.xlu0 %3702
  %v3707 = vsel %vm404, %v3695, 0
  %v3710 = vsel %vm404, %v3696, 0
  %v3713 = vsel %vm404, %v3697, 0
  %v3716 = vsel %vm470, %v3703, 0
  %3718 = vmatprep.subr.bf16.mxu0 0
  %3719 = vmatpush1.bf16.msra.mxu0 0
  %3720 = vmatprep.subr.bf16.mxu0 0
  %3721 = vmatpush1.bf16.msra.mxu0 0
  %3722 = vmatprep.subr.bf16.mxu0 0
  %3723 = vmatpush1.bf16.msra.mxu0 0
  %3724 = vmatprep.subr.bf16.mxu0 0
  %3725 = vmatpush1.bf16.msra.mxu0 0
  %3726 = vmatprep.subr.bf16.mxu0 0
  %3727 = vmatpush1.bf16.msra.mxu0 0
  %3728 = vmatprep.subr.bf16.mxu0 0
  %3729 = vmatpush1.bf16.msra.mxu0 %v3716
  %3730 = vmatprep.subr.bf16.mxu0 0
  %3731 = vmatpush1.bf16.msra.mxu0 %v3701
  %3732 = vmatprep.subr.bf16.mxu0 0
  %3733 = vmatpush1.bf16.msra.mxu0 %v3699
  %3734 = vmatprep.subr.bf16.mxu0 0
  %3735 = vmatpush2.bf16.msra.mxu0 0
  %3736 = vmatprep.subr.bf16.mxu0 0
  %3737 = vmatpush2.bf16.msra.mxu0 0
  %3738 = vmatprep.subr.bf16.mxu0 0
  %3739 = vmatpush2.bf16.msra.mxu0 0
  %3740 = vmatprep.subr.bf16.mxu0 0
  %3741 = vmatpush2.bf16.msra.mxu0 0
  %3742 = vmatprep.subr.bf16.mxu0 0
  %3743 = vmatpush2.bf16.msra.mxu0 0
  %3744 = vmatprep.subr.bf16.mxu0 0
  %3745 = vmatpush2.bf16.msra.mxu0 0
  %3746 = vmatprep.subr.bf16.mxu0 0
  %3747 = vmatpush2.bf16.msra.mxu0 0
  %3748 = vmatprep.subr.bf16.mxu0 0
  %3749 = vmatpush2.bf16.msra.mxu0 0
  %3750 = vmatprep.mubr.bf16.mxu0 0
  %3751 = vmatmul.mubr.bf16.gmra.mxu0 %v3707
  %v3752 = vpop.f32.mrf.mxu0
  %v3753 = vadd.f32 0.0, %v3752
  %v3754 = vpop.f32.mrf.mxu0
  %v3755 = vpop.f32.mrf.mxu0
  %v3756 = vadd.f32 0.0, %v3755
  %v3757 = vpop.f32.mrf.mxu0
  %3758 = vmatprep.mubr.bf16.mxu0 0
  %3759 = vmatmul.mubr.bf16.gmra.mxu0 %v3710
  %v3760 = vpop.f32.mrf.mxu0
  %v3761 = vadd.f32 0.0, %v3760
  %v3762 = vpop.f32.mrf.mxu0
  %v3763 = vpop.f32.mrf.mxu0
  %v3764 = vadd.f32 0.0, %v3763
  %v3765 = vpop.f32.mrf.mxu0
  %3766 = vmatprep.mubr.bf16.mxu0 0
  %3767 = vmatmul.mubr.bf16.gmra.mxu0 %v3713
  %v3768 = vpop.f32.mrf.mxu0
  %v3769 = vadd.f32 0.0, %v3768
  %v3770 = vpop.f32.mrf.mxu0
  %v3771 = vpop.f32.mrf.mxu0
  %v3772 = vpop.f32.mrf.mxu0
  %3773 = vdwg.mxu0
  %v3774 = vrcp.pop %v3682
  %v3775 = vrcp.pop %v3685
  %v3776 = vrcp.pop %v3688
  %v3777 = vrcp.pop %v3691
  %v3778 = vrcp.pop %v3694
  %v3779 = vmul.f32 %v3753, %v3774
  %v3780 = vmul.f32 %v3756, %v3775
  %v3781 = vmul.f32 %v3761, %v3776
  %v3782 = vmul.f32 %v3764, %v3777
  %v3783 = vmul.f32 %v3769, %v3778
  %3784 = vrot.lane.b32.xlu0 %v3564, 112
  %v3785 = vpop.permute.xlu0 %3784
  %3786 = vrot.lane.b32.xlu0 %v3565, 112
  %v3787 = vpop.permute.xlu0 %3786
  %3788 = vrot.lane.b32.xlu0 %v3566, 112
  %v3789 = vpop.permute.xlu0 %3788
  %3790 = vrot.lane.b32.xlu0 %v3564, 80
  %v3791 = vpop.permute.xlu0 %3790
  %3792 = vrot.lane.b32.xlu0 %v3565, 80
  %v3793 = vpop.permute.xlu0 %3792
  %3794 = vrot.lane.b32.xlu0 %v3566, 80
  %v3795 = vpop.permute.xlu0 %3794
  %v3797 = vsel %vm329, %v3785, 0
  %v3800 = vsel %vm329, %v3787, 0
  %v3803 = vsel %vm329, %v3789, 0
  %v3806 = vsel %vm329, %v3791, 0
  %v3809 = vsel %vm329, %v3793, 0
  %v3812 = vsel %vm329, %v3795, 0
  %3814 = vmatprep.subr.bf16.mxu0 0
  %3815 = vmatpush1.bf16.xpose.msra.mxu0 0
  %3816 = vmatprep.subr.bf16.mxu0 0
  %3817 = vmatpush1.bf16.xpose.msra.mxu0 0
  %3818 = vmatprep.subr.bf16.mxu0 0
  %3819 = vmatpush1.bf16.xpose.msra.mxu0 0
  %3820 = vmatprep.subr.bf16.mxu0 0
  %3821 = vmatpush1.bf16.xpose.msra.mxu0 0
  %3822 = vmatprep.subr.bf16.mxu0 0
  %3823 = vmatpush1.bf16.xpose.msra.mxu0 0
  %3824 = vmatprep.subr.bf16.mxu0 0
  %3825 = vmatpush1.bf16.xpose.msra.mxu0 %v3812
  %3826 = vmatprep.subr.bf16.mxu0 0
  %3827 = vmatpush1.bf16.xpose.msra.mxu0 %v3809
  %3828 = vmatprep.subr.bf16.mxu0 0
  %3829 = vmatpush1.bf16.xpose.msra.mxu0 %v3806
  %3830 = vmatprep.subr.bf16.mxu0 0
  %3831 = vmatpush2.bf16.xpose.msra.mxu0 0
  %3832 = vmatprep.subr.bf16.mxu0 0
  %3833 = vmatpush2.bf16.xpose.msra.mxu0 0
  %3834 = vmatprep.subr.bf16.mxu0 0
  %3835 = vmatpush2.bf16.xpose.msra.mxu0 0
  %3836 = vmatprep.subr.bf16.mxu0 0
  %3837 = vmatpush2.bf16.xpose.msra.mxu0 0
  %3838 = vmatprep.subr.bf16.mxu0 0
  %3839 = vmatpush2.bf16.xpose.msra.mxu0 0
  %3840 = vmatprep.subr.bf16.mxu0 0
  %3841 = vmatpush2.bf16.xpose.msra.mxu0 0
  %3842 = vmatprep.subr.bf16.mxu0 0
  %3843 = vmatpush2.bf16.xpose.msra.mxu0 0
  %3844 = vmatprep.subr.bf16.mxu0 0
  %3845 = vmatpush2.bf16.xpose.msra.mxu0 0
  %3846 = vmatprep.mubr.bf16.mxu0 0
  %3847 = vmatmul.mubr.bf16.gmra.mxu0 %v3797
  %v3848 = vpop.f32.mrf.mxu0
  %v3849 = vadd.f32 %v133, %v3848
  %v3850 = vpop.f32.mrf.mxu0
  %v3851 = vpop.f32.mrf.mxu0
  %v3852 = vadd.f32 %v134, %v3851
  %v3853 = vpop.f32.mrf.mxu0
  %3854 = vmatprep.mubr.bf16.mxu0 0
  %3855 = vmatmul.mubr.bf16.gmra.mxu0 %v3800
  %v3856 = vpop.f32.mrf.mxu0
  %v3857 = vadd.f32 %v135, %v3856
  %v3858 = vpop.f32.mrf.mxu0
  %v3859 = vpop.f32.mrf.mxu0
  %v3860 = vadd.f32 %v136, %v3859
  %v3861 = vpop.f32.mrf.mxu0
  %3862 = vmatprep.mubr.bf16.mxu0 0
  %3863 = vmatmul.mubr.bf16.gmra.mxu0 %v3803
  %v3864 = vpop.f32.mrf.mxu0
  %v3865 = vadd.f32 %v137, %v3864
  %v3866 = vpop.f32.mrf.mxu0
  %v3867 = vpop.f32.mrf.mxu0
  %v3868 = vpop.f32.mrf.mxu0
  %3869 = vdwg.mxu0
  %v3870 = vsel %vm404, %v3849, -inf
  %3871 = vmax.xlane.f32.xlu0 %v3870
  %v3872 = vpop.xlane.xlu0 %3871
  %v3873 = vsel %vm404, %v3852, -inf
  %3874 = vmax.xlane.f32.xlu0 %v3873
  %v3875 = vpop.xlane.xlu0 %3874
  %v3876 = vsel %vm404, %v3857, -inf
  %3877 = vmax.xlane.f32.xlu0 %v3876
  %v3878 = vpop.xlane.xlu0 %3877
  %v3879 = vsel %vm404, %v3860, -inf
  %3880 = vmax.xlane.f32.xlu0 %v3879
  %v3881 = vpop.xlane.xlu0 %3880
  %v3882 = vsel %vm404, %v3865, -inf
  %3883 = vmax.xlane.f32.xlu0 %v3882
  %v3884 = vpop.xlane.xlu0 %3883
  %v3885 = vsub.f32 %v3849, %v3872
  %v3886 = vsub.f32 %v3852, %v3875
  %v3887 = vsub.f32 %v3857, %v3878
  %v3888 = vsub.f32 %v3860, %v3881
  %v3889 = vsub.f32 %v3865, %v3884
  %v3890 = vmul.f32 %v3885, 1.442695
  %v3891 = vpow.pop %v3890
  %v3892 = vmul.f32 %v3886, 1.442695
  %v3893 = vpow.pop %v3892
  %v3894 = vmul.f32 %v3887, 1.442695
  %v3895 = vpow.pop %v3894
  %v3896 = vmul.f32 %v3888, 1.442695
  %v3897 = vpow.pop %v3896
  %v3898 = vmul.f32 %v3889, 1.442695
  %v3899 = vpow.pop %v3898
  %v3900 = vsel %vm404, %v3891, 0.0
  %3901 = vadd.xlane.f32.xlu0 %v3900
  %v3902 = vpop.xlane.xlu0 %3901
  %v3903 = vsel %vm404, %v3893, 0.0
  %3904 = vadd.xlane.f32.xlu0 %v3903
  %v3905 = vpop.xlane.xlu0 %3904
  %v3906 = vsel %vm404, %v3895, 0.0
  %3907 = vadd.xlane.f32.xlu0 %v3906
  %v3908 = vpop.xlane.xlu0 %3907
  %v3909 = vsel %vm404, %v3897, 0.0
  %3910 = vadd.xlane.f32.xlu0 %v3909
  %v3911 = vpop.xlane.xlu0 %3910
  %v3912 = vsel %vm404, %v3899, 0.0
  %3913 = vadd.xlane.f32.xlu0 %v3912
  %v3914 = vpop.xlane.xlu0 %3913
  %v3915 = vpack.c.bf16 %v3893, %v3891
  %v3916 = vpack.c.bf16 %v3897, %v3895
  %v3917 = vpack.c.bf16 %v3899, %v3899
  %3918 = vrot.lane.b32.xlu0 %v3564, 48
  %v3919 = vpop.permute.xlu0 %3918
  %3920 = vrot.lane.b32.xlu0 %v3565, 48
  %v3921 = vpop.permute.xlu0 %3920
  %3922 = vrot.lane.b32.xlu0 %v3566, 48
  %v3923 = vpop.permute.xlu0 %3922
  %v3927 = vsel %vm404, %v3915, 0
  %v3930 = vsel %vm404, %v3916, 0
  %v3933 = vsel %vm404, %v3917, 0
  %v3936 = vsel %vm470, %v3923, 0
  %3938 = vmatprep.subr.bf16.mxu0 0
  %3939 = vmatpush1.bf16.msra.mxu0 0
  %3940 = vmatprep.subr.bf16.mxu0 0
  %3941 = vmatpush1.bf16.msra.mxu0 0
  %3942 = vmatprep.subr.bf16.mxu0 0
  %3943 = vmatpush1.bf16.msra.mxu0 0
  %3944 = vmatprep.subr.bf16.mxu0 0
  %3945 = vmatpush1.bf16.msra.mxu0 0
  %3946 = vmatprep.subr.bf16.mxu0 0
  %3947 = vmatpush1.bf16.msra.mxu0 0
  %3948 = vmatprep.subr.bf16.mxu0 0
  %3949 = vmatpush1.bf16.msra.mxu0 %v3936
  %3950 = vmatprep.subr.bf16.mxu0 0
  %3951 = vmatpush1.bf16.msra.mxu0 %v3921
  %3952 = vmatprep.subr.bf16.mxu0 0
  %3953 = vmatpush1.bf16.msra.mxu0 %v3919
  %3954 = vmatprep.subr.bf16.mxu0 0
  %3955 = vmatpush2.bf16.msra.mxu0 0
  %3956 = vmatprep.subr.bf16.mxu0 0
  %3957 = vmatpush2.bf16.msra.mxu0 0
  %3958 = vmatprep.subr.bf16.mxu0 0
  %3959 = vmatpush2.bf16.msra.mxu0 0
  %3960 = vmatprep.subr.bf16.mxu0 0
  %3961 = vmatpush2.bf16.msra.mxu0 0
  %3962 = vmatprep.subr.bf16.mxu0 0
  %3963 = vmatpush2.bf16.msra.mxu0 0
  %3964 = vmatprep.subr.bf16.mxu0 0
  %3965 = vmatpush2.bf16.msra.mxu0 0
  %3966 = vmatprep.subr.bf16.mxu0 0
  %3967 = vmatpush2.bf16.msra.mxu0 0
  %3968 = vmatprep.subr.bf16.mxu0 0
  %3969 = vmatpush2.bf16.msra.mxu0 0
  %3970 = vmatprep.mubr.bf16.mxu0 0
  %3971 = vmatmul.mubr.bf16.gmra.mxu0 %v3927
  %v3972 = vpop.f32.mrf.mxu0
  %v3973 = vadd.f32 0.0, %v3972
  %v3974 = vpop.f32.mrf.mxu0
  %v3975 = vpop.f32.mrf.mxu0
  %v3976 = vadd.f32 0.0, %v3975
  %v3977 = vpop.f32.mrf.mxu0
  %3978 = vmatprep.mubr.bf16.mxu0 0
  %3979 = vmatmul.mubr.bf16.gmra.mxu0 %v3930
  %v3980 = vpop.f32.mrf.mxu0
  %v3981 = vadd.f32 0.0, %v3980
  %v3982 = vpop.f32.mrf.mxu0
  %v3983 = vpop.f32.mrf.mxu0
  %v3984 = vadd.f32 0.0, %v3983
  %v3985 = vpop.f32.mrf.mxu0
  %3986 = vmatprep.mubr.bf16.mxu0 0
  %3987 = vmatmul.mubr.bf16.gmra.mxu0 %v3933
  %v3988 = vpop.f32.mrf.mxu0
  %v3989 = vadd.f32 0.0, %v3988
  %v3990 = vpop.f32.mrf.mxu0
  %v3991 = vpop.f32.mrf.mxu0
  %v3992 = vpop.f32.mrf.mxu0
  %3993 = vdwg.mxu0
  %v3994 = vrcp.pop %v3902
  %v3995 = vrcp.pop %v3905
  %v3996 = vrcp.pop %v3908
  %v3997 = vrcp.pop %v3911
  %v3998 = vrcp.pop %v3914
  %v3999 = vmul.f32 %v3973, %v3994
  %v4000 = vmul.f32 %v3976, %v3995
  %v4001 = vmul.f32 %v3981, %v3996
  %v4002 = vmul.f32 %v3984, %v3997
  %v4003 = vmul.f32 %v3989, %v3998
  %4009 = vrot.lane.b32.xlu0 %v3999, 16
  %v4010 = vpop.permute.xlu0 %4009
  %4011 = vrot.lane.b32.xlu0 %v4000, 16
  %v4012 = vpop.permute.xlu0 %4011
  %4013 = vrot.lane.b32.xlu0 %v4001, 16
  %v4014 = vpop.permute.xlu0 %4013
  %4015 = vrot.lane.b32.xlu0 %v4002, 16
  %v4016 = vpop.permute.xlu0 %4015
  %4017 = vrot.lane.b32.xlu0 %v4003, 16
  %v4018 = vpop.permute.xlu0 %4017
  %v4024 = vsel %vm329, %v3779, %v4010
  %v4025 = vsel %vm329, %v3780, %v4012
  %v4026 = vsel %vm329, %v3781, %v4014
  %v4027 = vsel %vm329, %v3782, %v4016
  %v4028 = vsel %vm329, %v3783, %v4018
  %v4029 = vpack.c.bf16 %v4025, %v4024
  %v4030 = vpack.c.bf16 %v4027, %v4026
  %v4031 = vpack.c.bf16 %v4028, %v4028
  %4032 = vrot.lane.b32.xlu0 %v3495, 32
  %v4033 = vpop.permute.xlu0 %4032
  %4034 = vrot.lane.b32.xlu0 %v3496, 32
  %v4035 = vpop.permute.xlu0 %4034
  %v4039 = vsel %vm148, %v4029, 0
  %v4042 = vsel %vm148, %v4030, 0
  %v4045 = vsel %vm148, %v4031, 0
  %4047 = vmatprep.subr.bf16.mxu0 0
  %4048 = vmatpush1.bf16.msra.mxu0 0
  %4049 = vmatprep.subr.bf16.mxu0 0
  %4050 = vmatpush1.bf16.msra.mxu0 0
  %4051 = vmatprep.subr.bf16.mxu0 0
  %4052 = vmatpush1.bf16.msra.mxu0 0
  %4053 = vmatprep.subr.bf16.mxu0 0
  %4054 = vmatpush1.bf16.msra.mxu0 0
  %4055 = vmatprep.subr.bf16.mxu0 0
  %4056 = vmatpush1.bf16.msra.mxu0 0
  %4057 = vmatprep.subr.bf16.mxu0 0
  %4058 = vmatpush1.bf16.msra.mxu0 0
  %4059 = vmatprep.subr.bf16.mxu0 0
  %4060 = vmatpush1.bf16.msra.mxu0 %v4035
  %4061 = vmatprep.subr.bf16.mxu0 0
  %4062 = vmatpush1.bf16.msra.mxu0 %v4033
  %4063 = vmatprep.subr.bf16.mxu0 0
  %4064 = vmatpush2.bf16.msra.mxu0 0
  %4065 = vmatprep.subr.bf16.mxu0 0
  %4066 = vmatpush2.bf16.msra.mxu0 0
  %4067 = vmatprep.subr.bf16.mxu0 0
  %4068 = vmatpush2.bf16.msra.mxu0 0
  %4069 = vmatprep.subr.bf16.mxu0 0
  %4070 = vmatpush2.bf16.msra.mxu0 0
  %4071 = vmatprep.subr.bf16.mxu0 0
  %4072 = vmatpush2.bf16.msra.mxu0 0
  %4073 = vmatprep.subr.bf16.mxu0 0
  %4074 = vmatpush2.bf16.msra.mxu0 0
  %4075 = vmatprep.subr.bf16.mxu0 0
  %4076 = vmatpush2.bf16.msra.mxu0 0
  %4077 = vmatprep.subr.bf16.mxu0 0
  %4078 = vmatpush2.bf16.msra.mxu0 0
  %4079 = vmatprep.mubr.bf16.mxu0 0
  %4080 = vmatmul.mubr.bf16.gmra.mxu0 %v4039
  %v4081 = vpop.f32.mrf.mxu0
  %v4082 = vadd.f32 0.0, %v4081
  %v4083 = vpop.f32.mrf.mxu0
  %v4084 = vpop.f32.mrf.mxu0
  %v4085 = vadd.f32 0.0, %v4084
  %v4086 = vpop.f32.mrf.mxu0
  %4087 = vmatprep.mubr.bf16.mxu0 0
  %4088 = vmatmul.mubr.bf16.gmra.mxu0 %v4042
  %v4089 = vpop.f32.mrf.mxu0
  %v4090 = vadd.f32 0.0, %v4089
  %v4091 = vpop.f32.mrf.mxu0
  %v4092 = vpop.f32.mrf.mxu0
  %v4093 = vadd.f32 0.0, %v4092
  %v4094 = vpop.f32.mrf.mxu0
  %4095 = vmatprep.mubr.bf16.mxu0 0
  %4096 = vmatmul.mubr.bf16.gmra.mxu0 %v4045
  %v4097 = vpop.f32.mrf.mxu0
  %v4098 = vadd.f32 0.0, %v4097
  %v4099 = vpop.f32.mrf.mxu0
  %v4100 = vpop.f32.mrf.mxu0
  %v4101 = vpop.f32.mrf.mxu0
  %4102 = vdwg.mxu0
  %v4103 = vadd.f32 %v3360, %v4082
  %v4104 = vadd.f32 %v3361, %v4085
  %v4105 = vadd.f32 %v3362, %v4090
  %v4106 = vadd.f32 %v3363, %v4093
  %v4107 = vadd.f32 %v3364, %v4098
  %v4108 = vld [vmem:[%s6 + $0x13] sm:$0x1]
  %v4109 = vlaneseq
  %v4110 = vshrl.u32 %v4109, 7
  %v4111 = vsub.s32 0, %v4110
  %v4112 = vrot.slane %v4108, %v4111
  %v4113 = vadd.f32 %v4103, %v4112
  %v4114 = vadd.f32 %v4104, %v4112
  %v4115 = vadd.f32 %v4105, %v4112
  %v4116 = vadd.f32 %v4106, %v4112
  %v4117 = vadd.f32 %v4107, %v4112
  %v4118 = vld [vmem:[%s6 + $0xb] sm:$0x1]
  %v4119 = vld [vmem:[%s6 + $0xf] sm:$0x1]
  %v4120 = vsel %vm148, %v4113, 0.0
  %4121 = vadd.xlane.f32.xlu0 %v4120
  %v4122 = vpop.xlane.xlu0 %4121
  %v4123 = vsel %vm148, %v4114, 0.0
  %4124 = vadd.xlane.f32.xlu0 %v4123
  %v4125 = vpop.xlane.xlu0 %4124
  %v4126 = vsel %vm148, %v4115, 0.0
  %4127 = vadd.xlane.f32.xlu0 %v4126
  %v4128 = vpop.xlane.xlu0 %4127
  %v4129 = vsel %vm148, %v4116, 0.0
  %4130 = vadd.xlane.f32.xlu0 %v4129
  %v4131 = vpop.xlane.xlu0 %4130
  %v4132 = vsel %vm148, %v4117, 0.0
  %4133 = vadd.xlane.f32.xlu0 %v4132
  %v4134 = vpop.xlane.xlu0 %4133
  %v4135 = vmul.f32 %v4122, %v164
  %v4136 = vmul.f32 %v4125, %v164
  %v4137 = vmul.f32 %v4128, %v164
  %v4138 = vmul.f32 %v4131, %v164
  %v4139 = vmul.f32 %v4134, %v164
  %v4140 = vsub.f32 %v4113, %v4135
  %v4141 = vsub.f32 %v4114, %v4136
  %v4142 = vsub.f32 %v4115, %v4137
  %v4143 = vsub.f32 %v4116, %v4138
  %v4144 = vsub.f32 %v4117, %v4139
  %v4145 = vmul.f32 %v4140, %v4140
  %v4146 = vmul.f32 %v4141, %v4141
  %v4147 = vmul.f32 %v4142, %v4142
  %v4148 = vmul.f32 %v4143, %v4143
  %v4149 = vmul.f32 %v4144, %v4144
  %v4150 = vsel %vm148, %v4145, 0.0
  %4151 = vadd.xlane.f32.xlu0 %v4150
  %v4152 = vpop.xlane.xlu0 %4151
  %v4153 = vsel %vm148, %v4146, 0.0
  %4154 = vadd.xlane.f32.xlu0 %v4153
  %v4155 = vpop.xlane.xlu0 %4154
  %v4156 = vsel %vm148, %v4147, 0.0
  %4157 = vadd.xlane.f32.xlu0 %v4156
  %v4158 = vpop.xlane.xlu0 %4157
  %v4159 = vsel %vm148, %v4148, 0.0
  %4160 = vadd.xlane.f32.xlu0 %v4159
  %v4161 = vpop.xlane.xlu0 %4160
  %v4162 = vsel %vm148, %v4149, 0.0
  %4163 = vadd.xlane.f32.xlu0 %v4162
  %v4164 = vpop.xlane.xlu0 %4163
  %v4165 = vmul.f32 %v4152, %v164
  %v4166 = vmul.f32 %v4155, %v164
  %v4167 = vmul.f32 %v4158, %v164
  %v4168 = vmul.f32 %v4161, %v164
  %v4169 = vmul.f32 %v4164, %v164
  %v4170 = vadd.f32 %v4165, 1e-06
  %v4171 = vadd.f32 %v4166, 1e-06
  %v4172 = vadd.f32 %v4167, 1e-06
  %v4173 = vadd.f32 %v4168, 1e-06
  %v4174 = vadd.f32 %v4169, 1e-06
  %v4175 = vrsqrt.pop %v4170
  %v4176 = vrsqrt.pop %v4171
  %v4177 = vrsqrt.pop %v4172
  %v4178 = vrsqrt.pop %v4173
  %v4179 = vrsqrt.pop %v4174
  %v4180 = vmul.f32 %v4140, %v4175
  %v4181 = vmul.f32 %v4141, %v4176
  %v4182 = vmul.f32 %v4142, %v4177
  %v4183 = vmul.f32 %v4143, %v4178
  %v4184 = vmul.f32 %v4144, %v4179
  %v4185 = vlaneseq
  %v4186 = vshrl.u32 %v4185, 7
  %v4187 = vsub.s32 0, %v4186
  %v4188 = vrot.slane %v4118, %v4187
  %v4189 = vmul.f32 %v4180, %v4188
  %v4190 = vmul.f32 %v4181, %v4188
  %v4191 = vmul.f32 %v4182, %v4188
  %v4192 = vmul.f32 %v4183, %v4188
  %v4193 = vmul.f32 %v4184, %v4188
  %v4194 = vlaneseq
  %v4195 = vshrl.u32 %v4194, 7
  %v4196 = vsub.s32 0, %v4195
  %v4197 = vrot.slane %v4119, %v4196
  %v4198 = vadd.f32 %v4189, %v4197
  %v4199 = vadd.f32 %v4190, %v4197
  %v4200 = vadd.f32 %v4191, %v4197
  %v4201 = vadd.f32 %v4192, %v4197
  %v4202 = vadd.f32 %v4193, %v4197
  %v4203 = vpack.c.bf16 %v4199, %v4198
  %v4204 = vpack.c.bf16 %v4201, %v4200
  %v4205 = vpack.c.bf16 %v4202, %v4202
  %v4206 = vlaneseq
  %v4207 = vshrl.u32 %v4206, 7
  %v4208 = vsub.s32 0, %v4207
  %v4209 = vrot.slane %v3459, %v4208
  %v4210 = vunpack.c.h.b16 %v3454
  %v4211 = vunpack.c.h.b16 %v3455
  %v4212 = vunpack.c.h.b16 %v3456
  %v4213 = vunpack.c.h.b16 %v3457
  %v4214 = vpack.c.b16 %v4211, %v4210
  %v4215 = vpack.c.b16 %v4213, %v4212
  %v4219 = vsel %vm148, %v4203, 0
  %v4222 = vsel %vm148, %v4204, 0
  %v4225 = vsel %vm148, %v4205, 0
  %4227 = vmatprep.subr.bf16.mxu0 0
  %4228 = vmatpush1.bf16.msra.mxu0 0
  %4229 = vmatprep.subr.bf16.mxu0 0
  %4230 = vmatpush1.bf16.msra.mxu0 0
  %4231 = vmatprep.subr.bf16.mxu0 0
  %4232 = vmatpush1.bf16.msra.mxu0 0
  %4233 = vmatprep.subr.bf16.mxu0 0
  %4234 = vmatpush1.bf16.msra.mxu0 0
  %4235 = vmatprep.subr.bf16.mxu0 0
  %4236 = vmatpush1.bf16.msra.mxu0 0
  %4237 = vmatprep.subr.bf16.mxu0 0
  %4238 = vmatpush1.bf16.msra.mxu0 0
  %4239 = vmatprep.subr.bf16.mxu0 0
  %4240 = vmatpush1.bf16.msra.mxu0 %v4215
  %4241 = vmatprep.subr.bf16.mxu0 0
  %4242 = vmatpush1.bf16.msra.mxu0 %v4214
  %4243 = vmatprep.subr.bf16.mxu0 0
  %4244 = vmatpush2.bf16.msra.mxu0 0
  %4245 = vmatprep.subr.bf16.mxu0 0
  %4246 = vmatpush2.bf16.msra.mxu0 0
  %4247 = vmatprep.subr.bf16.mxu0 0
  %4248 = vmatpush2.bf16.msra.mxu0 0
  %4249 = vmatprep.subr.bf16.mxu0 0
  %4250 = vmatpush2.bf16.msra.mxu0 0
  %4251 = vmatprep.subr.bf16.mxu0 0
  %4252 = vmatpush2.bf16.msra.mxu0 0
  %4253 = vmatprep.subr.bf16.mxu0 0
  %4254 = vmatpush2.bf16.msra.mxu0 0
  %4255 = vmatprep.subr.bf16.mxu0 0
  %4256 = vmatpush2.bf16.msra.mxu0 0
  %4257 = vmatprep.subr.bf16.mxu0 0
  %4258 = vmatpush2.bf16.msra.mxu0 0
  %4259 = vmatprep.mubr.bf16.mxu0 0
  %4260 = vmatmul.mubr.bf16.gmra.mxu0 %v4219
  %v4261 = vpop.f32.mrf.mxu0
  %v4262 = vadd.f32 %v4209, %v4261
  %v4263 = vpop.f32.mrf.mxu0
  %v4264 = vpop.f32.mrf.mxu0
  %v4265 = vadd.f32 %v4209, %v4264
  %v4266 = vpop.f32.mrf.mxu0
  %4267 = vmatprep.mubr.bf16.mxu0 0
  %4268 = vmatmul.mubr.bf16.gmra.mxu0 %v4222
  %v4269 = vpop.f32.mrf.mxu0
  %v4270 = vadd.f32 %v4209, %v4269
  %v4271 = vpop.f32.mrf.mxu0
  %v4272 = vpop.f32.mrf.mxu0
  %v4273 = vadd.f32 %v4209, %v4272
  %v4274 = vpop.f32.mrf.mxu0
  %4275 = vmatprep.mubr.bf16.mxu0 0
  %4276 = vmatmul.mubr.bf16.gmra.mxu0 %v4225
  %v4277 = vpop.f32.mrf.mxu0
  %v4278 = vadd.f32 %v4209, %v4277
  %v4279 = vpop.f32.mrf.mxu0
  %v4280 = vpop.f32.mrf.mxu0
  %v4281 = vpop.f32.mrf.mxu0
  %4282 = vdwg.mxu0
  %v4283 = vmul.f32 %v4262, 0.5
  %v4284 = vmul.f32 %v4265, 0.5
  %v4285 = vmul.f32 %v4270, 0.5
  %v4286 = vmul.f32 %v4273, 0.5
  %v4287 = vmul.f32 %v4278, 0.5
  %v4288 = vmul.f32 %v4262, 0.044715
  %v4289 = vmul.f32 %v4265, 0.044715
  %v4290 = vmul.f32 %v4270, 0.044715
  %v4291 = vmul.f32 %v4273, 0.044715
  %v4292 = vmul.f32 %v4278, 0.044715
  %v4293 = vmul.f32 %v4288, %v4262
  %v4294 = vmul.f32 %v4289, %v4265
  %v4295 = vmul.f32 %v4290, %v4270
  %v4296 = vmul.f32 %v4291, %v4273
  %v4297 = vmul.f32 %v4292, %v4278
  %v4298 = vmul.f32 %v4293, %v4262
  %v4299 = vmul.f32 %v4294, %v4265
  %v4300 = vmul.f32 %v4295, %v4270
  %v4301 = vmul.f32 %v4296, %v4273
  %v4302 = vmul.f32 %v4297, %v4278
  %v4303 = vadd.f32 %v4262, %v4298
  %v4304 = vadd.f32 %v4265, %v4299
  %v4305 = vadd.f32 %v4270, %v4300
  %v4306 = vadd.f32 %v4273, %v4301
  %v4307 = vadd.f32 %v4278, %v4302
  %v4308 = vmul.f32 %v4303, 0.7978846
  %v4309 = vmul.f32 %v4304, 0.7978846
  %v4310 = vmul.f32 %v4305, 0.7978846
  %v4311 = vmul.f32 %v4306, 0.7978846
  %v4312 = vmul.f32 %v4307, 0.7978846
  %v4313 = vtanh.pop %v4308
  %v4314 = vtanh.pop %v4309
  %v4315 = vtanh.pop %v4310
  %v4316 = vtanh.pop %v4311
  %v4317 = vtanh.pop %v4312
  %v4318 = vadd.f32 %v4313, 1.0
  %v4319 = vadd.f32 %v4314, 1.0
  %v4320 = vadd.f32 %v4315, 1.0
  %v4321 = vadd.f32 %v4316, 1.0
  %v4322 = vadd.f32 %v4317, 1.0
  %v4323 = vmul.f32 %v4283, %v4318
  %v4324 = vmul.f32 %v4284, %v4319
  %v4325 = vmul.f32 %v4285, %v4320
  %v4326 = vmul.f32 %v4286, %v4321
  %v4327 = vmul.f32 %v4287, %v4322
  %v4328 = vpack.c.bf16 %v4324, %v4323
  %v4329 = vpack.c.bf16 %v4326, %v4325
  %v4330 = vpack.c.bf16 %v4327, %v4327
  %s4331 = scalar_lea.vmem %s5, 192
  %v4332 = vld [vmem:[%s4331] sm:$0xf]
  %v4333 = vld [vmem:[%s4331 + $0x4] sm:$0xf]
  %v4334 = vld [vmem:[%s4331 + $0x8] sm:$0xf]
  %v4335 = vld [vmem:[%s4331 + $0xc] sm:$0xf]
  %v4336 = vld [vmem:[%s4331 + $0x10] sm:$0xf]
  %v4337 = vld [vmem:[%s4331 + $0x14] sm:$0xf]
  %v4338 = vld [vmem:[%s4331 + $0x18] sm:$0xf]
  %v4339 = vld [vmem:[%s4331 + $0x1c] sm:$0xf]
  %v4340 = vld [vmem:[%s4331 + $0x20] sm:$0xf]
  %v4341 = vld [vmem:[%s4331 + $0x24] sm:$0xf]
  %v4342 = vld [vmem:[%s4331 + $0x28] sm:$0xf]
  %v4343 = vld [vmem:[%s4331 + $0x2c] sm:$0xf]
  %v4344 = vld [vmem:[%s4331 + $0x30] sm:$0xf]
  %v4345 = vld [vmem:[%s4331 + $0x34] sm:$0xf]
  %v4346 = vld [vmem:[%s4331 + $0x38] sm:$0xf]
  %v4347 = vld [vmem:[%s4331 + $0x3c] sm:$0xf]
  %v4348 = vld [vmem:[%s6 + $0x17] sm:$0x1]
  %v4349 = vlaneseq
  %v4350 = vshrl.u32 %v4349, 7
  %v4351 = vsub.s32 0, %v4350
  %v4352 = vrot.slane %v4348, %v4351
  %v4369 = vunpack.c.l.b16 %v4332
  %v4370 = vunpack.c.l.b16 %v4333
  %v4371 = vunpack.c.l.b16 %v4334
  %v4372 = vunpack.c.l.b16 %v4335
  %v4373 = vunpack.c.l.b16 %v4336
  %v4374 = vunpack.c.l.b16 %v4337
  %v4375 = vunpack.c.l.b16 %v4338
  %v4376 = vunpack.c.l.b16 %v4339
  %v4377 = vunpack.c.l.b16 %v4340
  %v4378 = vunpack.c.l.b16 %v4341
  %v4379 = vunpack.c.l.b16 %v4342
  %v4380 = vunpack.c.l.b16 %v4343
  %v4381 = vunpack.c.l.b16 %v4344
  %v4382 = vunpack.c.l.b16 %v4345
  %v4383 = vunpack.c.l.b16 %v4346
  %v4384 = vunpack.c.l.b16 %v4347
  %v4385 = vpack.c.b16 %v4370, %v4369
  %v4386 = vpack.c.b16 %v4372, %v4371
  %v4387 = vpack.c.b16 %v4374, %v4373
  %v4388 = vpack.c.b16 %v4376, %v4375
  %v4389 = vpack.c.b16 %v4378, %v4377
  %v4390 = vpack.c.b16 %v4380, %v4379
  %v4391 = vpack.c.b16 %v4382, %v4381
  %v4392 = vpack.c.b16 %v4384, %v4383
  %4401 = vmatprep.subr.bf16.mxu0 0
  %4402 = vmatpush1.bf16.msra.mxu0 %v4392
  %4403 = vmatprep.subr.bf16.mxu0 0
  %4404 = vmatpush1.bf16.msra.mxu0 %v4391
  %4405 = vmatprep.subr.bf16.mxu0 0
  %4406 = vmatpush1.bf16.msra.mxu0 %v4390
  %4407 = vmatprep.subr.bf16.mxu0 0
  %4408 = vmatpush1.bf16.msra.mxu0 %v4389
  %4409 = vmatprep.subr.bf16.mxu0 0
  %4410 = vmatpush1.bf16.msra.mxu0 %v4388
  %4411 = vmatprep.subr.bf16.mxu0 0
  %4412 = vmatpush1.bf16.msra.mxu0 %v4387
  %4413 = vmatprep.subr.bf16.mxu0 0
  %4414 = vmatpush1.bf16.msra.mxu0 %v4386
  %4415 = vmatprep.subr.bf16.mxu0 0
  %4416 = vmatpush1.bf16.msra.mxu0 %v4385
  %4417 = vmatprep.subr.bf16.mxu0 0
  %4418 = vmatpush2.bf16.msra.mxu0 0
  %4419 = vmatprep.subr.bf16.mxu0 0
  %4420 = vmatpush2.bf16.msra.mxu0 0
  %4421 = vmatprep.subr.bf16.mxu0 0
  %4422 = vmatpush2.bf16.msra.mxu0 0
  %4423 = vmatprep.subr.bf16.mxu0 0
  %4424 = vmatpush2.bf16.msra.mxu0 0
  %4425 = vmatprep.subr.bf16.mxu0 0
  %4426 = vmatpush2.bf16.msra.mxu0 0
  %4427 = vmatprep.subr.bf16.mxu0 0
  %4428 = vmatpush2.bf16.msra.mxu0 0
  %4429 = vmatprep.subr.bf16.mxu0 0
  %4430 = vmatpush2.bf16.msra.mxu0 0
  %4431 = vmatprep.subr.bf16.mxu0 0
  %4432 = vmatpush2.bf16.msra.mxu0 0
  %4433 = vmatprep.mubr.bf16.mxu0 0
  %4434 = vmatmul.mubr.bf16.gmra.mxu0 %v4328
  %v4435 = vpop.f32.mrf.mxu0
  %v4436 = vadd.f32 %v4352, %v4435
  %v4437 = vpop.f32.mrf.mxu0
  %v4438 = vpop.f32.mrf.mxu0
  %v4439 = vadd.f32 %v4352, %v4438
  %v4440 = vpop.f32.mrf.mxu0
  %4441 = vmatprep.mubr.bf16.mxu0 0
  %4442 = vmatmul.mubr.bf16.gmra.mxu0 %v4329
  %v4443 = vpop.f32.mrf.mxu0
  %v4444 = vadd.f32 %v4352, %v4443
  %v4445 = vpop.f32.mrf.mxu0
  %v4446 = vpop.f32.mrf.mxu0
  %v4447 = vadd.f32 %v4352, %v4446
  %v4448 = vpop.f32.mrf.mxu0
  %4449 = vmatprep.mubr.bf16.mxu0 0
  %4450 = vmatmul.mubr.bf16.gmra.mxu0 %v4330
  %v4451 = vpop.f32.mrf.mxu0
  %v4452 = vadd.f32 %v4352, %v4451
  %v4453 = vpop.f32.mrf.mxu0
  %v4454 = vpop.f32.mrf.mxu0
  %v4455 = vpop.f32.mrf.mxu0
  %4456 = vdwg.mxu0
  %v4457 = vadd.f32 %v4113, %v4436
  %v4458 = vadd.f32 %v4114, %v4439
  %v4459 = vadd.f32 %v4115, %v4444
  %v4460 = vadd.f32 %v4116, %v4447
  %v4461 = vadd.f32 %v4117, %v4452
  %v4462 = vsel %vm148, %v4457, 0.0
  %4463 = vadd.xlane.f32.xlu0 %v4462
  %v4464 = vpop.xlane.xlu0 %4463
  %v4465 = vsel %vm148, %v4458, 0.0
  %4466 = vadd.xlane.f32.xlu0 %v4465
  %v4467 = vpop.xlane.xlu0 %4466
  %v4468 = vsel %vm148, %v4459, 0.0
  %4469 = vadd.xlane.f32.xlu0 %v4468
  %v4470 = vpop.xlane.xlu0 %4469
  %v4471 = vsel %vm148, %v4460, 0.0
  %4472 = vadd.xlane.f32.xlu0 %v4471
  %v4473 = vpop.xlane.xlu0 %4472
  %v4474 = vsel %vm148, %v4461, 0.0
  %4475 = vadd.xlane.f32.xlu0 %v4474
  %v4476 = vpop.xlane.xlu0 %4475
  %v4477 = vmul.f32 %v4464, %v164
  %v4478 = vmul.f32 %v4467, %v164
  %v4479 = vmul.f32 %v4470, %v164
  %v4480 = vmul.f32 %v4473, %v164
  %v4481 = vmul.f32 %v4476, %v164
  %v4482 = vsub.f32 %v4457, %v4477
  %v4483 = vsub.f32 %v4458, %v4478
  %v4484 = vsub.f32 %v4459, %v4479
  %v4485 = vsub.f32 %v4460, %v4480
  %v4486 = vsub.f32 %v4461, %v4481
  %v4487 = vmul.f32 %v4482, %v4482
  %v4488 = vmul.f32 %v4483, %v4483
  %v4489 = vmul.f32 %v4484, %v4484
  %v4490 = vmul.f32 %v4485, %v4485
  %v4491 = vmul.f32 %v4486, %v4486
  %v4492 = vsel %vm148, %v4487, 0.0
  %4493 = vadd.xlane.f32.xlu0 %v4492
  %v4494 = vpop.xlane.xlu0 %4493
  %v4495 = vsel %vm148, %v4488, 0.0
  %4496 = vadd.xlane.f32.xlu0 %v4495
  %v4497 = vpop.xlane.xlu0 %4496
  %v4498 = vsel %vm148, %v4489, 0.0
  %4499 = vadd.xlane.f32.xlu0 %v4498
  %v4500 = vpop.xlane.xlu0 %4499
  %v4501 = vsel %vm148, %v4490, 0.0
  %4502 = vadd.xlane.f32.xlu0 %v4501
  %v4503 = vpop.xlane.xlu0 %4502
  %v4504 = vsel %vm148, %v4491, 0.0
  %4505 = vadd.xlane.f32.xlu0 %v4504
  %v4506 = vpop.xlane.xlu0 %4505
  %v4507 = vmul.f32 %v4494, %v164
  %v4508 = vmul.f32 %v4497, %v164
  %v4509 = vmul.f32 %v4500, %v164
  %v4510 = vmul.f32 %v4503, %v164
  %v4511 = vmul.f32 %v4506, %v164
  %v4512 = vadd.f32 %v4507, 1e-06
  %v4513 = vadd.f32 %v4508, 1e-06
  %v4514 = vadd.f32 %v4509, 1e-06
  %v4515 = vadd.f32 %v4510, 1e-06
  %v4516 = vadd.f32 %v4511, 1e-06
  %v4517 = vrsqrt.pop %v4512
  %v4518 = vrsqrt.pop %v4513
  %v4519 = vrsqrt.pop %v4514
  %v4520 = vrsqrt.pop %v4515
  %v4521 = vrsqrt.pop %v4516
  %v4522 = vmul.f32 %v4482, %v4517
  %v4523 = vmul.f32 %v4483, %v4518
  %v4524 = vmul.f32 %v4484, %v4519
  %v4525 = vmul.f32 %v4485, %v4520
  %v4526 = vmul.f32 %v4486, %v4521
  %v4527 = vmul.f32 %v4522, %v3433
  %v4528 = vmul.f32 %v4523, %v3433
  %v4529 = vmul.f32 %v4524, %v3433
  %v4530 = vmul.f32 %v4525, %v3433
  %v4531 = vmul.f32 %v4526, %v3433
  %v4532 = vadd.f32 %v4527, %v3442
  %v4533 = vadd.f32 %v4528, %v3442
  %v4534 = vadd.f32 %v4529, %v3442
  %v4535 = vadd.f32 %v4530, %v3442
  %v4536 = vadd.f32 %v4531, %v3442
  %s4537 = scalar_lea.vmem %s8, 40
  %4538 = vst.msk [vmem:[%s4537] sm:$0xff] %vm148, %v4532
  %4539 = vst.msk [vmem:[%s4537 + $0x8] sm:$0xff] %vm148, %v4533
  %4540 = vst.msk [vmem:[%s4537 + $0x10] sm:$0xff] %vm148, %v4534
  %4541 = vst.msk [vmem:[%s4537 + $0x18] sm:$0xff] %vm148, %v4535
  %4542 = vst.msk [vmem:[%s4537 + $0x20] sm:$0xff] %vm148, %v4536
  // Predicated region
  $region34: #{_fused_forward.1} parent=0 // pred_check
    _
  $region35: #{_fused_forward.1} parent=0 // pred_check_branch
    %4544 = sbr.rel (0) target = $region37
  $region36: #{_fused_forward.1} parent=0 // pred_region
    _
  $region37: #{_fused_forward.1} parent=0 // pred_fallthru
    _
  // Predicated region
  $region38: #{_fused_forward.1} parent=0 // pred_check
    _
  $region39: #{_fused_forward.1} parent=0 // pred_check_branch
    %4546 = sbr.rel (0) target = $region41
  $region40: #{_fused_forward.1} parent=0 // pred_region
    _
  $region41: #{_fused_forward.1} parent=0 // pred_fallthru
    _

</llo_original>
